<compile_context>
chip_gen: v6e
topology: v6e:2x2x1
jax: 0.10.0
libtpu: 0.0.40
codegen_flags: <defaults>
</compile_context>

<pallas_src>
import jax
import jax.numpy as jnp
from jax.experimental import pallas as pl
from jax.experimental.pallas import tpu as pltpu


def _sigmoid(x):
    # sigmoid(x) == 0.5 * (tanh(0.5 * x) + 1): single EUP op, no divide.
    return 0.5 * jnp.tanh(0.5 * x) + 0.5


def _round_up(n, m):
    return ((n + m - 1) // m) * m


def encoder_kernel(x_ref, wih_ref, whh_ref, b_ref, wout_ref, bout_ref,
                   out_ref, h_sc, c_sc):
    """One grid step == one (batch block, time chunk).

    x_ref   : (Tc, Bb, I)   time-major chunk of inputs (f32)
    wih_ref : (I, 4Hp)      input->gates weights, gate-major, lane-padded (bf16)
    whh_ref : (Hp, 4Hp)     hidden->gates weights (bf16)
    b_ref   : (1, 4Hp)      combined bias b_ih + b_hh (f32)
    wout_ref: (Hp, Sp)      final linear weights (bf16)
    bout_ref: (1, Sp)       final linear bias (f32)
    out_ref : (Bb, Sp)      predictions, written on the last time chunk
    h_sc,c_sc: (Bb, Hp)     recurrent state carried across time chunks (f32)
    """
    t_idx = pl.program_id(1)

    Tc, Bb, I = x_ref.shape
    Hp = whh_ref.shape[0]
    G = 4 * Hp

    @pl.when(t_idx == 0)
    def _():
        h_sc[...] = jnp.zeros_like(h_sc)
        c_sc[...] = jnp.zeros_like(c_sc)

    whh = whh_ref[...]          # hoisted: reused by every unrolled step
    bias = b_ref[...]

    # Hoisted input projection: one (Tc*Bb, I) @ (I, 4Hp) MXU matmul per chunk
    # instead of Tc tiny matmuls on the recurrent critical path.  Bb is a
    # multiple of 8, so both reshapes are layout-preserving (no sublane moves).
    xg = jnp.dot(x_ref[...].reshape(Tc * Bb, I).astype(wih_ref.dtype),
                 wih_ref[...],
                 preferred_element_type=jnp.float32).reshape(Tc, Bb, G)

    h = h_sc[...]
    c = c_sc[...]
    # Statically unrolled recurrence: h/c live in vregs, gate slices are
    # lane-aligned static views, and the LLO scheduler can overlap the per-step
    # MXU matmul with the previous step's element-wise tail.
    for t in range(Tc):
        gates = (xg[t]
                 + jnp.dot(h.astype(whh.dtype), whh,
                           preferred_element_type=jnp.float32)
                 + bias)                                   # (Bb, 4Hp) f32
        i_g = _sigmoid(gates[:, 0 * Hp:1 * Hp])
        f_g = _sigmoid(gates[:, 1 * Hp:2 * Hp])
        g_g = jnp.tanh(gates[:, 2 * Hp:3 * Hp])
        o_g = _sigmoid(gates[:, 3 * Hp:4 * Hp])
        c = f_g * c + i_g * g_g
        h = o_g * jnp.tanh(c)
    h_sc[...] = h
    c_sc[...] = c

    @pl.when(t_idx == pl.num_programs(1) - 1)
    def _():
        out_ref[...] = (jnp.dot(h.astype(wout_ref.dtype), wout_ref[...],
                                preferred_element_type=jnp.float32)
                        + bout_ref[...]).astype(out_ref.dtype)


def encoder_forward(x, params, *, time_chunk=None, batch_block=8,
                    matmul_dtype=jnp.bfloat16):
    """x: (B, T, I) float32 (PyTorch batch_first). Returns (B, steps) float32."""
    w_ih, w_hh, b_ih, b_hh, w_out, b_out = (
        params["w_ih"], params["w_hh"], params["b_ih"], params["b_hh"],
        params["w_out"], params["b_out"])
    B, T, I = x.shape
    H = w_hh.shape[1]
    S = w_out.shape[0]
    if T < 1:
        raise ValueError("Encoder requires at least one timestep (T >= 1).")

    f32 = jnp.float32

    # ---- tiling / padding ---------------------------------------------------
    Hp = _round_up(H, 128)                     # lane-aligned gate slabs
    Sp = _round_up(S, 128)                     # lane-dense output store
    Bb = _round_up(max(batch_block, 8), 8)     # sublane-aligned batch tile
    Bp = _round_up(B, Bb)
    nb = Bp // Bb                              # "parallel" axis (v7x megacore)

    Tc = int(time_chunk) if time_chunk is not None else min(T, 32)
    while T % Tc:        # need a divisor of T: zero-padding time would change
        Tc -= 1          # the recurrence (LSTM steps on zero input are not id).
    nt = T // Tc                               # "arbitrary" (sequential) axis

    # ---- weight prep: pre-transposed, gate-major [i|f|g|o], zero-padded -----
    def gate_pack(w, in_real, in_pad):
        # w: (4H, in_real) PyTorch layout -> (in_pad, 4*Hp) for `x @ W`.
        w4 = w.reshape(4, H, in_real)
        buf = jnp.zeros((4, Hp, in_pad), w.dtype).at[:, :H, :in_real].set(w4)
        return jnp.transpose(buf, (2, 0, 1)).reshape(in_pad, 4 * Hp)

    wih_p = gate_pack(w_ih, I, I).astype(matmul_dtype)            # (I, 4Hp)
    whh_p = gate_pack(w_hh, H, Hp).astype(matmul_dtype)           # (Hp, 4Hp)
    bias_p = (jnp.zeros((4, Hp), f32)
              .at[:, :H].set((b_ih + b_hh).reshape(4, H))
              .reshape(1, 4 * Hp))                                # (1, 4Hp) f32
    wout_p = (jnp.zeros((Hp, Sp), f32).at[:H, :S].set(w_out.T)
              .astype(matmul_dtype))                              # (Hp, Sp)
    bout_p = jnp.zeros((1, Sp), f32).at[0, :S].set(b_out)         # (1, Sp) f32

    # Time-major, batch-padded activations (T, Bp, I): one cheap pass over the
    # small x buys purely leading-axis, layout-preserving slices in the kernel
    # and avoids writing the 4H-wide projection back to HBM.
    x_tm = jnp.transpose(x, (1, 0, 2)).astype(f32)
    if Bp != B:
        x_tm = jnp.pad(x_tm, ((0, 0), (0, Bp - B), (0, 0)))

    # ---- pallas_call ---------------------------------------------------------
    def build(single_buffer_weights):
        def wspec(shape):
            if single_buffer_weights:
                # Constant index_map -> no double buffering needed (saves VMEM).
                return pl.BlockSpec(shape, lambda b, t: (0, 0),
                                    pipeline_mode=pl.Buffered(1))
            return pl.BlockSpec(shape, lambda b, t: (0, 0))

        grid_spec = pltpu.PrefetchScalarGridSpec(
            num_scalar_prefetch=0,
            grid=(nb, nt),
            in_specs=[
                pl.BlockSpec((Tc, Bb, I), lambda b, t: (t, b, 0)),
                wspec((I, 4 * Hp)),
                wspec((Hp, 4 * Hp)),
                wspec((1, 4 * Hp)),
                wspec((Hp, Sp)),
                wspec((1, Sp)),
            ],
            out_specs=pl.BlockSpec((Bb, Sp), lambda b, t: (b, 0)),
            scratch_shapes=[pltpu.VMEM((Bb, Hp), f32),   # h
                            pltpu.VMEM((Bb, Hp), f32)],  # c
        )
        return pl.pallas_call(
            encoder_kernel,
            out_shape=jax.ShapeDtypeStruct((Bp, Sp), f32),
            grid_spec=grid_spec,
            compiler_params=pltpu.CompilerParams(
                dimension_semantics=("parallel", "arbitrary"),
                vmem_limit_bytes=64 * 1024 * 1024,       # headroom on v5e/v6e/v7x
            ),
        )

    args = (x_tm, wih_p, whh_p, bias_p, wout_p, bout_p)
    try:
        out_p = build(single_buffer_weights=True)(*args)
    except Exception:
        # pl.Buffered(1) unsupported in this JAX build -> default double
        # buffering of the (small, constant) weight blocks; results identical.
        out_p = build(single_buffer_weights=False)(*args)

    return out_p[:B, :S]


def encoder_reference(x, params, matmul_dtype=jnp.float32):
    """Pure-JAX reference for nn.LSTM(batch_first=True) + nn.Linear.

    matmul_dtype=bfloat16 mirrors the kernel's MXU input precision (f32 acc).
    """
    w_ih, w_hh = params["w_ih"], params["w_hh"]
    b = params["b_ih"] + params["b_hh"]
    w_out, b_out = params["w_out"], params["b_out"]
    H = w_hh.shape[1]
    wi = w_ih.astype(matmul_dtype).T
    wh = w_hh.astype(matmul_dtype).T
    wo = w_out.astype(matmul_dtype).T

    def step(carry, xt):
        h, c = carry
        gates = (jnp.dot(xt.astype(matmul_dtype), wi,
                         preferred_element_type=jnp.float32)
                 + jnp.dot(h.astype(matmul_dtype), wh,
                           preferred_element_type=jnp.float32)
                 + b)
        i_g = jax.nn.sigmoid(gates[:, 0 * H:1 * H])
        f_g = jax.nn.sigmoid(gates[:, 1 * H:2 * H])
        g_g = jnp.tanh(gates[:, 2 * H:3 * H])
        o_g = jax.nn.sigmoid(gates[:, 3 * H:4 * H])
        c = f_g * c + i_g * g_g
        h = o_g * jnp.tanh(c)
        return (h, c), None

    B = x.shape[0]
    h0 = jnp.zeros((B, H), jnp.float32)
    c0 = jnp.zeros((B, H), jnp.float32)
    (h_T, _), _ = jax.lax.scan(step, (h0, c0), jnp.transpose(x, (1, 0, 2)))
    return jnp.dot(h_T.astype(matmul_dtype), wo,
                   preferred_element_type=jnp.float32) + b_out


def init_params(key, input_size, hidden_size, steps):
    """Deterministic synthetic weights (PyTorch-like uniform ranges)."""
    k = jax.random.split(key, 6)
    bound = 1.0 / jnp.sqrt(hidden_size)
    u = lambda kk, shape: jax.random.uniform(kk, shape, jnp.float32, -bound, bound)
    return {
        "w_ih": u(k[0], (4 * hidden_size, input_size)),
        "w_hh": u(k[1], (4 * hidden_size, hidden_size)),
        "b_ih": u(k[2], (4 * hidden_size,)),
        "b_hh": u(k[3], (4 * hidden_size,)),
        "w_out": u(k[4], (steps, hidden_size)),
        "b_out": u(k[5], (steps,)),
    }


if __name__ == "__main__":
    B, T, I, H, STEPS = 4, 16, 8, 32, 4
    key = jax.random.PRNGKey(0)
    kx, kp = jax.random.split(key)
    x = jax.random.normal(kx, (B, T, I), jnp.float32)
    params = init_params(kp, I, H, STEPS)

    # time_chunk=8 -> 2 time chunks: exercises the cross-chunk h/c carry path.
    out = jax.block_until_ready(encoder_forward(x, params, time_chunk=8))
    assert out.shape == (B, STEPS)

    # Tight check vs a reference using the same bf16 matmul inputs as the kernel.
    ref_bf16 = jax.block_until_ready(
        encoder_reference(x, params, matmul_dtype=jnp.bfloat16))
    # Sanity check vs the exact f32 PyTorch-semantics reference (bf16 tolerance).
    ref_f32 = jax.block_until_ready(
        encoder_reference(x, params, matmul_dtype=jnp.float32))

    assert jnp.allclose(out, ref_bf16, atol=5e-3, rtol=5e-3), (
        f"matched-ref max abs err {jnp.max(jnp.abs(out - ref_bf16))}")
    assert jnp.allclose(out, ref_f32, atol=5e-2, rtol=5e-2), (
        f"f32-ref max abs err {jnp.max(jnp.abs(out - ref_f32))}")

    print("KERNEL_OK")
</pallas_src>

<mosaic_0001>
module attributes {stable_mosaic.version = 11 : i64} {
  func.func @encoder_kernel(%arg0: i32, %arg1: i32, %arg2: memref<8x8x8xf32, #tpu.memory_space<vmem>>, %arg3: memref<8x512xbf16, #tpu.memory_space<vmem>>, %arg4: memref<128x512xbf16, #tpu.memory_space<vmem>>, %arg5: memref<1x512xf32, #tpu.memory_space<vmem>>, %arg6: memref<128x128xbf16, #tpu.memory_space<vmem>>, %arg7: memref<1x128xf32, #tpu.memory_space<vmem>>, %arg8: memref<8x128xf32, #tpu.memory_space<vmem>>, %arg9: memref<8x128xf32, #tpu.memory_space<vmem>>, %arg10: memref<8x128xf32, #tpu.memory_space<vmem>>) attributes {dimension_semantics = [#tpu.dimension_semantics<parallel>, #tpu.dimension_semantics<arbitrary>], iteration_bounds = array<i64: 1, 2>, scalar_prefetch = 0 : i64, scratch_operands = 2 : i64, tpu.core_type = #tpu.core_type<tc>, window_params = [{transform_indices = @transform_0, window_bounds = array<i64: 8, 8, 8>}, {pipeline_mode = #tpu.pipeline_mode<synchronous>, transform_indices = @transform_1, window_bounds = array<i64: 8, 512>}, {pipeline_mode = #tpu.pipeline_mode<synchronous>, transform_indices = @transform_2, window_bounds = array<i64: 128, 512>}, {pipeline_mode = #tpu.pipeline_mode<synchronous>, transform_indices = @transform_3, window_bounds = array<i64: 1, 512>}, {pipeline_mode = #tpu.pipeline_mode<synchronous>, transform_indices = @transform_4, window_bounds = array<i64: 128, 128>}, {pipeline_mode = #tpu.pipeline_mode<synchronous>, transform_indices = @transform_5, window_bounds = array<i64: 1, 128>}, {transform_indices = @transform_6, window_bounds = array<i64: 8, 128>}]} {
    %c0_i32 = arith.constant 0 : i32
    %0 = arith.cmpi eq, %arg1, %c0_i32 : i32
    %1 = arith.extui %0 : i1 to i32
    %c0_i32_0 = arith.constant 0 : i32
    %2 = arith.cmpi ne, %1, %c0_i32_0 : i32
    scf.if %2 {
      %cst_98 = arith.constant 0.000000e+00 : f32
      %322 = vector.broadcast %cst_98 : f32 to vector<8x128xf32>
      %c0_99 = arith.constant 0 : index
      %c0_100 = arith.constant 0 : index
      %323 = vector.load %arg9[%c0_99, %c0_100] : memref<8x128xf32, #tpu.memory_space<vmem>>, vector<8x128xf32>
      tpu.vector_store %arg9[%c0_99, %c0_100], %322 {strides = array<i32>} : memref<8x128xf32, #tpu.memory_space<vmem>>, vector<8x128xf32>,
      %cst_101 = arith.constant 0.000000e+00 : f32
      %324 = vector.broadcast %cst_101 : f32 to vector<8x128xf32>
      %c0_102 = arith.constant 0 : index
      %c0_103 = arith.constant 0 : index
      %325 = vector.load %arg10[%c0_102, %c0_103] : memref<8x128xf32, #tpu.memory_space<vmem>>, vector<8x128xf32>
      tpu.vector_store %arg10[%c0_102, %c0_103], %324 {strides = array<i32>} : memref<8x128xf32, #tpu.memory_space<vmem>>, vector<8x128xf32>,
    } else {
    }
    %c0 = arith.constant 0 : index
    %c0_1 = arith.constant 0 : index
    %3 = vector.load %arg4[%c0, %c0_1] : memref<128x512xbf16, #tpu.memory_space<vmem>>, vector<128x512xbf16>
    %c0_2 = arith.constant 0 : index
    %c0_3 = arith.constant 0 : index
    %4 = vector.load %arg5[%c0_2, %c0_3] : memref<1x512xf32, #tpu.memory_space<vmem>>, vector<1x512xf32>
    %c0_4 = arith.constant 0 : index
    %c0_5 = arith.constant 0 : index
    %c0_6 = arith.constant 0 : index
    %5 = vector.load %arg2[%c0_4, %c0_5, %c0_6] : memref<8x8x8xf32, #tpu.memory_space<vmem>>, vector<8x8x8xf32>
    %6 = vector.shape_cast %5 : vector<8x8x8xf32> to vector<64x8xf32>
    %7 = arith.truncf %6 : vector<64x8xf32> to vector<64x8xbf16>
    %c0_7 = arith.constant 0 : index
    %c0_8 = arith.constant 0 : index
    %8 = vector.load %arg3[%c0_7, %c0_8] : memref<8x512xbf16, #tpu.memory_space<vmem>>, vector<8x512xbf16>
    %cst = arith.constant dense<0.000000e+00> : vector<64x512xf32>
    %9 = tpu.matmul %7, %8, %cst {dimension_numbers = #tpu.dot_dimension_numbers<[1], [0], [0], [1], [0, 0, 1, 1], [], []>} : vector<64x8xbf16>, vector<8x512xbf16>, vector<64x512xf32> -> vector<64x512xf32>
    %10 = vector.shape_cast %9 : vector<64x512xf32> to vector<8x8x512xf32>
    %c0_9 = arith.constant 0 : index
    %c0_10 = arith.constant 0 : index
    %11 = vector.load %arg9[%c0_9, %c0_10] : memref<8x128xf32, #tpu.memory_space<vmem>>, vector<8x128xf32>
    %c0_11 = arith.constant 0 : index
    %c0_12 = arith.constant 0 : index
    %12 = vector.load %arg10[%c0_11, %c0_12] : memref<8x128xf32, #tpu.memory_space<vmem>>, vector<8x128xf32>
    %13 = vector.extract_strided_slice %10 {offsets = [0, 0, 0], sizes = [1, 8, 512], strides = [1, 1, 1]} : vector<8x8x512xf32> to vector<1x8x512xf32>
    %14 = vector.shape_cast %13 : vector<1x8x512xf32> to vector<8x512xf32>
    %15 = arith.truncf %11 : vector<8x128xf32> to vector<8x128xbf16>
    %cst_13 = arith.constant dense<0.000000e+00> : vector<8x512xf32>
    %16 = tpu.matmul %15, %3, %cst_13 {dimension_numbers = #tpu.dot_dimension_numbers<[1], [0], [0], [1], [0, 0, 1, 1], [], []>} : vector<8x128xbf16>, vector<128x512xbf16>, vector<8x512xf32> -> vector<8x512xf32>
    %17 = arith.addf %14, %16 : vector<8x512xf32>
    %18 = vector.broadcast %4 : vector<1x512xf32> to vector<8x512xf32>
    %19 = arith.addf %17, %18 : vector<8x512xf32>
    %20 = vector.extract_strided_slice %19 {offsets = [0, 0], sizes = [8, 128], strides = [1, 1]} : vector<8x512xf32> to vector<8x128xf32>
    %cst_14 = arith.constant 5.000000e-01 : f32
    %21 = vector.broadcast %cst_14 : f32 to vector<8x128xf32>
    %22 = arith.mulf %21, %20 : vector<8x128xf32>
    %23 = math.tanh %22 : vector<8x128xf32>
    %cst_15 = arith.constant 5.000000e-01 : f32
    %24 = vector.broadcast %cst_15 : f32 to vector<8x128xf32>
    %25 = arith.mulf %24, %23 : vector<8x128xf32>
    %cst_16 = arith.constant 5.000000e-01 : f32
    %26 = vector.broadcast %cst_16 : f32 to vector<8x128xf32>
    %27 = arith.addf %25, %26 : vector<8x128xf32>
    %28 = vector.extract_strided_slice %19 {offsets = [0, 128], sizes = [8, 128], strides = [1, 1]} : vector<8x512xf32> to vector<8x128xf32>
    %cst_17 = arith.constant 5.000000e-01 : f32
    %29 = vector.broadcast %cst_17 : f32 to vector<8x128xf32>
    %30 = arith.mulf %29, %28 : vector<8x128xf32>
    %31 = math.tanh %30 : vector<8x128xf32>
    %cst_18 = arith.constant 5.000000e-01 : f32
    %32 = vector.broadcast %cst_18 : f32 to vector<8x128xf32>
    %33 = arith.mulf %32, %31 : vector<8x128xf32>
    %cst_19 = arith.constant 5.000000e-01 : f32
    %34 = vector.broadcast %cst_19 : f32 to vector<8x128xf32>
    %35 = arith.addf %33, %34 : vector<8x128xf32>
    %36 = vector.extract_strided_slice %19 {offsets = [0, 256], sizes = [8, 128], strides = [1, 1]} : vector<8x512xf32> to vector<8x128xf32>
    %37 = math.tanh %36 : vector<8x128xf32>
    %38 = vector.extract_strided_slice %19 {offsets = [0, 384], sizes = [8, 128], strides = [1, 1]} : vector<8x512xf32> to vector<8x128xf32>
    %cst_20 = arith.constant 5.000000e-01 : f32
    %39 = vector.broadcast %cst_20 : f32 to vector<8x128xf32>
    %40 = arith.mulf %39, %38 : vector<8x128xf32>
    %41 = math.tanh %40 : vector<8x128xf32>
    %cst_21 = arith.constant 5.000000e-01 : f32
    %42 = vector.broadcast %cst_21 : f32 to vector<8x128xf32>
    %43 = arith.mulf %42, %41 : vector<8x128xf32>
    %cst_22 = arith.constant 5.000000e-01 : f32
    %44 = vector.broadcast %cst_22 : f32 to vector<8x128xf32>
    %45 = arith.addf %43, %44 : vector<8x128xf32>
    %46 = arith.mulf %35, %12 : vector<8x128xf32>
    %47 = arith.mulf %27, %37 : vector<8x128xf32>
    %48 = arith.addf %46, %47 : vector<8x128xf32>
    %49 = math.tanh %48 : vector<8x128xf32>
    %50 = arith.mulf %45, %49 : vector<8x128xf32>
    %51 = vector.extract_strided_slice %10 {offsets = [1, 0, 0], sizes = [1, 8, 512], strides = [1, 1, 1]} : vector<8x8x512xf32> to vector<1x8x512xf32>
    %52 = vector.shape_cast %51 : vector<1x8x512xf32> to vector<8x512xf32>
    %53 = arith.truncf %50 : vector<8x128xf32> to vector<8x128xbf16>
    %cst_23 = arith.constant dense<0.000000e+00> : vector<8x512xf32>
    %54 = tpu.matmul %53, %3, %cst_23 {dimension_numbers = #tpu.dot_dimension_numbers<[1], [0], [0], [1], [0, 0, 1, 1], [], []>} : vector<8x128xbf16>, vector<128x512xbf16>, vector<8x512xf32> -> vector<8x512xf32>
    %55 = arith.addf %52, %54 : vector<8x512xf32>
    %56 = vector.broadcast %4 : vector<1x512xf32> to vector<8x512xf32>
    %57 = arith.addf %55, %56 : vector<8x512xf32>
    %58 = vector.extract_strided_slice %57 {offsets = [0, 0], sizes = [8, 128], strides = [1, 1]} : vector<8x512xf32> to vector<8x128xf32>
    %cst_24 = arith.constant 5.000000e-01 : f32
    %59 = vector.broadcast %cst_24 : f32 to vector<8x128xf32>
    %60 = arith.mulf %59, %58 : vector<8x128xf32>
    %61 = math.tanh %60 : vector<8x128xf32>
    %cst_25 = arith.constant 5.000000e-01 : f32
    %62 = vector.broadcast %cst_25 : f32 to vector<8x128xf32>
    %63 = arith.mulf %62, %61 : vector<8x128xf32>
    %cst_26 = arith.constant 5.000000e-01 : f32
    %64 = vector.broadcast %cst_26 : f32 to vector<8x128xf32>
    %65 = arith.addf %63, %64 : vector<8x128xf32>
    %66 = vector.extract_strided_slice %57 {offsets = [0, 128], sizes = [8, 128], strides = [1, 1]} : vector<8x512xf32> to vector<8x128xf32>
    %cst_27 = arith.constant 5.000000e-01 : f32
    %67 = vector.broadcast %cst_27 : f32 to vector<8x128xf32>
    %68 = arith.mulf %67, %66 : vector<8x128xf32>
    %69 = math.tanh %68 : vector<8x128xf32>
    %cst_28 = arith.constant 5.000000e-01 : f32
    %70 = vector.broadcast %cst_28 : f32 to vector<8x128xf32>
    %71 = arith.mulf %70, %69 : vector<8x128xf32>
    %cst_29 = arith.constant 5.000000e-01 : f32
    %72 = vector.broadcast %cst_29 : f32 to vector<8x128xf32>
    %73 = arith.addf %71, %72 : vector<8x128xf32>
    %74 = vector.extract_strided_slice %57 {offsets = [0, 256], sizes = [8, 128], strides = [1, 1]} : vector<8x512xf32> to vector<8x128xf32>
    %75 = math.tanh %74 : vector<8x128xf32>
    %76 = vector.extract_strided_slice %57 {offsets = [0, 384], sizes = [8, 128], strides = [1, 1]} : vector<8x512xf32> to vector<8x128xf32>
    %cst_30 = arith.constant 5.000000e-01 : f32
    %77 = vector.broadcast %cst_30 : f32 to vector<8x128xf32>
    %78 = arith.mulf %77, %76 : vector<8x128xf32>
    %79 = math.tanh %78 : vector<8x128xf32>
    %cst_31 = arith.constant 5.000000e-01 : f32
    %80 = vector.broadcast %cst_31 : f32 to vector<8x128xf32>
    %81 = arith.mulf %80, %79 : vector<8x128xf32>
    %cst_32 = arith.constant 5.000000e-01 : f32
    %82 = vector.broadcast %cst_32 : f32 to vector<8x128xf32>
    %83 = arith.addf %81, %82 : vector<8x128xf32>
    %84 = arith.mulf %73, %48 : vector<8x128xf32>
    %85 = arith.mulf %65, %75 : vector<8x128xf32>
    %86 = arith.addf %84, %85 : vector<8x128xf32>
    %87 = math.tanh %86 : vector<8x128xf32>
    %88 = arith.mulf %83, %87 : vector<8x128xf32>
    %89 = vector.extract_strided_slice %10 {offsets = [2, 0, 0], sizes = [1, 8, 512], strides = [1, 1, 1]} : vector<8x8x512xf32> to vector<1x8x512xf32>
    %90 = vector.shape_cast %89 : vector<1x8x512xf32> to vector<8x512xf32>
    %91 = arith.truncf %88 : vector<8x128xf32> to vector<8x128xbf16>
    %cst_33 = arith.constant dense<0.000000e+00> : vector<8x512xf32>
    %92 = tpu.matmul %91, %3, %cst_33 {dimension_numbers = #tpu.dot_dimension_numbers<[1], [0], [0], [1], [0, 0, 1, 1], [], []>} : vector<8x128xbf16>, vector<128x512xbf16>, vector<8x512xf32> -> vector<8x512xf32>
    %93 = arith.addf %90, %92 : vector<8x512xf32>
    %94 = vector.broadcast %4 : vector<1x512xf32> to vector<8x512xf32>
    %95 = arith.addf %93, %94 : vector<8x512xf32>
    %96 = vector.extract_strided_slice %95 {offsets = [0, 0], sizes = [8, 128], strides = [1, 1]} : vector<8x512xf32> to vector<8x128xf32>
    %cst_34 = arith.constant 5.000000e-01 : f32
    %97 = vector.broadcast %cst_34 : f32 to vector<8x128xf32>
    %98 = arith.mulf %97, %96 : vector<8x128xf32>
    %99 = math.tanh %98 : vector<8x128xf32>
    %cst_35 = arith.constant 5.000000e-01 : f32
    %100 = vector.broadcast %cst_35 : f32 to vector<8x128xf32>
    %101 = arith.mulf %100, %99 : vector<8x128xf32>
    %cst_36 = arith.constant 5.000000e-01 : f32
    %102 = vector.broadcast %cst_36 : f32 to vector<8x128xf32>
    %103 = arith.addf %101, %102 : vector<8x128xf32>
    %104 = vector.extract_strided_slice %95 {offsets = [0, 128], sizes = [8, 128], strides = [1, 1]} : vector<8x512xf32> to vector<8x128xf32>
    %cst_37 = arith.constant 5.000000e-01 : f32
    %105 = vector.broadcast %cst_37 : f32 to vector<8x128xf32>
    %106 = arith.mulf %105, %104 : vector<8x128xf32>
    %107 = math.tanh %106 : vector<8x128xf32>
    %cst_38 = arith.constant 5.000000e-01 : f32
    %108 = vector.broadcast %cst_38 : f32 to vector<8x128xf32>
    %109 = arith.mulf %108, %107 : vector<8x128xf32>
    %cst_39 = arith.constant 5.000000e-01 : f32
    %110 = vector.broadcast %cst_39 : f32 to vector<8x128xf32>
    %111 = arith.addf %109, %110 : vector<8x128xf32>
    %112 = vector.extract_strided_slice %95 {offsets = [0, 256], sizes = [8, 128], strides = [1, 1]} : vector<8x512xf32> to vector<8x128xf32>
    %113 = math.tanh %112 : vector<8x128xf32>
    %114 = vector.extract_strided_slice %95 {offsets = [0, 384], sizes = [8, 128], strides = [1, 1]} : vector<8x512xf32> to vector<8x128xf32>
    %cst_40 = arith.constant 5.000000e-01 : f32
    %115 = vector.broadcast %cst_40 : f32 to vector<8x128xf32>
    %116 = arith.mulf %115, %114 : vector<8x128xf32>
    %117 = math.tanh %116 : vector<8x128xf32>
    %cst_41 = arith.constant 5.000000e-01 : f32
    %118 = vector.broadcast %cst_41 : f32 to vector<8x128xf32>
    %119 = arith.mulf %118, %117 : vector<8x128xf32>
    %cst_42 = arith.constant 5.000000e-01 : f32
    %120 = vector.broadcast %cst_42 : f32 to vector<8x128xf32>
    %121 = arith.addf %119, %120 : vector<8x128xf32>
    %122 = arith.mulf %111, %86 : vector<8x128xf32>
    %123 = arith.mulf %103, %113 : vector<8x128xf32>
    %124 = arith.addf %122, %123 : vector<8x128xf32>
    %125 = math.tanh %124 : vector<8x128xf32>
    %126 = arith.mulf %121, %125 : vector<8x128xf32>
    %127 = vector.extract_strided_slice %10 {offsets = [3, 0, 0], sizes = [1, 8, 512], strides = [1, 1, 1]} : vector<8x8x512xf32> to vector<1x8x512xf32>
    %128 = vector.shape_cast %127 : vector<1x8x512xf32> to vector<8x512xf32>
    %129 = arith.truncf %126 : vector<8x128xf32> to vector<8x128xbf16>
    %cst_43 = arith.constant dense<0.000000e+00> : vector<8x512xf32>
    %130 = tpu.matmul %129, %3, %cst_43 {dimension_numbers = #tpu.dot_dimension_numbers<[1], [0], [0], [1], [0, 0, 1, 1], [], []>} : vector<8x128xbf16>, vector<128x512xbf16>, vector<8x512xf32> -> vector<8x512xf32>
    %131 = arith.addf %128, %130 : vector<8x512xf32>
    %132 = vector.broadcast %4 : vector<1x512xf32> to vector<8x512xf32>
    %133 = arith.addf %131, %132 : vector<8x512xf32>
    %134 = vector.extract_strided_slice %133 {offsets = [0, 0], sizes = [8, 128], strides = [1, 1]} : vector<8x512xf32> to vector<8x128xf32>
    %cst_44 = arith.constant 5.000000e-01 : f32
    %135 = vector.broadcast %cst_44 : f32 to vector<8x128xf32>
    %136 = arith.mulf %135, %134 : vector<8x128xf32>
    %137 = math.tanh %136 : vector<8x128xf32>
    %cst_45 = arith.constant 5.000000e-01 : f32
    %138 = vector.broadcast %cst_45 : f32 to vector<8x128xf32>
    %139 = arith.mulf %138, %137 : vector<8x128xf32>
    %cst_46 = arith.constant 5.000000e-01 : f32
    %140 = vector.broadcast %cst_46 : f32 to vector<8x128xf32>
    %141 = arith.addf %139, %140 : vector<8x128xf32>
    %142 = vector.extract_strided_slice %133 {offsets = [0, 128], sizes = [8, 128], strides = [1, 1]} : vector<8x512xf32> to vector<8x128xf32>
    %cst_47 = arith.constant 5.000000e-01 : f32
    %143 = vector.broadcast %cst_47 : f32 to vector<8x128xf32>
    %144 = arith.mulf %143, %142 : vector<8x128xf32>
    %145 = math.tanh %144 : vector<8x128xf32>
    %cst_48 = arith.constant 5.000000e-01 : f32
    %146 = vector.broadcast %cst_48 : f32 to vector<8x128xf32>
    %147 = arith.mulf %146, %145 : vector<8x128xf32>
    %cst_49 = arith.constant 5.000000e-01 : f32
    %148 = vector.broadcast %cst_49 : f32 to vector<8x128xf32>
    %149 = arith.addf %147, %148 : vector<8x128xf32>
    %150 = vector.extract_strided_slice %133 {offsets = [0, 256], sizes = [8, 128], strides = [1, 1]} : vector<8x512xf32> to vector<8x128xf32>
    %151 = math.tanh %150 : vector<8x128xf32>
    %152 = vector.extract_strided_slice %133 {offsets = [0, 384], sizes = [8, 128], strides = [1, 1]} : vector<8x512xf32> to vector<8x128xf32>
    %cst_50 = arith.constant 5.000000e-01 : f32
    %153 = vector.broadcast %cst_50 : f32 to vector<8x128xf32>
    %154 = arith.mulf %153, %152 : vector<8x128xf32>
    %155 = math.tanh %154 : vector<8x128xf32>
    %cst_51 = arith.constant 5.000000e-01 : f32
    %156 = vector.broadcast %cst_51 : f32 to vector<8x128xf32>
    %157 = arith.mulf %156, %155 : vector<8x128xf32>
    %cst_52 = arith.constant 5.000000e-01 : f32
    %158 = vector.broadcast %cst_52 : f32 to vector<8x128xf32>
    %159 = arith.addf %157, %158 : vector<8x128xf32>
    %160 = arith.mulf %149, %124 : vector<8x128xf32>
    %161 = arith.mulf %141, %151 : vector<8x128xf32>
    %162 = arith.addf %160, %161 : vector<8x128xf32>
    %163 = math.tanh %162 : vector<8x128xf32>
    %164 = arith.mulf %159, %163 : vector<8x128xf32>
    %165 = vector.extract_strided_slice %10 {offsets = [4, 0, 0], sizes = [1, 8, 512], strides = [1, 1, 1]} : vector<8x8x512xf32> to vector<1x8x512xf32>
    %166 = vector.shape_cast %165 : vector<1x8x512xf32> to vector<8x512xf32>
    %167 = arith.truncf %164 : vector<8x128xf32> to vector<8x128xbf16>
    %cst_53 = arith.constant dense<0.000000e+00> : vector<8x512xf32>
    %168 = tpu.matmul %167, %3, %cst_53 {dimension_numbers = #tpu.dot_dimension_numbers<[1], [0], [0], [1], [0, 0, 1, 1], [], []>} : vector<8x128xbf16>, vector<128x512xbf16>, vector<8x512xf32> -> vector<8x512xf32>
    %169 = arith.addf %166, %168 : vector<8x512xf32>
    %170 = vector.broadcast %4 : vector<1x512xf32> to vector<8x512xf32>
    %171 = arith.addf %169, %170 : vector<8x512xf32>
    %172 = vector.extract_strided_slice %171 {offsets = [0, 0], sizes = [8, 128], strides = [1, 1]} : vector<8x512xf32> to vector<8x128xf32>
    %cst_54 = arith.constant 5.000000e-01 : f32
    %173 = vector.broadcast %cst_54 : f32 to vector<8x128xf32>
    %174 = arith.mulf %173, %172 : vector<8x128xf32>
    %175 = math.tanh %174 : vector<8x128xf32>
    %cst_55 = arith.constant 5.000000e-01 : f32
    %176 = vector.broadcast %cst_55 : f32 to vector<8x128xf32>
    %177 = arith.mulf %176, %175 : vector<8x128xf32>
    %cst_56 = arith.constant 5.000000e-01 : f32
    %178 = vector.broadcast %cst_56 : f32 to vector<8x128xf32>
    %179 = arith.addf %177, %178 : vector<8x128xf32>
    %180 = vector.extract_strided_slice %171 {offsets = [0, 128], sizes = [8, 128], strides = [1, 1]} : vector<8x512xf32> to vector<8x128xf32>
    %cst_57 = arith.constant 5.000000e-01 : f32
    %181 = vector.broadcast %cst_57 : f32 to vector<8x128xf32>
    %182 = arith.mulf %181, %180 : vector<8x128xf32>
    %183 = math.tanh %182 : vector<8x128xf32>
    %cst_58 = arith.constant 5.000000e-01 : f32
    %184 = vector.broadcast %cst_58 : f32 to vector<8x128xf32>
    %185 = arith.mulf %184, %183 : vector<8x128xf32>
    %cst_59 = arith.constant 5.000000e-01 : f32
    %186 = vector.broadcast %cst_59 : f32 to vector<8x128xf32>
    %187 = arith.addf %185, %186 : vector<8x128xf32>
    %188 = vector.extract_strided_slice %171 {offsets = [0, 256], sizes = [8, 128], strides = [1, 1]} : vector<8x512xf32> to vector<8x128xf32>
    %189 = math.tanh %188 : vector<8x128xf32>
    %190 = vector.extract_strided_slice %171 {offsets = [0, 384], sizes = [8, 128], strides = [1, 1]} : vector<8x512xf32> to vector<8x128xf32>
    %cst_60 = arith.constant 5.000000e-01 : f32
    %191 = vector.broadcast %cst_60 : f32 to vector<8x128xf32>
    %192 = arith.mulf %191, %190 : vector<8x128xf32>
    %193 = math.tanh %192 : vector<8x128xf32>
    %cst_61 = arith.constant 5.000000e-01 : f32
    %194 = vector.broadcast %cst_61 : f32 to vector<8x128xf32>
    %195 = arith.mulf %194, %193 : vector<8x128xf32>
    %cst_62 = arith.constant 5.000000e-01 : f32
    %196 = vector.broadcast %cst_62 : f32 to vector<8x128xf32>
    %197 = arith.addf %195, %196 : vector<8x128xf32>
    %198 = arith.mulf %187, %162 : vector<8x128xf32>
    %199 = arith.mulf %179, %189 : vector<8x128xf32>
    %200 = arith.addf %198, %199 : vector<8x128xf32>
    %201 = math.tanh %200 : vector<8x128xf32>
    %202 = arith.mulf %197, %201 : vector<8x128xf32>
    %203 = vector.extract_strided_slice %10 {offsets = [5, 0, 0], sizes = [1, 8, 512], strides = [1, 1, 1]} : vector<8x8x512xf32> to vector<1x8x512xf32>
    %204 = vector.shape_cast %203 : vector<1x8x512xf32> to vector<8x512xf32>
    %205 = arith.truncf %202 : vector<8x128xf32> to vector<8x128xbf16>
    %cst_63 = arith.constant dense<0.000000e+00> : vector<8x512xf32>
    %206 = tpu.matmul %205, %3, %cst_63 {dimension_numbers = #tpu.dot_dimension_numbers<[1], [0], [0], [1], [0, 0, 1, 1], [], []>} : vector<8x128xbf16>, vector<128x512xbf16>, vector<8x512xf32> -> vector<8x512xf32>
    %207 = arith.addf %204, %206 : vector<8x512xf32>
    %208 = vector.broadcast %4 : vector<1x512xf32> to vector<8x512xf32>
    %209 = arith.addf %207, %208 : vector<8x512xf32>
    %210 = vector.extract_strided_slice %209 {offsets = [0, 0], sizes = [8, 128], strides = [1, 1]} : vector<8x512xf32> to vector<8x128xf32>
    %cst_64 = arith.constant 5.000000e-01 : f32
    %211 = vector.broadcast %cst_64 : f32 to vector<8x128xf32>
    %212 = arith.mulf %211, %210 : vector<8x128xf32>
    %213 = math.tanh %212 : vector<8x128xf32>
    %cst_65 = arith.constant 5.000000e-01 : f32
    %214 = vector.broadcast %cst_65 : f32 to vector<8x128xf32>
    %215 = arith.mulf %214, %213 : vector<8x128xf32>
    %cst_66 = arith.constant 5.000000e-01 : f32
    %216 = vector.broadcast %cst_66 : f32 to vector<8x128xf32>
    %217 = arith.addf %215, %216 : vector<8x128xf32>
    %218 = vector.extract_strided_slice %209 {offsets = [0, 128], sizes = [8, 128], strides = [1, 1]} : vector<8x512xf32> to vector<8x128xf32>
    %cst_67 = arith.constant 5.000000e-01 : f32
    %219 = vector.broadcast %cst_67 : f32 to vector<8x128xf32>
    %220 = arith.mulf %219, %218 : vector<8x128xf32>
    %221 = math.tanh %220 : vector<8x128xf32>
    %cst_68 = arith.constant 5.000000e-01 : f32
    %222 = vector.broadcast %cst_68 : f32 to vector<8x128xf32>
    %223 = arith.mulf %222, %221 : vector<8x128xf32>
    %cst_69 = arith.constant 5.000000e-01 : f32
    %224 = vector.broadcast %cst_69 : f32 to vector<8x128xf32>
    %225 = arith.addf %223, %224 : vector<8x128xf32>
    %226 = vector.extract_strided_slice %209 {offsets = [0, 256], sizes = [8, 128], strides = [1, 1]} : vector<8x512xf32> to vector<8x128xf32>
    %227 = math.tanh %226 : vector<8x128xf32>
    %228 = vector.extract_strided_slice %209 {offsets = [0, 384], sizes = [8, 128], strides = [1, 1]} : vector<8x512xf32> to vector<8x128xf32>
    %cst_70 = arith.constant 5.000000e-01 : f32
    %229 = vector.broadcast %cst_70 : f32 to vector<8x128xf32>
    %230 = arith.mulf %229, %228 : vector<8x128xf32>
    %231 = math.tanh %230 : vector<8x128xf32>
    %cst_71 = arith.constant 5.000000e-01 : f32
    %232 = vector.broadcast %cst_71 : f32 to vector<8x128xf32>
    %233 = arith.mulf %232, %231 : vector<8x128xf32>
    %cst_72 = arith.constant 5.000000e-01 : f32
    %234 = vector.broadcast %cst_72 : f32 to vector<8x128xf32>
    %235 = arith.addf %233, %234 : vector<8x128xf32>
    %236 = arith.mulf %225, %200 : vector<8x128xf32>
    %237 = arith.mulf %217, %227 : vector<8x128xf32>
    %238 = arith.addf %236, %237 : vector<8x128xf32>
    %239 = math.tanh %238 : vector<8x128xf32>
    %240 = arith.mulf %235, %239 : vector<8x128xf32>
    %241 = vector.extract_strided_slice %10 {offsets = [6, 0, 0], sizes = [1, 8, 512], strides = [1, 1, 1]} : vector<8x8x512xf32> to vector<1x8x512xf32>
    %242 = vector.shape_cast %241 : vector<1x8x512xf32> to vector<8x512xf32>
    %243 = arith.truncf %240 : vector<8x128xf32> to vector<8x128xbf16>
    %cst_73 = arith.constant dense<0.000000e+00> : vector<8x512xf32>
    %244 = tpu.matmul %243, %3, %cst_73 {dimension_numbers = #tpu.dot_dimension_numbers<[1], [0], [0], [1], [0, 0, 1, 1], [], []>} : vector<8x128xbf16>, vector<128x512xbf16>, vector<8x512xf32> -> vector<8x512xf32>
    %245 = arith.addf %242, %244 : vector<8x512xf32>
    %246 = vector.broadcast %4 : vector<1x512xf32> to vector<8x512xf32>
    %247 = arith.addf %245, %246 : vector<8x512xf32>
    %248 = vector.extract_strided_slice %247 {offsets = [0, 0], sizes = [8, 128], strides = [1, 1]} : vector<8x512xf32> to vector<8x128xf32>
    %cst_74 = arith.constant 5.000000e-01 : f32
    %249 = vector.broadcast %cst_74 : f32 to vector<8x128xf32>
    %250 = arith.mulf %249, %248 : vector<8x128xf32>
    %251 = math.tanh %250 : vector<8x128xf32>
    %cst_75 = arith.constant 5.000000e-01 : f32
    %252 = vector.broadcast %cst_75 : f32 to vector<8x128xf32>
    %253 = arith.mulf %252, %251 : vector<8x128xf32>
    %cst_76 = arith.constant 5.000000e-01 : f32
    %254 = vector.broadcast %cst_76 : f32 to vector<8x128xf32>
    %255 = arith.addf %253, %254 : vector<8x128xf32>
    %256 = vector.extract_strided_slice %247 {offsets = [0, 128], sizes = [8, 128], strides = [1, 1]} : vector<8x512xf32> to vector<8x128xf32>
    %cst_77 = arith.constant 5.000000e-01 : f32
    %257 = vector.broadcast %cst_77 : f32 to vector<8x128xf32>
    %258 = arith.mulf %257, %256 : vector<8x128xf32>
    %259 = math.tanh %258 : vector<8x128xf32>
    %cst_78 = arith.constant 5.000000e-01 : f32
    %260 = vector.broadcast %cst_78 : f32 to vector<8x128xf32>
    %261 = arith.mulf %260, %259 : vector<8x128xf32>
    %cst_79 = arith.constant 5.000000e-01 : f32
    %262 = vector.broadcast %cst_79 : f32 to vector<8x128xf32>
    %263 = arith.addf %261, %262 : vector<8x128xf32>
    %264 = vector.extract_strided_slice %247 {offsets = [0, 256], sizes = [8, 128], strides = [1, 1]} : vector<8x512xf32> to vector<8x128xf32>
    %265 = math.tanh %264 : vector<8x128xf32>
    %266 = vector.extract_strided_slice %247 {offsets = [0, 384], sizes = [8, 128], strides = [1, 1]} : vector<8x512xf32> to vector<8x128xf32>
    %cst_80 = arith.constant 5.000000e-01 : f32
    %267 = vector.broadcast %cst_80 : f32 to vector<8x128xf32>
    %268 = arith.mulf %267, %266 : vector<8x128xf32>
    %269 = math.tanh %268 : vector<8x128xf32>
    %cst_81 = arith.constant 5.000000e-01 : f32
    %270 = vector.broadcast %cst_81 : f32 to vector<8x128xf32>
    %271 = arith.mulf %270, %269 : vector<8x128xf32>
    %cst_82 = arith.constant 5.000000e-01 : f32
    %272 = vector.broadcast %cst_82 : f32 to vector<8x128xf32>
    %273 = arith.addf %271, %272 : vector<8x128xf32>
    %274 = arith.mulf %263, %238 : vector<8x128xf32>
    %275 = arith.mulf %255, %265 : vector<8x128xf32>
    %276 = arith.addf %274, %275 : vector<8x128xf32>
    %277 = math.tanh %276 : vector<8x128xf32>
    %278 = arith.mulf %273, %277 : vector<8x128xf32>
    %279 = vector.extract_strided_slice %10 {offsets = [7, 0, 0], sizes = [1, 8, 512], strides = [1, 1, 1]} : vector<8x8x512xf32> to vector<1x8x512xf32>
    %280 = vector.shape_cast %279 : vector<1x8x512xf32> to vector<8x512xf32>
    %281 = arith.truncf %278 : vector<8x128xf32> to vector<8x128xbf16>
    %cst_83 = arith.constant dense<0.000000e+00> : vector<8x512xf32>
    %282 = tpu.matmul %281, %3, %cst_83 {dimension_numbers = #tpu.dot_dimension_numbers<[1], [0], [0], [1], [0, 0, 1, 1], [], []>} : vector<8x128xbf16>, vector<128x512xbf16>, vector<8x512xf32> -> vector<8x512xf32>
    %283 = arith.addf %280, %282 : vector<8x512xf32>
    %284 = vector.broadcast %4 : vector<1x512xf32> to vector<8x512xf32>
    %285 = arith.addf %283, %284 : vector<8x512xf32>
    %286 = vector.extract_strided_slice %285 {offsets = [0, 0], sizes = [8, 128], strides = [1, 1]} : vector<8x512xf32> to vector<8x128xf32>
    %cst_84 = arith.constant 5.000000e-01 : f32
    %287 = vector.broadcast %cst_84 : f32 to vector<8x128xf32>
    %288 = arith.mulf %287, %286 : vector<8x128xf32>
    %289 = math.tanh %288 : vector<8x128xf32>
    %cst_85 = arith.constant 5.000000e-01 : f32
    %290 = vector.broadcast %cst_85 : f32 to vector<8x128xf32>
    %291 = arith.mulf %290, %289 : vector<8x128xf32>
    %cst_86 = arith.constant 5.000000e-01 : f32
    %292 = vector.broadcast %cst_86 : f32 to vector<8x128xf32>
    %293 = arith.addf %291, %292 : vector<8x128xf32>
    %294 = vector.extract_strided_slice %285 {offsets = [0, 128], sizes = [8, 128], strides = [1, 1]} : vector<8x512xf32> to vector<8x128xf32>
    %cst_87 = arith.constant 5.000000e-01 : f32
    %295 = vector.broadcast %cst_87 : f32 to vector<8x128xf32>
    %296 = arith.mulf %295, %294 : vector<8x128xf32>
    %297 = math.tanh %296 : vector<8x128xf32>
    %cst_88 = arith.constant 5.000000e-01 : f32
    %298 = vector.broadcast %cst_88 : f32 to vector<8x128xf32>
    %299 = arith.mulf %298, %297 : vector<8x128xf32>
    %cst_89 = arith.constant 5.000000e-01 : f32
    %300 = vector.broadcast %cst_89 : f32 to vector<8x128xf32>
    %301 = arith.addf %299, %300 : vector<8x128xf32>
    %302 = vector.extract_strided_slice %285 {offsets = [0, 256], sizes = [8, 128], strides = [1, 1]} : vector<8x512xf32> to vector<8x128xf32>
    %303 = math.tanh %302 : vector<8x128xf32>
    %304 = vector.extract_strided_slice %285 {offsets = [0, 384], sizes = [8, 128], strides = [1, 1]} : vector<8x512xf32> to vector<8x128xf32>
    %cst_90 = arith.constant 5.000000e-01 : f32
    %305 = vector.broadcast %cst_90 : f32 to vector<8x128xf32>
    %306 = arith.mulf %305, %304 : vector<8x128xf32>
    %307 = math.tanh %306 : vector<8x128xf32>
    %cst_91 = arith.constant 5.000000e-01 : f32
    %308 = vector.broadcast %cst_91 : f32 to vector<8x128xf32>
    %309 = arith.mulf %308, %307 : vector<8x128xf32>
    %cst_92 = arith.constant 5.000000e-01 : f32
    %310 = vector.broadcast %cst_92 : f32 to vector<8x128xf32>
    %311 = arith.addf %309, %310 : vector<8x128xf32>
    %312 = arith.mulf %301, %276 : vector<8x128xf32>
    %313 = arith.mulf %293, %303 : vector<8x128xf32>
    %314 = arith.addf %312, %313 : vector<8x128xf32>
    %315 = math.tanh %314 : vector<8x128xf32>
    %316 = arith.mulf %311, %315 : vector<8x128xf32>
    %c0_93 = arith.constant 0 : index
    %c0_94 = arith.constant 0 : index
    %317 = vector.load %arg9[%c0_93, %c0_94] : memref<8x128xf32, #tpu.memory_space<vmem>>, vector<8x128xf32>
    tpu.vector_store %arg9[%c0_93, %c0_94], %316 {strides = array<i32>} : memref<8x128xf32, #tpu.memory_space<vmem>>, vector<8x128xf32>,
    %c0_95 = arith.constant 0 : index
    %c0_96 = arith.constant 0 : index
    %318 = vector.load %arg10[%c0_95, %c0_96] : memref<8x128xf32, #tpu.memory_space<vmem>>, vector<8x128xf32>
    tpu.vector_store %arg10[%c0_95, %c0_96], %314 {strides = array<i32>} : memref<8x128xf32, #tpu.memory_space<vmem>>, vector<8x128xf32>,
    %c1_i32 = arith.constant 1 : i32
    %319 = arith.cmpi eq, %arg1, %c1_i32 : i32
    %320 = arith.extui %319 : i1 to i32
    %c0_i32_97 = arith.constant 0 : i32
    %321 = arith.cmpi ne, %320, %c0_i32_97 : i32
    scf.if %321 {
      %322 = arith.truncf %316 : vector<8x128xf32> to vector<8x128xbf16>
      %c0_98 = arith.constant 0 : index
      %c0_99 = arith.constant 0 : index
      %323 = vector.load %arg6[%c0_98, %c0_99] : memref<128x128xbf16, #tpu.memory_space<vmem>>, vector<128x128xbf16>
      %cst_100 = arith.constant dense<0.000000e+00> : vector<8x128xf32>
      %324 = tpu.matmul %322, %323, %cst_100 {dimension_numbers = #tpu.dot_dimension_numbers<[1], [0], [0], [1], [0, 0, 1, 1], [], []>} : vector<8x128xbf16>, vector<128x128xbf16>, vector<8x128xf32> -> vector<8x128xf32>
      %c0_101 = arith.constant 0 : index
      %c0_102 = arith.constant 0 : index
      %325 = vector.load %arg7[%c0_101, %c0_102] : memref<1x128xf32, #tpu.memory_space<vmem>>, vector<1x128xf32>
      %326 = vector.broadcast %325 : vector<1x128xf32> to vector<8x128xf32>
      %327 = arith.addf %324, %326 : vector<8x128xf32>
      %c0_103 = arith.constant 0 : index
      %c0_104 = arith.constant 0 : index
      %328 = vector.load %arg8[%c0_103, %c0_104] : memref<8x128xf32, #tpu.memory_space<vmem>>, vector<8x128xf32>
      tpu.vector_store %arg8[%c0_103, %c0_104], %327 {strides = array<i32>} : memref<8x128xf32, #tpu.memory_space<vmem>>, vector<8x128xf32>,
    } else {
    }
    return
  }
  func.func @transform_0(%arg0: i32, %arg1: i32) -> (i32, i32, i32) {
    %c0_i32 = arith.constant 0 : i32
    %c0_i32_0 = arith.constant 0 : i32
    return %arg1, %arg0, %c0_i32 : i32, i32, i32
  }
  func.func @transform_1(%arg0: i32, %arg1: i32) -> (i32, i32) {
    %c0_i32 = arith.constant 0 : i32
    %c0_i32_0 = arith.constant 0 : i32
    %c0_i32_1 = arith.constant 0 : i32
    return %c0_i32, %c0_i32_0 : i32, i32
  }
  func.func @transform_2(%arg0: i32, %arg1: i32) -> (i32, i32) {
    %c0_i32 = arith.constant 0 : i32
    %c0_i32_0 = arith.constant 0 : i32
    %c0_i32_1 = arith.constant 0 : i32
    return %c0_i32, %c0_i32_0 : i32, i32
  }
  func.func @transform_3(%arg0: i32, %arg1: i32) -> (i32, i32) {
    %c0_i32 = arith.constant 0 : i32
    %c0_i32_0 = arith.constant 0 : i32
    %c0_i32_1 = arith.constant 0 : i32
    return %c0_i32, %c0_i32_0 : i32, i32
  }
  func.func @transform_4(%arg0: i32, %arg1: i32) -> (i32, i32) {
    %c0_i32 = arith.constant 0 : i32
    %c0_i32_0 = arith.constant 0 : i32
    %c0_i32_1 = arith.constant 0 : i32
    return %c0_i32, %c0_i32_0 : i32, i32
  }
  func.func @transform_5(%arg0: i32, %arg1: i32) -> (i32, i32) {
    %c0_i32 = arith.constant 0 : i32
    %c0_i32_0 = arith.constant 0 : i32
    %c0_i32_1 = arith.constant 0 : i32
    return %c0_i32, %c0_i32_0 : i32, i32
  }
  func.func @transform_6(%arg0: i32, %arg1: i32) -> (i32, i32) {
    %c0_i32 = arith.constant 0 : i32
    %c0_i32_0 = arith.constant 0 : i32
    return %arg0, %c0_i32 : i32, i32
  }
}

module attributes {stable_mosaic.version = 11 : i64} {
  func.func @encoder_kernel(%arg0: i32, %arg1: i32, %arg2: memref<8x8x8xf32, #tpu.memory_space<vmem>>, %arg3: memref<8x512xbf16, #tpu.memory_space<vmem>>, %arg4: memref<128x512xbf16, #tpu.memory_space<vmem>>, %arg5: memref<1x512xf32, #tpu.memory_space<vmem>>, %arg6: memref<128x128xbf16, #tpu.memory_space<vmem>>, %arg7: memref<1x128xf32, #tpu.memory_space<vmem>>, %arg8: memref<8x128xf32, #tpu.memory_space<vmem>>, %arg9: memref<8x128xf32, #tpu.memory_space<vmem>>, %arg10: memref<8x128xf32, #tpu.memory_space<vmem>>) attributes {dimension_semantics = [#tpu.dimension_semantics<parallel>, #tpu.dimension_semantics<arbitrary>], iteration_bounds = array<i64: 1, 2>, scalar_prefetch = 0 : i64, scratch_operands = 2 : i64, tpu.core_type = #tpu.core_type<tc>, window_params = [{transform_indices = @transform_0, window_bounds = array<i64: 8, 8, 8>}, {pipeline_mode = #tpu.pipeline_mode<synchronous>, transform_indices = @transform_1, window_bounds = array<i64: 8, 512>}, {pipeline_mode = #tpu.pipeline_mode<synchronous>, transform_indices = @transform_2, window_bounds = array<i64: 128, 512>}, {pipeline_mode = #tpu.pipeline_mode<synchronous>, transform_indices = @transform_3, window_bounds = array<i64: 1, 512>}, {pipeline_mode = #tpu.pipeline_mode<synchronous>, transform_indices = @transform_4, window_bounds = array<i64: 128, 128>}, {pipeline_mode = #tpu.pipeline_mode<synchronous>, transform_indices = @transform_5, window_bounds = array<i64: 1, 128>}, {transform_indices = @transform_6, window_bounds = array<i64: 8, 128>}]} {
    %c0_i32 = arith.constant 0 : i32
    %0 = arith.cmpi eq, %arg1, %c0_i32 : i32
    %1 = arith.extui %0 : i1 to i32
    %c0_i32_0 = arith.constant 0 : i32
    %2 = arith.cmpi ne, %1, %c0_i32_0 : i32
    scf.if %2 {
      %cst_98 = arith.constant 0.000000e+00 : f32
      %322 = vector.broadcast %cst_98 : f32 to vector<8x128xf32>
      %c0_99 = arith.constant 0 : index
      %c0_100 = arith.constant 0 : index
      %323 = vector.load %arg9[%c0_99, %c0_100] : memref<8x128xf32, #tpu.memory_space<vmem>>, vector<8x128xf32>
      tpu.vector_store %arg9[%c0_99, %c0_100], %322 {strides = array<i32>} : memref<8x128xf32, #tpu.memory_space<vmem>>, vector<8x128xf32>,
      %cst_101 = arith.constant 0.000000e+00 : f32
      %324 = vector.broadcast %cst_101 : f32 to vector<8x128xf32>
      %c0_102 = arith.constant 0 : index
      %c0_103 = arith.constant 0 : index
      %325 = vector.load %arg10[%c0_102, %c0_103] : memref<8x128xf32, #tpu.memory_space<vmem>>, vector<8x128xf32>
      tpu.vector_store %arg10[%c0_102, %c0_103], %324 {strides = array<i32>} : memref<8x128xf32, #tpu.memory_space<vmem>>, vector<8x128xf32>,
    } else {
    }
    %c0 = arith.constant 0 : index
    %c0_1 = arith.constant 0 : index
    %3 = vector.load %arg4[%c0, %c0_1] : memref<128x512xbf16, #tpu.memory_space<vmem>>, vector<128x512xbf16>
    %c0_2 = arith.constant 0 : index
    %c0_3 = arith.constant 0 : index
    %4 = vector.load %arg5[%c0_2, %c0_3] : memref<1x512xf32, #tpu.memory_space<vmem>>, vector<1x512xf32>
    %c0_4 = arith.constant 0 : index
    %c0_5 = arith.constant 0 : index
    %c0_6 = arith.constant 0 : index
    %5 = vector.load %arg2[%c0_4, %c0_5, %c0_6] : memref<8x8x8xf32, #tpu.memory_space<vmem>>, vector<8x8x8xf32>
    %6 = vector.shape_cast %5 : vector<8x8x8xf32> to vector<64x8xf32>
    %7 = arith.truncf %6 : vector<64x8xf32> to vector<64x8xbf16>
    %c0_7 = arith.constant 0 : index
    %c0_8 = arith.constant 0 : index
    %8 = vector.load %arg3[%c0_7, %c0_8] : memref<8x512xbf16, #tpu.memory_space<vmem>>, vector<8x512xbf16>
    %cst = arith.constant dense<0.000000e+00> : vector<64x512xf32>
    %9 = tpu.matmul %7, %8, %cst {dimension_numbers = #tpu.dot_dimension_numbers<[1], [0], [0], [1], [0, 0, 1, 1], [], []>} : vector<64x8xbf16>, vector<8x512xbf16>, vector<64x512xf32> -> vector<64x512xf32>
    %10 = vector.shape_cast %9 : vector<64x512xf32> to vector<8x8x512xf32>
    %c0_9 = arith.constant 0 : index
    %c0_10 = arith.constant 0 : index
    %11 = vector.load %arg9[%c0_9, %c0_10] : memref<8x128xf32, #tpu.memory_space<vmem>>, vector<8x128xf32>
    %c0_11 = arith.constant 0 : index
    %c0_12 = arith.constant 0 : index
    %12 = vector.load %arg10[%c0_11, %c0_12] : memref<8x128xf32, #tpu.memory_space<vmem>>, vector<8x128xf32>
    %13 = vector.extract_strided_slice %10 {offsets = [0, 0, 0], sizes = [1, 8, 512], strides = [1, 1, 1]} : vector<8x8x512xf32> to vector<1x8x512xf32>
    %14 = vector.shape_cast %13 : vector<1x8x512xf32> to vector<8x512xf32>
    %15 = arith.truncf %11 : vector<8x128xf32> to vector<8x128xbf16>
    %cst_13 = arith.constant dense<0.000000e+00> : vector<8x512xf32>
    %16 = tpu.matmul %15, %3, %cst_13 {dimension_numbers = #tpu.dot_dimension_numbers<[1], [0], [0], [1], [0, 0, 1, 1], [], []>} : vector<8x128xbf16>, vector<128x512xbf16>, vector<8x512xf32> -> vector<8x512xf32>
    %17 = arith.addf %14, %16 : vector<8x512xf32>
    %18 = vector.broadcast %4 : vector<1x512xf32> to vector<8x512xf32>
    %19 = arith.addf %17, %18 : vector<8x512xf32>
    %20 = vector.extract_strided_slice %19 {offsets = [0, 0], sizes = [8, 128], strides = [1, 1]} : vector<8x512xf32> to vector<8x128xf32>
    %cst_14 = arith.constant 5.000000e-01 : f32
    %21 = vector.broadcast %cst_14 : f32 to vector<8x128xf32>
    %22 = arith.mulf %21, %20 : vector<8x128xf32>
    %23 = math.tanh %22 : vector<8x128xf32>
    %cst_15 = arith.constant 5.000000e-01 : f32
    %24 = vector.broadcast %cst_15 : f32 to vector<8x128xf32>
    %25 = arith.mulf %24, %23 : vector<8x128xf32>
    %cst_16 = arith.constant 5.000000e-01 : f32
    %26 = vector.broadcast %cst_16 : f32 to vector<8x128xf32>
    %27 = arith.addf %25, %26 : vector<8x128xf32>
    %28 = vector.extract_strided_slice %19 {offsets = [0, 128], sizes = [8, 128], strides = [1, 1]} : vector<8x512xf32> to vector<8x128xf32>
    %cst_17 = arith.constant 5.000000e-01 : f32
    %29 = vector.broadcast %cst_17 : f32 to vector<8x128xf32>
    %30 = arith.mulf %29, %28 : vector<8x128xf32>
    %31 = math.tanh %30 : vector<8x128xf32>
    %cst_18 = arith.constant 5.000000e-01 : f32
    %32 = vector.broadcast %cst_18 : f32 to vector<8x128xf32>
    %33 = arith.mulf %32, %31 : vector<8x128xf32>
    %cst_19 = arith.constant 5.000000e-01 : f32
    %34 = vector.broadcast %cst_19 : f32 to vector<8x128xf32>
    %35 = arith.addf %33, %34 : vector<8x128xf32>
    %36 = vector.extract_strided_slice %19 {offsets = [0, 256], sizes = [8, 128], strides = [1, 1]} : vector<8x512xf32> to vector<8x128xf32>
    %37 = math.tanh %36 : vector<8x128xf32>
    %38 = vector.extract_strided_slice %19 {offsets = [0, 384], sizes = [8, 128], strides = [1, 1]} : vector<8x512xf32> to vector<8x128xf32>
    %cst_20 = arith.constant 5.000000e-01 : f32
    %39 = vector.broadcast %cst_20 : f32 to vector<8x128xf32>
    %40 = arith.mulf %39, %38 : vector<8x128xf32>
    %41 = math.tanh %40 : vector<8x128xf32>
    %cst_21 = arith.constant 5.000000e-01 : f32
    %42 = vector.broadcast %cst_21 : f32 to vector<8x128xf32>
    %43 = arith.mulf %42, %41 : vector<8x128xf32>
    %cst_22 = arith.constant 5.000000e-01 : f32
    %44 = vector.broadcast %cst_22 : f32 to vector<8x128xf32>
    %45 = arith.addf %43, %44 : vector<8x128xf32>
    %46 = arith.mulf %35, %12 : vector<8x128xf32>
    %47 = arith.mulf %27, %37 : vector<8x128xf32>
    %48 = arith.addf %46, %47 : vector<8x128xf32>
    %49 = math.tanh %48 : vector<8x128xf32>
    %50 = arith.mulf %45, %49 : vector<8x128xf32>
    %51 = vector.extract_strided_slice %10 {offsets = [1, 0, 0], sizes = [1, 8, 512], strides = [1, 1, 1]} : vector<8x8x512xf32> to vector<1x8x512xf32>
    %52 = vector.shape_cast %51 : vector<1x8x512xf32> to vector<8x512xf32>
    %53 = arith.truncf %50 : vector<8x128xf32> to vector<8x128xbf16>
    %cst_23 = arith.constant dense<0.000000e+00> : vector<8x512xf32>
    %54 = tpu.matmul %53, %3, %cst_23 {dimension_numbers = #tpu.dot_dimension_numbers<[1], [0], [0], [1], [0, 0, 1, 1], [], []>} : vector<8x128xbf16>, vector<128x512xbf16>, vector<8x512xf32> -> vector<8x512xf32>
    %55 = arith.addf %52, %54 : vector<8x512xf32>
    %56 = vector.broadcast %4 : vector<1x512xf32> to vector<8x512xf32>
    %57 = arith.addf %55, %56 : vector<8x512xf32>
    %58 = vector.extract_strided_slice %57 {offsets = [0, 0], sizes = [8, 128], strides = [1, 1]} : vector<8x512xf32> to vector<8x128xf32>
    %cst_24 = arith.constant 5.000000e-01 : f32
    %59 = vector.broadcast %cst_24 : f32 to vector<8x128xf32>
    %60 = arith.mulf %59, %58 : vector<8x128xf32>
    %61 = math.tanh %60 : vector<8x128xf32>
    %cst_25 = arith.constant 5.000000e-01 : f32
    %62 = vector.broadcast %cst_25 : f32 to vector<8x128xf32>
    %63 = arith.mulf %62, %61 : vector<8x128xf32>
    %cst_26 = arith.constant 5.000000e-01 : f32
    %64 = vector.broadcast %cst_26 : f32 to vector<8x128xf32>
    %65 = arith.addf %63, %64 : vector<8x128xf32>
    %66 = vector.extract_strided_slice %57 {offsets = [0, 128], sizes = [8, 128], strides = [1, 1]} : vector<8x512xf32> to vector<8x128xf32>
    %cst_27 = arith.constant 5.000000e-01 : f32
    %67 = vector.broadcast %cst_27 : f32 to vector<8x128xf32>
    %68 = arith.mulf %67, %66 : vector<8x128xf32>
    %69 = math.tanh %68 : vector<8x128xf32>
    %cst_28 = arith.constant 5.000000e-01 : f32
    %70 = vector.broadcast %cst_28 : f32 to vector<8x128xf32>
    %71 = arith.mulf %70, %69 : vector<8x128xf32>
    %cst_29 = arith.constant 5.000000e-01 : f32
    %72 = vector.broadcast %cst_29 : f32 to vector<8x128xf32>
    %73 = arith.addf %71, %72 : vector<8x128xf32>
    %74 = vector.extract_strided_slice %57 {offsets = [0, 256], sizes = [8, 128], strides = [1, 1]} : vector<8x512xf32> to vector<8x128xf32>
    %75 = math.tanh %74 : vector<8x128xf32>
    %76 = vector.extract_strided_slice %57 {offsets = [0, 384], sizes = [8, 128], strides = [1, 1]} : vector<8x512xf32> to vector<8x128xf32>
    %cst_30 = arith.constant 5.000000e-01 : f32
    %77 = vector.broadcast %cst_30 : f32 to vector<8x128xf32>
    %78 = arith.mulf %77, %76 : vector<8x128xf32>
    %79 = math.tanh %78 : vector<8x128xf32>
    %cst_31 = arith.constant 5.000000e-01 : f32
    %80 = vector.broadcast %cst_31 : f32 to vector<8x128xf32>
    %81 = arith.mulf %80, %79 : vector<8x128xf32>
    %cst_32 = arith.constant 5.000000e-01 : f32
    %82 = vector.broadcast %cst_32 : f32 to vector<8x128xf32>
    %83 = arith.addf %81, %82 : vector<8x128xf32>
    %84 = arith.mulf %73, %48 : vector<8x128xf32>
    %85 = arith.mulf %65, %75 : vector<8x128xf32>
    %86 = arith.addf %84, %85 : vector<8x128xf32>
    %87 = math.tanh %86 : vector<8x128xf32>
    %88 = arith.mulf %83, %87 : vector<8x128xf32>
    %89 = vector.extract_strided_slice %10 {offsets = [2, 0, 0], sizes = [1, 8, 512], strides = [1, 1, 1]} : vector<8x8x512xf32> to vector<1x8x512xf32>
    %90 = vector.shape_cast %89 : vector<1x8x512xf32> to vector<8x512xf32>
    %91 = arith.truncf %88 : vector<8x128xf32> to vector<8x128xbf16>
    %cst_33 = arith.constant dense<0.000000e+00> : vector<8x512xf32>
    %92 = tpu.matmul %91, %3, %cst_33 {dimension_numbers = #tpu.dot_dimension_numbers<[1], [0], [0], [1], [0, 0, 1, 1], [], []>} : vector<8x128xbf16>, vector<128x512xbf16>, vector<8x512xf32> -> vector<8x512xf32>
    %93 = arith.addf %90, %92 : vector<8x512xf32>
    %94 = vector.broadcast %4 : vector<1x512xf32> to vector<8x512xf32>
    %95 = arith.addf %93, %94 : vector<8x512xf32>
    %96 = vector.extract_strided_slice %95 {offsets = [0, 0], sizes = [8, 128], strides = [1, 1]} : vector<8x512xf32> to vector<8x128xf32>
    %cst_34 = arith.constant 5.000000e-01 : f32
    %97 = vector.broadcast %cst_34 : f32 to vector<8x128xf32>
    %98 = arith.mulf %97, %96 : vector<8x128xf32>
    %99 = math.tanh %98 : vector<8x128xf32>
    %cst_35 = arith.constant 5.000000e-01 : f32
    %100 = vector.broadcast %cst_35 : f32 to vector<8x128xf32>
    %101 = arith.mulf %100, %99 : vector<8x128xf32>
    %cst_36 = arith.constant 5.000000e-01 : f32
    %102 = vector.broadcast %cst_36 : f32 to vector<8x128xf32>
    %103 = arith.addf %101, %102 : vector<8x128xf32>
    %104 = vector.extract_strided_slice %95 {offsets = [0, 128], sizes = [8, 128], strides = [1, 1]} : vector<8x512xf32> to vector<8x128xf32>
    %cst_37 = arith.constant 5.000000e-01 : f32
    %105 = vector.broadcast %cst_37 : f32 to vector<8x128xf32>
    %106 = arith.mulf %105, %104 : vector<8x128xf32>
    %107 = math.tanh %106 : vector<8x128xf32>
    %cst_38 = arith.constant 5.000000e-01 : f32
    %108 = vector.broadcast %cst_38 : f32 to vector<8x128xf32>
    %109 = arith.mulf %108, %107 : vector<8x128xf32>
    %cst_39 = arith.constant 5.000000e-01 : f32
    %110 = vector.broadcast %cst_39 : f32 to vector<8x128xf32>
    %111 = arith.addf %109, %110 : vector<8x128xf32>
    %112 = vector.extract_strided_slice %95 {offsets = [0, 256], sizes = [8, 128], strides = [1, 1]} : vector<8x512xf32> to vector<8x128xf32>
    %113 = math.tanh %112 : vector<8x128xf32>
    %114 = vector.extract_strided_slice %95 {offsets = [0, 384], sizes = [8, 128], strides = [1, 1]} : vector<8x512xf32> to vector<8x128xf32>
    %cst_40 = arith.constant 5.000000e-01 : f32
    %115 = vector.broadcast %cst_40 : f32 to vector<8x128xf32>
    %116 = arith.mulf %115, %114 : vector<8x128xf32>
    %117 = math.tanh %116 : vector<8x128xf32>
    %cst_41 = arith.constant 5.000000e-01 : f32
    %118 = vector.broadcast %cst_41 : f32 to vector<8x128xf32>
    %119 = arith.mulf %118, %117 : vector<8x128xf32>
    %cst_42 = arith.constant 5.000000e-01 : f32
    %120 = vector.broadcast %cst_42 : f32 to vector<8x128xf32>
    %121 = arith.addf %119, %120 : vector<8x128xf32>
    %122 = arith.mulf %111, %86 : vector<8x128xf32>
    %123 = arith.mulf %103, %113 : vector<8x128xf32>
    %124 = arith.addf %122, %123 : vector<8x128xf32>
    %125 = math.tanh %124 : vector<8x128xf32>
    %126 = arith.mulf %121, %125 : vector<8x128xf32>
    %127 = vector.extract_strided_slice %10 {offsets = [3, 0, 0], sizes = [1, 8, 512], strides = [1, 1, 1]} : vector<8x8x512xf32> to vector<1x8x512xf32>
    %128 = vector.shape_cast %127 : vector<1x8x512xf32> to vector<8x512xf32>
    %129 = arith.truncf %126 : vector<8x128xf32> to vector<8x128xbf16>
    %cst_43 = arith.constant dense<0.000000e+00> : vector<8x512xf32>
    %130 = tpu.matmul %129, %3, %cst_43 {dimension_numbers = #tpu.dot_dimension_numbers<[1], [0], [0], [1], [0, 0, 1, 1], [], []>} : vector<8x128xbf16>, vector<128x512xbf16>, vector<8x512xf32> -> vector<8x512xf32>
    %131 = arith.addf %128, %130 : vector<8x512xf32>
    %132 = vector.broadcast %4 : vector<1x512xf32> to vector<8x512xf32>
    %133 = arith.addf %131, %132 : vector<8x512xf32>
    %134 = vector.extract_strided_slice %133 {offsets = [0, 0], sizes = [8, 128], strides = [1, 1]} : vector<8x512xf32> to vector<8x128xf32>
    %cst_44 = arith.constant 5.000000e-01 : f32
    %135 = vector.broadcast %cst_44 : f32 to vector<8x128xf32>
    %136 = arith.mulf %135, %134 : vector<8x128xf32>
    %137 = math.tanh %136 : vector<8x128xf32>
    %cst_45 = arith.constant 5.000000e-01 : f32
    %138 = vector.broadcast %cst_45 : f32 to vector<8x128xf32>
    %139 = arith.mulf %138, %137 : vector<8x128xf32>
    %cst_46 = arith.constant 5.000000e-01 : f32
    %140 = vector.broadcast %cst_46 : f32 to vector<8x128xf32>
    %141 = arith.addf %139, %140 : vector<8x128xf32>
    %142 = vector.extract_strided_slice %133 {offsets = [0, 128], sizes = [8, 128], strides = [1, 1]} : vector<8x512xf32> to vector<8x128xf32>
    %cst_47 = arith.constant 5.000000e-01 : f32
    %143 = vector.broadcast %cst_47 : f32 to vector<8x128xf32>
    %144 = arith.mulf %143, %142 : vector<8x128xf32>
    %145 = math.tanh %144 : vector<8x128xf32>
    %cst_48 = arith.constant 5.000000e-01 : f32
    %146 = vector.broadcast %cst_48 : f32 to vector<8x128xf32>
    %147 = arith.mulf %146, %145 : vector<8x128xf32>
    %cst_49 = arith.constant 5.000000e-01 : f32
    %148 = vector.broadcast %cst_49 : f32 to vector<8x128xf32>
    %149 = arith.addf %147, %148 : vector<8x128xf32>
    %150 = vector.extract_strided_slice %133 {offsets = [0, 256], sizes = [8, 128], strides = [1, 1]} : vector<8x512xf32> to vector<8x128xf32>
    %151 = math.tanh %150 : vector<8x128xf32>
    %152 = vector.extract_strided_slice %133 {offsets = [0, 384], sizes = [8, 128], strides = [1, 1]} : vector<8x512xf32> to vector<8x128xf32>
    %cst_50 = arith.constant 5.000000e-01 : f32
    %153 = vector.broadcast %cst_50 : f32 to vector<8x128xf32>
    %154 = arith.mulf %153, %152 : vector<8x128xf32>
    %155 = math.tanh %154 : vector<8x128xf32>
    %cst_51 = arith.constant 5.000000e-01 : f32
    %156 = vector.broadcast %cst_51 : f32 to vector<8x128xf32>
    %157 = arith.mulf %156, %155 : vector<8x128xf32>
    %cst_52 = arith.constant 5.000000e-01 : f32
    %158 = vector.broadcast %cst_52 : f32 to vector<8x128xf32>
    %159 = arith.addf %157, %158 : vector<8x128xf32>
    %160 = arith.mulf %149, %124 : vector<8x128xf32>
    %161 = arith.mulf %141, %151 : vector<8x128xf32>
    %162 = arith.addf %160, %161 : vector<8x128xf32>
    %163 = math.tanh %162 : vector<8x128xf32>
    %164 = arith.mulf %159, %163 : vector<8x128xf32>
    %165 = vector.extract_strided_slice %10 {offsets = [4, 0, 0], sizes = [1, 8, 512], strides = [1, 1, 1]} : vector<8x8x512xf32> to vector<1x8x512xf32>
    %166 = vector.shape_cast %165 : vector<1x8x512xf32> to vector<8x512xf32>
    %167 = arith.truncf %164 : vector<8x128xf32> to vector<8x128xbf16>
    %cst_53 = arith.constant dense<0.000000e+00> : vector<8x512xf32>
    %168 = tpu.matmul %167, %3, %cst_53 {dimension_numbers = #tpu.dot_dimension_numbers<[1], [0], [0], [1], [0, 0, 1, 1], [], []>} : vector<8x128xbf16>, vector<128x512xbf16>, vector<8x512xf32> -> vector<8x512xf32>
    %169 = arith.addf %166, %168 : vector<8x512xf32>
    %170 = vector.broadcast %4 : vector<1x512xf32> to vector<8x512xf32>
    %171 = arith.addf %169, %170 : vector<8x512xf32>
    %172 = vector.extract_strided_slice %171 {offsets = [0, 0], sizes = [8, 128], strides = [1, 1]} : vector<8x512xf32> to vector<8x128xf32>
    %cst_54 = arith.constant 5.000000e-01 : f32
    %173 = vector.broadcast %cst_54 : f32 to vector<8x128xf32>
    %174 = arith.mulf %173, %172 : vector<8x128xf32>
    %175 = math.tanh %174 : vector<8x128xf32>
    %cst_55 = arith.constant 5.000000e-01 : f32
    %176 = vector.broadcast %cst_55 : f32 to vector<8x128xf32>
    %177 = arith.mulf %176, %175 : vector<8x128xf32>
    %cst_56 = arith.constant 5.000000e-01 : f32
    %178 = vector.broadcast %cst_56 : f32 to vector<8x128xf32>
    %179 = arith.addf %177, %178 : vector<8x128xf32>
    %180 = vector.extract_strided_slice %171 {offsets = [0, 128], sizes = [8, 128], strides = [1, 1]} : vector<8x512xf32> to vector<8x128xf32>
    %cst_57 = arith.constant 5.000000e-01 : f32
    %181 = vector.broadcast %cst_57 : f32 to vector<8x128xf32>
    %182 = arith.mulf %181, %180 : vector<8x128xf32>
    %183 = math.tanh %182 : vector<8x128xf32>
    %cst_58 = arith.constant 5.000000e-01 : f32
    %184 = vector.broadcast %cst_58 : f32 to vector<8x128xf32>
    %185 = arith.mulf %184, %183 : vector<8x128xf32>
    %cst_59 = arith.constant 5.000000e-01 : f32
    %186 = vector.broadcast %cst_59 : f32 to vector<8x128xf32>
    %187 = arith.addf %185, %186 : vector<8x128xf32>
    %188 = vector.extract_strided_slice %171 {offsets = [0, 256], sizes = [8, 128], strides = [1, 1]} : vector<8x512xf32> to vector<8x128xf32>
    %189 = math.tanh %188 : vector<8x128xf32>
    %190 = vector.extract_strided_slice %171 {offsets = [0, 384], sizes = [8, 128], strides = [1, 1]} : vector<8x512xf32> to vector<8x128xf32>
    %cst_60 = arith.constant 5.000000e-01 : f32
    %191 = vector.broadcast %cst_60 : f32 to vector<8x128xf32>
    %192 = arith.mulf %191, %190 : vector<8x128xf32>
    %193 = math.tanh %192 : vector<8x128xf32>
    %cst_61 = arith.constant 5.000000e-01 : f32
    %194 = vector.broadcast %cst_61 : f32 to vector<8x128xf32>
    %195 = arith.mulf %194, %193 : vector<8x128xf32>
    %cst_62 = arith.constant 5.000000e-01 : f32
    %196 = vector.broadcast %cst_62 : f32 to vector<8x128xf32>
    %197 = arith.addf %195, %196 : vector<8x128xf32>
    %198 = arith.mulf %187, %162 : vector<8x128xf32>
    %199 = arith.mulf %179, %189 : vector<8x128xf32>
    %200 = arith.addf %198, %199 : vector<8x128xf32>
    %201 = math.tanh %200 : vector<8x128xf32>
    %202 = arith.mulf %197, %201 : vector<8x128xf32>
    %203 = vector.extract_strided_slice %10 {offsets = [5, 0, 0], sizes = [1, 8, 512], strides = [1, 1, 1]} : vector<8x8x512xf32> to vector<1x8x512xf32>
    %204 = vector.shape_cast %203 : vector<1x8x512xf32> to vector<8x512xf32>
    %205 = arith.truncf %202 : vector<8x128xf32> to vector<8x128xbf16>
    %cst_63 = arith.constant dense<0.000000e+00> : vector<8x512xf32>
    %206 = tpu.matmul %205, %3, %cst_63 {dimension_numbers = #tpu.dot_dimension_numbers<[1], [0], [0], [1], [0, 0, 1, 1], [], []>} : vector<8x128xbf16>, vector<128x512xbf16>, vector<8x512xf32> -> vector<8x512xf32>
    %207 = arith.addf %204, %206 : vector<8x512xf32>
    %208 = vector.broadcast %4 : vector<1x512xf32> to vector<8x512xf32>
    %209 = arith.addf %207, %208 : vector<8x512xf32>
    %210 = vector.extract_strided_slice %209 {offsets = [0, 0], sizes = [8, 128], strides = [1, 1]} : vector<8x512xf32> to vector<8x128xf32>
    %cst_64 = arith.constant 5.000000e-01 : f32
    %211 = vector.broadcast %cst_64 : f32 to vector<8x128xf32>
    %212 = arith.mulf %211, %210 : vector<8x128xf32>
    %213 = math.tanh %212 : vector<8x128xf32>
    %cst_65 = arith.constant 5.000000e-01 : f32
    %214 = vector.broadcast %cst_65 : f32 to vector<8x128xf32>
    %215 = arith.mulf %214, %213 : vector<8x128xf32>
    %cst_66 = arith.constant 5.000000e-01 : f32
    %216 = vector.broadcast %cst_66 : f32 to vector<8x128xf32>
    %217 = arith.addf %215, %216 : vector<8x128xf32>
    %218 = vector.extract_strided_slice %209 {offsets = [0, 128], sizes = [8, 128], strides = [1, 1]} : vector<8x512xf32> to vector<8x128xf32>
    %cst_67 = arith.constant 5.000000e-01 : f32
    %219 = vector.broadcast %cst_67 : f32 to vector<8x128xf32>
    %220 = arith.mulf %219, %218 : vector<8x128xf32>
    %221 = math.tanh %220 : vector<8x128xf32>
    %cst_68 = arith.constant 5.000000e-01 : f32
    %222 = vector.broadcast %cst_68 : f32 to vector<8x128xf32>
    %223 = arith.mulf %222, %221 : vector<8x128xf32>
    %cst_69 = arith.constant 5.000000e-01 : f32
    %224 = vector.broadcast %cst_69 : f32 to vector<8x128xf32>
    %225 = arith.addf %223, %224 : vector<8x128xf32>
    %226 = vector.extract_strided_slice %209 {offsets = [0, 256], sizes = [8, 128], strides = [1, 1]} : vector<8x512xf32> to vector<8x128xf32>
    %227 = math.tanh %226 : vector<8x128xf32>
    %228 = vector.extract_strided_slice %209 {offsets = [0, 384], sizes = [8, 128], strides = [1, 1]} : vector<8x512xf32> to vector<8x128xf32>
    %cst_70 = arith.constant 5.000000e-01 : f32
    %229 = vector.broadcast %cst_70 : f32 to vector<8x128xf32>
    %230 = arith.mulf %229, %228 : vector<8x128xf32>
    %231 = math.tanh %230 : vector<8x128xf32>
    %cst_71 = arith.constant 5.000000e-01 : f32
    %232 = vector.broadcast %cst_71 : f32 to vector<8x128xf32>
    %233 = arith.mulf %232, %231 : vector<8x128xf32>
    %cst_72 = arith.constant 5.000000e-01 : f32
    %234 = vector.broadcast %cst_72 : f32 to vector<8x128xf32>
    %235 = arith.addf %233, %234 : vector<8x128xf32>
    %236 = arith.mulf %225, %200 : vector<8x128xf32>
    %237 = arith.mulf %217, %227 : vector<8x128xf32>
    %238 = arith.addf %236, %237 : vector<8x128xf32>
    %239 = math.tanh %238 : vector<8x128xf32>
    %240 = arith.mulf %235, %239 : vector<8x128xf32>
    %241 = vector.extract_strided_slice %10 {offsets = [6, 0, 0], sizes = [1, 8, 512], strides = [1, 1, 1]} : vector<8x8x512xf32> to vector<1x8x512xf32>
    %242 = vector.shape_cast %241 : vector<1x8x512xf32> to vector<8x512xf32>
    %243 = arith.truncf %240 : vector<8x128xf32> to vector<8x128xbf16>
    %cst_73 = arith.constant dense<0.000000e+00> : vector<8x512xf32>
    %244 = tpu.matmul %243, %3, %cst_73 {dimension_numbers = #tpu.dot_dimension_numbers<[1], [0], [0], [1], [0, 0, 1, 1], [], []>} : vector<8x128xbf16>, vector<128x512xbf16>, vector<8x512xf32> -> vector<8x512xf32>
    %245 = arith.addf %242, %244 : vector<8x512xf32>
    %246 = vector.broadcast %4 : vector<1x512xf32> to vector<8x512xf32>
    %247 = arith.addf %245, %246 : vector<8x512xf32>
    %248 = vector.extract_strided_slice %247 {offsets = [0, 0], sizes = [8, 128], strides = [1, 1]} : vector<8x512xf32> to vector<8x128xf32>
    %cst_74 = arith.constant 5.000000e-01 : f32
    %249 = vector.broadcast %cst_74 : f32 to vector<8x128xf32>
    %250 = arith.mulf %249, %248 : vector<8x128xf32>
    %251 = math.tanh %250 : vector<8x128xf32>
    %cst_75 = arith.constant 5.000000e-01 : f32
    %252 = vector.broadcast %cst_75 : f32 to vector<8x128xf32>
    %253 = arith.mulf %252, %251 : vector<8x128xf32>
    %cst_76 = arith.constant 5.000000e-01 : f32
    %254 = vector.broadcast %cst_76 : f32 to vector<8x128xf32>
    %255 = arith.addf %253, %254 : vector<8x128xf32>
    %256 = vector.extract_strided_slice %247 {offsets = [0, 128], sizes = [8, 128], strides = [1, 1]} : vector<8x512xf32> to vector<8x128xf32>
    %cst_77 = arith.constant 5.000000e-01 : f32
    %257 = vector.broadcast %cst_77 : f32 to vector<8x128xf32>
    %258 = arith.mulf %257, %256 : vector<8x128xf32>
    %259 = math.tanh %258 : vector<8x128xf32>
    %cst_78 = arith.constant 5.000000e-01 : f32
    %260 = vector.broadcast %cst_78 : f32 to vector<8x128xf32>
    %261 = arith.mulf %260, %259 : vector<8x128xf32>
    %cst_79 = arith.constant 5.000000e-01 : f32
    %262 = vector.broadcast %cst_79 : f32 to vector<8x128xf32>
    %263 = arith.addf %261, %262 : vector<8x128xf32>
    %264 = vector.extract_strided_slice %247 {offsets = [0, 256], sizes = [8, 128], strides = [1, 1]} : vector<8x512xf32> to vector<8x128xf32>
    %265 = math.tanh %264 : vector<8x128xf32>
    %266 = vector.extract_strided_slice %247 {offsets = [0, 384], sizes = [8, 128], strides = [1, 1]} : vector<8x512xf32> to vector<8x128xf32>
    %cst_80 = arith.constant 5.000000e-01 : f32
    %267 = vector.broadcast %cst_80 : f32 to vector<8x128xf32>
    %268 = arith.mulf %267, %266 : vector<8x128xf32>
    %269 = math.tanh %268 : vector<8x128xf32>
    %cst_81 = arith.constant 5.000000e-01 : f32
    %270 = vector.broadcast %cst_81 : f32 to vector<8x128xf32>
    %271 = arith.mulf %270, %269 : vector<8x128xf32>
    %cst_82 = arith.constant 5.000000e-01 : f32
    %272 = vector.broadcast %cst_82 : f32 to vector<8x128xf32>
    %273 = arith.addf %271, %272 : vector<8x128xf32>
    %274 = arith.mulf %263, %238 : vector<8x128xf32>
    %275 = arith.mulf %255, %265 : vector<8x128xf32>
    %276 = arith.addf %274, %275 : vector<8x128xf32>
    %277 = math.tanh %276 : vector<8x128xf32>
    %278 = arith.mulf %273, %277 : vector<8x128xf32>
    %279 = vector.extract_strided_slice %10 {offsets = [7, 0, 0], sizes = [1, 8, 512], strides = [1, 1, 1]} : vector<8x8x512xf32> to vector<1x8x512xf32>
    %280 = vector.shape_cast %279 : vector<1x8x512xf32> to vector<8x512xf32>
    %281 = arith.truncf %278 : vector<8x128xf32> to vector<8x128xbf16>
    %cst_83 = arith.constant dense<0.000000e+00> : vector<8x512xf32>
    %282 = tpu.matmul %281, %3, %cst_83 {dimension_numbers = #tpu.dot_dimension_numbers<[1], [0], [0], [1], [0, 0, 1, 1], [], []>} : vector<8x128xbf16>, vector<128x512xbf16>, vector<8x512xf32> -> vector<8x512xf32>
    %283 = arith.addf %280, %282 : vector<8x512xf32>
    %284 = vector.broadcast %4 : vector<1x512xf32> to vector<8x512xf32>
    %285 = arith.addf %283, %284 : vector<8x512xf32>
    %286 = vector.extract_strided_slice %285 {offsets = [0, 0], sizes = [8, 128], strides = [1, 1]} : vector<8x512xf32> to vector<8x128xf32>
    %cst_84 = arith.constant 5.000000e-01 : f32
    %287 = vector.broadcast %cst_84 : f32 to vector<8x128xf32>
    %288 = arith.mulf %287, %286 : vector<8x128xf32>
    %289 = math.tanh %288 : vector<8x128xf32>
    %cst_85 = arith.constant 5.000000e-01 : f32
    %290 = vector.broadcast %cst_85 : f32 to vector<8x128xf32>
    %291 = arith.mulf %290, %289 : vector<8x128xf32>
    %cst_86 = arith.constant 5.000000e-01 : f32
    %292 = vector.broadcast %cst_86 : f32 to vector<8x128xf32>
    %293 = arith.addf %291, %292 : vector<8x128xf32>
    %294 = vector.extract_strided_slice %285 {offsets = [0, 128], sizes = [8, 128], strides = [1, 1]} : vector<8x512xf32> to vector<8x128xf32>
    %cst_87 = arith.constant 5.000000e-01 : f32
    %295 = vector.broadcast %cst_87 : f32 to vector<8x128xf32>
    %296 = arith.mulf %295, %294 : vector<8x128xf32>
    %297 = math.tanh %296 : vector<8x128xf32>
    %cst_88 = arith.constant 5.000000e-01 : f32
    %298 = vector.broadcast %cst_88 : f32 to vector<8x128xf32>
    %299 = arith.mulf %298, %297 : vector<8x128xf32>
    %cst_89 = arith.constant 5.000000e-01 : f32
    %300 = vector.broadcast %cst_89 : f32 to vector<8x128xf32>
    %301 = arith.addf %299, %300 : vector<8x128xf32>
    %302 = vector.extract_strided_slice %285 {offsets = [0, 256], sizes = [8, 128], strides = [1, 1]} : vector<8x512xf32> to vector<8x128xf32>
    %303 = math.tanh %302 : vector<8x128xf32>
    %304 = vector.extract_strided_slice %285 {offsets = [0, 384], sizes = [8, 128], strides = [1, 1]} : vector<8x512xf32> to vector<8x128xf32>
    %cst_90 = arith.constant 5.000000e-01 : f32
    %305 = vector.broadcast %cst_90 : f32 to vector<8x128xf32>
    %306 = arith.mulf %305, %304 : vector<8x128xf32>
    %307 = math.tanh %306 : vector<8x128xf32>
    %cst_91 = arith.constant 5.000000e-01 : f32
    %308 = vector.broadcast %cst_91 : f32 to vector<8x128xf32>
    %309 = arith.mulf %308, %307 : vector<8x128xf32>
    %cst_92 = arith.constant 5.000000e-01 : f32
    %310 = vector.broadcast %cst_92 : f32 to vector<8x128xf32>
    %311 = arith.addf %309, %310 : vector<8x128xf32>
    %312 = arith.mulf %301, %276 : vector<8x128xf32>
    %313 = arith.mulf %293, %303 : vector<8x128xf32>
    %314 = arith.addf %312, %313 : vector<8x128xf32>
    %315 = math.tanh %314 : vector<8x128xf32>
    %316 = arith.mulf %311, %315 : vector<8x128xf32>
    %c0_93 = arith.constant 0 : index
    %c0_94 = arith.constant 0 : index
    %317 = vector.load %arg9[%c0_93, %c0_94] : memref<8x128xf32, #tpu.memory_space<vmem>>, vector<8x128xf32>
    tpu.vector_store %arg9[%c0_93, %c0_94], %316 {strides = array<i32>} : memref<8x128xf32, #tpu.memory_space<vmem>>, vector<8x128xf32>,
    %c0_95 = arith.constant 0 : index
    %c0_96 = arith.constant 0 : index
    %318 = vector.load %arg10[%c0_95, %c0_96] : memref<8x128xf32, #tpu.memory_space<vmem>>, vector<8x128xf32>
    tpu.vector_store %arg10[%c0_95, %c0_96], %314 {strides = array<i32>} : memref<8x128xf32, #tpu.memory_space<vmem>>, vector<8x128xf32>,
    %c1_i32 = arith.constant 1 : i32
    %319 = arith.cmpi eq, %arg1, %c1_i32 : i32
    %320 = arith.extui %319 : i1 to i32
    %c0_i32_97 = arith.constant 0 : i32
    %321 = arith.cmpi ne, %320, %c0_i32_97 : i32
    scf.if %321 {
      %322 = arith.truncf %316 : vector<8x128xf32> to vector<8x128xbf16>
      %c0_98 = arith.constant 0 : index
      %c0_99 = arith.constant 0 : index
      %323 = vector.load %arg6[%c0_98, %c0_99] : memref<128x128xbf16, #tpu.memory_space<vmem>>, vector<128x128xbf16>
      %cst_100 = arith.constant dense<0.000000e+00> : vector<8x128xf32>
      %324 = tpu.matmul %322, %323, %cst_100 {dimension_numbers = #tpu.dot_dimension_numbers<[1], [0], [0], [1], [0, 0, 1, 1], [], []>} : vector<8x128xbf16>, vector<128x128xbf16>, vector<8x128xf32> -> vector<8x128xf32>
      %c0_101 = arith.constant 0 : index
      %c0_102 = arith.constant 0 : index
      %325 = vector.load %arg7[%c0_101, %c0_102] : memref<1x128xf32, #tpu.memory_space<vmem>>, vector<1x128xf32>
      %326 = vector.broadcast %325 : vector<1x128xf32> to vector<8x128xf32>
      %327 = arith.addf %324, %326 : vector<8x128xf32>
      %c0_103 = arith.constant 0 : index
      %c0_104 = arith.constant 0 : index
      %328 = vector.load %arg8[%c0_103, %c0_104] : memref<8x128xf32, #tpu.memory_space<vmem>>, vector<8x128xf32>
      tpu.vector_store %arg8[%c0_103, %c0_104], %327 {strides = array<i32>} : memref<8x128xf32, #tpu.memory_space<vmem>>, vector<8x128xf32>,
    } else {
    }
    return
  }
  func.func @transform_0(%arg0: i32, %arg1: i32) -> (i32, i32, i32) {
    %c0_i32 = arith.constant 0 : i32
    %c0_i32_0 = arith.constant 0 : i32
    return %arg1, %arg0, %c0_i32 : i32, i32, i32
  }
  func.func @transform_1(%arg0: i32, %arg1: i32) -> (i32, i32) {
    %c0_i32 = arith.constant 0 : i32
    %c0_i32_0 = arith.constant 0 : i32
    %c0_i32_1 = arith.constant 0 : i32
    return %c0_i32, %c0_i32_0 : i32, i32
  }
  func.func @transform_2(%arg0: i32, %arg1: i32) -> (i32, i32) {
    %c0_i32 = arith.constant 0 : i32
    %c0_i32_0 = arith.constant 0 : i32
    %c0_i32_1 = arith.constant 0 : i32
    return %c0_i32, %c0_i32_0 : i32, i32
  }
  func.func @transform_3(%arg0: i32, %arg1: i32) -> (i32, i32) {
    %c0_i32 = arith.constant 0 : i32
    %c0_i32_0 = arith.constant 0 : i32
    %c0_i32_1 = arith.constant 0 : i32
    return %c0_i32, %c0_i32_0 : i32, i32
  }
  func.func @transform_4(%arg0: i32, %arg1: i32) -> (i32, i32) {
    %c0_i32 = arith.constant 0 : i32
    %c0_i32_0 = arith.constant 0 : i32
    %c0_i32_1 = arith.constant 0 : i32
    return %c0_i32, %c0_i32_0 : i32, i32
  }
  func.func @transform_5(%arg0: i32, %arg1: i32) -> (i32, i32) {
    %c0_i32 = arith.constant 0 : i32
    %c0_i32_0 = arith.constant 0 : i32
    %c0_i32_1 = arith.constant 0 : i32
    return %c0_i32, %c0_i32_0 : i32, i32
  }
  func.func @transform_6(%arg0: i32, %arg1: i32) -> (i32, i32) {
    %c0_i32 = arith.constant 0 : i32
    %c0_i32_0 = arith.constant 0 : i32
    return %arg0, %c0_i32 : i32, i32
  }
}

</mosaic_0001>

<llo_original>
// kernel: tpu_custom_call.1
$region0: #{tpu_custom_call.1}
  #allocation0 [shape = 'u32[]', space=smem, size = 0x4, offset = 0x4, fixed_abs, tag = 'smem constant byte address 0x4 - core index']
  #allocation1 [shape = 'u32[144,128]{1,0:T(1,128)}', space=vmem, size = 0x12000, scoped, tag = 'internal scratch']
  #allocation2 [shape = 'f32[8,128]{1,0:T(8,128)}', space=vmem, size = 0x1000, scoped, tag = 'scratch operand']
  #allocation3 [shape = 'f32[8,128]{1,0:T(8,128)}', space=vmem, size = 0x1000, scoped, tag = 'scratch operand']
  %s0 = inlined_call_operand.vmem [shape: f32[16,8,8], index: 0, kind: input, shape index: {}]
  %s1 = inlined_call_operand.vmem [shape: bf16[8,512], index: 1, kind: input, shape index: {}]
  %s2 = inlined_call_operand.hbm [shape: bf16[128,512], index: 2, kind: input, shape index: {}]
  %s3 = inlined_call_operand.vmem [shape: f32[1,512], index: 3, kind: input, shape index: {}]
  %s4 = inlined_call_operand.vmem [shape: bf16[128,128], index: 4, kind: input, shape index: {}]
  %s5 = inlined_call_operand.vmem [shape: f32[1,128], index: 5, kind: input, shape index: {}]
  %s6 = inlined_call_operand.hbm [shape: f32[8,128], index: 6, kind: output, shape index: {}]
  %s7 = sld [smem:[#allocation0]]
  $region69: #{tpu_custom_call.1} parent=0
    _
  %s9 = ssub.s32 1, %s7
  %s10 = scalar_select 0, %s9, %s7
  $region1: #{tpu_custom_call.1} parent=0
    #allocation4 [shape = 'u8[131072]{0}', space=vmem, size = 0x20000, scoped, tag = 'input window, operand 2, single buffered']
    #allocation5 [shape = 's32[2]{0}', space=sflag, size = 0x8, scoped, tag = 'scoped memory for tpu_custom_call.1']
    #allocation6 [shape = 's32[2]{0}', space=sflag, size = 0x8, scoped, tag = 'scoped memory for tpu_custom_call.1']
    #allocation7 [shape = 'u8[4096]{0}', space=vmem, size = 0x1000, scoped, tag = 'output window, operand 0, single buffered']
    %11 = vsyncpa [#allocation5], 0
    %12 = vsyncpa [#allocation6], 0
    loop: start=0, step=1, limit=4
    $region2: #{tpu_custom_call.1} parent=1 // loop_pre_header
      _
    $region3: #{tpu_custom_call.1} parent=1 // loop_header
      %s14 = sphi 0, %s18
      %p15 = scmp.ge.s32.totalorder %s14, 4
      %s21 = sphi 0, %s33
      %s22 = sphi 0, %s29
      %s23 = sphi 0, %s21
      %s24 = sphi 0, %s22
      %s25 = sphi 0, %s23
      %s26 = sphi 0, %s24
      %s38 = sphi 0, %s40
      %s41 = sphi 0, %s38
      %s42 = sphi 0, %s41
      %s58 = sphi 0, %s42
      %s62 = sphi 0, %s62
      %s64 = sphi 0, %s62
      %s65 = sphi 0, %s64
      %s79 = sphi 0, %s65
      %s83 = sphi 0, %s83
      %s85 = sphi 0, %s83
      %s86 = sphi 0, %s85
      %s100 = sphi 0, %s86
      %s104 = sphi 0, %s104
      %s106 = sphi 0, %s104
      %s107 = sphi 0, %s106
      %s121 = sphi 0, %s107
      %s125 = sphi 0, %s125
      %s127 = sphi 0, %s125
      %s128 = sphi 0, %s127
      %s142 = sphi 0, %s128
      %s146 = sphi 0, %s146
      %s148 = sphi 0, %s146
      %s149 = sphi 0, %s148
      %s163 = sphi 0, %s149
      %s169 = sphi 0, %s171
      %s172 = sphi 0, %s169
      %s173 = sphi 0, %s172
      %s189 = sphi 0, %s173
    $region4: #{tpu_custom_call.1} parent=1 // loop_header_branch
      %17 = sbr.rel (%p15) target = $region8
    $region5: #{tpu_custom_call.1} parent=1 // loop_body
      %s19 = ssub.s32 %s14, 1
      %s20 = ssub.s32 %s14, 2
      %s27 = sadd.s32 1, %s22
      %p28 = scmp.ge.s32.totalorder %s27, 2
      %s29 = scalar_select %p28, 0, %s27
      %s30 = sadd.s32 1, %s21
      %s31 = scalar_select %p28, %s30, %s21
      %p32 = scmp.ge.s32.totalorder %s31, 1
      %s33 = scalar_select %p32, 0, %s31
      %s34 = ssub.s32 %s22, %s29
      %s35 = ssub.s32 %s21, %s33
      %s36 = sor.u32 %s34, %s35
      %p37 = scmp.eq.s32.totalorder %s36, 0
      %s39 = sadd.s32 %s38, 1
      %s40 = scalar_select %p37, %s38, %s39
      %p43 = pneg %p37
      %p44 = scmp.eq.s32.totalorder %s14, 1
      %p45 = por %p43, %p44
      %p46 = scmp.ne.s32.totalorder %s38, %s41
      %p47 = scmp.eq.s32.totalorder %s14, 0
      %p48 = por %p46, %p47
      %p49 = scmp.ne.s32.totalorder %s38, %s41
      %p50 = scmp.eq.s32.totalorder %s19, 1
      %p51 = por %p49, %p50
      %p52 = scmp.ne.s32.totalorder %s41, %s42
      %p53 = scmp.eq.s32.totalorder %s19, 0
      %p54 = por %p52, %p53
      %p55 = scmp.ne.s32.totalorder %s41, %s42
      %p56 = scmp.eq.s32.totalorder %s20, 1
      %p57 = por %p55, %p56
      %p59 = scmp.ne.s32.totalorder %s42, %s58
      %p60 = scmp.eq.s32.totalorder %s20, 0
      %p61 = por %p59, %p60
      %s63 = sadd.s32 %s62, 1
      %p66 = scmp.eq.s32.totalorder %s14, 1
      %p67 = scmp.ne.s32.totalorder %s62, %s64
      %p68 = scmp.eq.s32.totalorder %s14, 0
      %p69 = por %p67, %p68
      %p70 = scmp.ne.s32.totalorder %s62, %s64
      %p71 = scmp.eq.s32.totalorder %s19, 1
      %p72 = por %p70, %p71
      %p73 = scmp.ne.s32.totalorder %s64, %s65
      %p74 = scmp.eq.s32.totalorder %s19, 0
      %p75 = por %p73, %p74
      %p76 = scmp.ne.s32.totalorder %s64, %s65
      %p77 = scmp.eq.s32.totalorder %s20, 1
      %p78 = por %p76, %p77
      %p80 = scmp.ne.s32.totalorder %s65, %s79
      %p81 = scmp.eq.s32.totalorder %s20, 0
      %p82 = por %p80, %p81
      %s84 = sadd.s32 %s83, 1
      %p87 = scmp.eq.s32.totalorder %s14, 1
      %p88 = scmp.ne.s32.totalorder %s83, %s85
      %p89 = scmp.eq.s32.totalorder %s14, 0
      %p90 = por %p88, %p89
      %p91 = scmp.ne.s32.totalorder %s83, %s85
      %p92 = scmp.eq.s32.totalorder %s19, 1
      %p93 = por %p91, %p92
      %p94 = scmp.ne.s32.totalorder %s85, %s86
      %p95 = scmp.eq.s32.totalorder %s19, 0
      %p96 = por %p94, %p95
      %p97 = scmp.ne.s32.totalorder %s85, %s86
      %p98 = scmp.eq.s32.totalorder %s20, 1
      %p99 = por %p97, %p98
      %p101 = scmp.ne.s32.totalorder %s86, %s100
      %p102 = scmp.eq.s32.totalorder %s20, 0
      %p103 = por %p101, %p102
      %s105 = sadd.s32 %s104, 1
      %p108 = scmp.eq.s32.totalorder %s14, 1
      %p109 = scmp.ne.s32.totalorder %s104, %s106
      %p110 = scmp.eq.s32.totalorder %s14, 0
      %p111 = por %p109, %p110
      %p112 = scmp.ne.s32.totalorder %s104, %s106
      %p113 = scmp.eq.s32.totalorder %s19, 1
      %p114 = por %p112, %p113
      %p115 = scmp.ne.s32.totalorder %s106, %s107
      %p116 = scmp.eq.s32.totalorder %s19, 0
      %p117 = por %p115, %p116
      %p118 = scmp.ne.s32.totalorder %s106, %s107
      %p119 = scmp.eq.s32.totalorder %s20, 1
      %p120 = por %p118, %p119
      %p122 = scmp.ne.s32.totalorder %s107, %s121
      %p123 = scmp.eq.s32.totalorder %s20, 0
      %p124 = por %p122, %p123
      %s126 = sadd.s32 %s125, 1
      %p129 = scmp.eq.s32.totalorder %s14, 1
      %p130 = scmp.ne.s32.totalorder %s125, %s127
      %p131 = scmp.eq.s32.totalorder %s14, 0
      %p132 = por %p130, %p131
      %p133 = scmp.ne.s32.totalorder %s125, %s127
      %p134 = scmp.eq.s32.totalorder %s19, 1
      %p135 = por %p133, %p134
      %p136 = scmp.ne.s32.totalorder %s127, %s128
      %p137 = scmp.eq.s32.totalorder %s19, 0
      %p138 = por %p136, %p137
      %p139 = scmp.ne.s32.totalorder %s127, %s128
      %p140 = scmp.eq.s32.totalorder %s20, 1
      %p141 = por %p139, %p140
      %p143 = scmp.ne.s32.totalorder %s128, %s142
      %p144 = scmp.eq.s32.totalorder %s20, 0
      %p145 = por %p143, %p144
      %s147 = sadd.s32 %s146, 1
      %p150 = scmp.eq.s32.totalorder %s14, 1
      %p151 = scmp.ne.s32.totalorder %s146, %s148
      %p152 = scmp.eq.s32.totalorder %s14, 0
      %p153 = por %p151, %p152
      %p154 = scmp.ne.s32.totalorder %s146, %s148
      %p155 = scmp.eq.s32.totalorder %s19, 1
      %p156 = por %p154, %p155
      %p157 = scmp.ne.s32.totalorder %s148, %s149
      %p158 = scmp.eq.s32.totalorder %s19, 0
      %p159 = por %p157, %p158
      %p160 = scmp.ne.s32.totalorder %s148, %s149
      %p161 = scmp.eq.s32.totalorder %s20, 1
      %p162 = por %p160, %p161
      %p164 = scmp.ne.s32.totalorder %s149, %s163
      %p165 = scmp.eq.s32.totalorder %s20, 0
      %p166 = por %p164, %p165
      %s167 = ssub.s32 %s21, %s33
      %p168 = scmp.eq.s32.totalorder %s167, 0
      %s170 = sadd.s32 %s169, 1
      %s171 = scalar_select %p168, %s169, %s170
      %p174 = pneg %p168
      %p175 = scmp.eq.s32.totalorder %s14, 1
      %p176 = por %p174, %p175
      %p177 = scmp.ne.s32.totalorder %s169, %s172
      %p178 = scmp.eq.s32.totalorder %s14, 0
      %p179 = por %p177, %p178
      %p180 = scmp.ne.s32.totalorder %s169, %s172
      %p181 = scmp.eq.s32.totalorder %s19, 1
      %p182 = por %p180, %p181
      %p183 = scmp.ne.s32.totalorder %s172, %s173
      %p184 = scmp.eq.s32.totalorder %s19, 0
      %p185 = por %p183, %p184
      %p186 = scmp.ne.s32.totalorder %s172, %s173
      %p187 = scmp.eq.s32.totalorder %s20, 1
      %p188 = por %p186, %p187
      %p190 = scmp.ne.s32.totalorder %s173, %s189
      %p191 = scmp.eq.s32.totalorder %s20, 0
      %p192 = por %p190, %p191
      %p193 = scmp.le.s32.totalorder 1, %s14
      %p194 = scmp.lt.s32.totalorder %s14, 3
      %p195 = pnand %p193, %p194
      %p196 = pneg %p195
      // Predicated region
      $region9: #{tpu_custom_call.1} parent=5 // pred_check
        _
      $region10: #{tpu_custom_call.1} parent=5 // pred_check_branch
        %198 = sbr.rel (%p195) target = $region12
      $region11: #{tpu_custom_call.1} parent=5 // pred_region
        %s199 = ssub.s32 %s14, 1
        // Predicated region
        $region13: #{tpu_custom_call.1} parent=11 // pred_check
          %p200 = pneg %p75
        $region14: #{tpu_custom_call.1} parent=11 // pred_check_branch
          %202 = sbr.rel (%p200) target = $region16
        $region15: #{tpu_custom_call.1} parent=11 // pred_region
          _
        $region16: #{tpu_custom_call.1} parent=11 // pred_fallthru
          _
        // Predicated region
        $region17: #{tpu_custom_call.1} parent=11 // pred_check
          %p203 = pneg %p96
        $region18: #{tpu_custom_call.1} parent=11 // pred_check_branch
          %205 = sbr.rel (%p203) target = $region20
        $region19: #{tpu_custom_call.1} parent=11 // pred_region
          %s207 = ssub.s32 4096, 4096
          %208 = vsyncadd [#allocation5], %s207
          %s209 = sshll.u32 [#allocation4], 4
          %s210 = int_to_ptr.vmem [resolvable:$true] %s209
          %215 = dma.hbm_to_vmem [thread:$0]  %s2, 4096, %s210, [#allocation5], 256, 256, 16
        $region20: #{tpu_custom_call.1} parent=11 // pred_fallthru
          _
        // Predicated region
        $region21: #{tpu_custom_call.1} parent=11 // pred_check
          %p216 = pneg %p117
        $region22: #{tpu_custom_call.1} parent=11 // pred_check_branch
          %218 = sbr.rel (%p216) target = $region24
        $region23: #{tpu_custom_call.1} parent=11 // pred_region
          _
        $region24: #{tpu_custom_call.1} parent=11 // pred_fallthru
          _
        // Predicated region
        $region25: #{tpu_custom_call.1} parent=11 // pred_check
          %p219 = pneg %p138
        $region26: #{tpu_custom_call.1} parent=11 // pred_check_branch
          %221 = sbr.rel (%p219) target = $region28
        $region27: #{tpu_custom_call.1} parent=11 // pred_region
          _
        $region28: #{tpu_custom_call.1} parent=11 // pred_fallthru
          _
        // Predicated region
        $region29: #{tpu_custom_call.1} parent=11 // pred_check
          %p222 = pneg %p159
        $region30: #{tpu_custom_call.1} parent=11 // pred_check_branch
          %224 = sbr.rel (%p222) target = $region32
        $region31: #{tpu_custom_call.1} parent=11 // pred_region
          _
        $region32: #{tpu_custom_call.1} parent=11 // pred_fallthru
          _
      $region12: #{tpu_custom_call.1} parent=5 // pred_fallthru
        _
      %p225 = scmp.lt.s32.totalorder %s14, 2
      // Predicated region
      $region33: #{tpu_custom_call.1} parent=5 // pred_check
        %p226 = pneg %p225
      $region34: #{tpu_custom_call.1} parent=5 // pred_check_branch
        %228 = sbr.rel (%p226) target = $region36
      $region35: #{tpu_custom_call.1} parent=5 // pred_region
        // Predicated region
        $region37: #{tpu_custom_call.1} parent=35 // pred_check
          %p229 = pneg %p48
        $region38: #{tpu_custom_call.1} parent=35 // pred_check_branch
          %231 = sbr.rel (%p229) target = $region40
        $region39: #{tpu_custom_call.1} parent=35 // pred_region
          %s232 = smul.u32 8, %s22
          %p233 = scmp.lt.s32.totalorder %s232, 15
          %s234 = scalar_select %p233, %s232, 15
          %p235 = scmp.lt.s32.totalorder %s21, 0
          %s236 = scalar_select %p235, %s21, 0
          %s237 = sadd.s32 %s236, %s234
          %s238 = smul.addr %s237, 8
          %s239 = scalar_lea.vmem %s0, %s238
          %s240 = smul.u32 8, %s22
        $region40: #{tpu_custom_call.1} parent=35 // pred_fallthru
          _
      $region36: #{tpu_custom_call.1} parent=5 // pred_fallthru
        _
      %p241 = scmp.le.s32.totalorder 1, %s14
      %p242 = scmp.lt.s32.totalorder %s14, 3
      %p243 = pnand %p241, %p242
      %p244 = pneg %p243
      // Predicated region
      $region41: #{tpu_custom_call.1} parent=5 // pred_check
        _
      $region42: #{tpu_custom_call.1} parent=5 // pred_check_branch
        %246 = sbr.rel (%p243) target = $region44
      $region43: #{tpu_custom_call.1} parent=5 // pred_region
        %s247 = ssub.s32 %s14, 1
        // Predicated region
        $region45: #{tpu_custom_call.1} parent=43 // pred_check
          %p248 = pneg %p96
        $region46: #{tpu_custom_call.1} parent=43 // pred_check_branch
          %250 = sbr.rel (%p248) target = $region48
        $region47: #{tpu_custom_call.1} parent=43 // pred_region
          %251 = dma.done [#allocation5], 4096
        $region48: #{tpu_custom_call.1} parent=43 // pred_fallthru
          _
        %s252 = smul.u32 8, %s24
        %p253 = scmp.lt.s32.totalorder %s252, 15
        %s254 = scalar_select %p253, %s252, 15
        %p255 = scmp.lt.s32.totalorder %s23, 0
        %s256 = scalar_select %p255, %s23, 0
        %s257 = sadd.s32 %s256, %s254
        %s258 = smul.addr %s257, 8
        %s259 = scalar_lea.vmem %s0, %s258
        %p260 = pneg %p54
        %p261 = pneg %p51
        %p262 = pneg %p75
        %p263 = pneg %p72
        %p264 = pneg %p96
        %p265 = pneg %p93
        %p266 = pneg %p117
        %p267 = pneg %p114
        %p268 = pneg %p138
        %p269 = pneg %p135
        %p270 = pneg %p159
        %p271 = pneg %p156
        %p272 = pneg %p185
        %p273 = pneg %p182
        %s274 = smul.u32 8, %s24
        %p275 = scmp.lt.s32.totalorder %s274, 15
        %s276 = scalar_select %p275, %s274, 15
        %p277 = scmp.lt.s32.totalorder %s23, 0
        %s278 = scalar_select %p277, %s23, 0
        %s279 = sadd.s32 %s278, %s276
        %s280 = smul.addr %s279, 8
        %s281 = scalar_lea.vmem %s0, %s280
        %s282 = smul.u32 8, %s24
        %p284 = scmp.eq.s32.totalorder %s24, 0
        // Predicated region
        $region49: #{tpu_custom_call.1} parent=43 // pred_check
          %p285 = pneg %p284
        $region50: #{tpu_custom_call.1} parent=43 // pred_check_branch
          %287 = sbr.rel (%p285) target = $region52
        $region51: #{tpu_custom_call.1} parent=43 // pred_region
          %288 = vst [vmem:[#allocation2] sm:$0xff] 0.0
          %289 = vst [vmem:[#allocation3] sm:$0xff] 0.0
        $region52: #{tpu_custom_call.1} parent=43 // pred_fallthru
          _
        %v290 = vld [vmem:[#allocation4] sm:$0xff]
        %v291 = vld [vmem:[#allocation4 + $0x8] sm:$0xff]
        %v292 = vld [vmem:[#allocation4 + $0x10] sm:$0xff]
        %v293 = vld [vmem:[#allocation4 + $0x18] sm:$0xff]
        %v294 = vld [vmem:[#allocation4 + $0x20] sm:$0xff]
        %v295 = vld [vmem:[#allocation4 + $0x28] sm:$0xff]
        %v296 = vld [vmem:[#allocation4 + $0x30] sm:$0xff]
        %v297 = vld [vmem:[#allocation4 + $0x38] sm:$0xff]
        %v298 = vld [vmem:[#allocation4 + $0x40] sm:$0xff]
        %v299 = vld [vmem:[#allocation4 + $0x48] sm:$0xff]
        %v300 = vld [vmem:[#allocation4 + $0x50] sm:$0xff]
        %v301 = vld [vmem:[#allocation4 + $0x58] sm:$0xff]
        %v302 = vld [vmem:[#allocation4 + $0x60] sm:$0xff]
        %v303 = vld [vmem:[#allocation4 + $0x68] sm:$0xff]
        %v304 = vld [vmem:[#allocation4 + $0x70] sm:$0xff]
        %v305 = vld [vmem:[#allocation4 + $0x78] sm:$0xff]
        %v306 = vld [vmem:[#allocation4 + $0x80] sm:$0xff]
        %v307 = vld [vmem:[#allocation4 + $0x88] sm:$0xff]
        %v308 = vld [vmem:[#allocation4 + $0x90] sm:$0xff]
        %v309 = vld [vmem:[#allocation4 + $0x98] sm:$0xff]
        %v310 = vld [vmem:[#allocation4 + $0xa0] sm:$0xff]
        %v311 = vld [vmem:[#allocation4 + $0xa8] sm:$0xff]
        %v312 = vld [vmem:[#allocation4 + $0xb0] sm:$0xff]
        %v313 = vld [vmem:[#allocation4 + $0xb8] sm:$0xff]
        %v314 = vld [vmem:[#allocation4 + $0xc0] sm:$0xff]
        %v315 = vld [vmem:[#allocation4 + $0xc8] sm:$0xff]
        %v316 = vld [vmem:[#allocation4 + $0xd0] sm:$0xff]
        %v317 = vld [vmem:[#allocation4 + $0xd8] sm:$0xff]
        %v318 = vld [vmem:[#allocation4 + $0xe0] sm:$0xff]
        %v319 = vld [vmem:[#allocation4 + $0xe8] sm:$0xff]
        %v320 = vld [vmem:[#allocation4 + $0xf0] sm:$0xff]
        %v321 = vld [vmem:[#allocation4 + $0xf8] sm:$0xff]
        %v322 = vld [vmem:[%s3] sm:$0xf]
        %v323 = vld [vmem:[%s281] sm:$0xff]
        %v324 = vld [vmem:[%s281 + $0x8] sm:$0xff]
        %v325 = vld [vmem:[%s281 + $0x10] sm:$0xff]
        %v326 = vld [vmem:[%s281 + $0x18] sm:$0xff]
        %v327 = vld [vmem:[%s281 + $0x20] sm:$0xff]
        %v328 = vld [vmem:[%s281 + $0x28] sm:$0xff]
        %v329 = vld [vmem:[%s281 + $0x30] sm:$0xff]
        %v330 = vld [vmem:[%s281 + $0x38] sm:$0xff]
        %v331 = vpack.c.bf16 %v324, %v323
        %v332 = vpack.c.bf16 %v326, %v325
        %v333 = vpack.c.bf16 %v328, %v327
        %v334 = vpack.c.bf16 %v330, %v329
        %v335 = vld [vmem:[%s1] sm:$0xff]
        %v336 = vld [vmem:[%s1 + $0x8] sm:$0xff]
        %v339 = vunpack.c.l.b16 %v335
        %v340 = vunpack.c.h.b16 %v335
        %v341 = vunpack.c.l.b16 %v336
        %v342 = vunpack.c.h.b16 %v336
        %v343 = vpack.c.b16 %v339, %v339
        %v344 = vpack.c.b16 %v340, %v340
        %v345 = vpack.c.b16 %v341, %v341
        %v346 = vpack.c.b16 %v342, %v342
        %vm347 = vcmask 64512
        %v349 = vsel %vm347, %v331, 0
        %v352 = vsel %vm347, %v332, 0
        %v355 = vsel %vm347, %v333, 0
        %v358 = vsel %vm347, %v334, 0
        %vm360 = vcmask 1043456
        %v362 = vsel %vm360, %v343, 0
        %v365 = vsel %vm360, %v344, 0
        %v368 = vsel %vm360, %v345, 0
        %v371 = vsel %vm360, %v346, 0
        %373 = vmatprep.subr.bf16.mxu0 0
        %374 = vmatpush1.bf16.msra.mxu0 0
        %375 = vmatprep.subr.bf16.mxu0 0
        %376 = vmatpush1.bf16.msra.mxu0 0
        %377 = vmatprep.subr.bf16.mxu0 0
        %378 = vmatpush1.bf16.msra.mxu0 0
        %379 = vmatprep.subr.bf16.mxu0 0
        %380 = vmatpush1.bf16.msra.mxu0 0
        %381 = vmatprep.subr.bf16.mxu0 0
        %382 = vmatpush1.bf16.msra.mxu0 0
        %383 = vmatprep.subr.bf16.mxu0 0
        %384 = vmatpush1.bf16.msra.mxu0 0
        %385 = vmatprep.subr.bf16.mxu0 0
        %386 = vmatpush1.bf16.msra.mxu0 0
        %387 = vmatprep.subr.bf16.mxu0 %v365
        %388 = vmatpush1.bf16.msra.mxu0 %v362
        %389 = vmatprep.subr.bf16.mxu0 0
        %390 = vmatpush2.bf16.msra.mxu0 0
        %391 = vmatprep.subr.bf16.mxu0 0
        %392 = vmatpush2.bf16.msra.mxu0 0
        %393 = vmatprep.subr.bf16.mxu0 0
        %394 = vmatpush2.bf16.msra.mxu0 0
        %395 = vmatprep.subr.bf16.mxu0 0
        %396 = vmatpush2.bf16.msra.mxu0 0
        %397 = vmatprep.subr.bf16.mxu0 0
        %398 = vmatpush2.bf16.msra.mxu0 0
        %399 = vmatprep.subr.bf16.mxu0 0
        %400 = vmatpush2.bf16.msra.mxu0 0
        %401 = vmatprep.subr.bf16.mxu0 0
        %402 = vmatpush2.bf16.msra.mxu0 0
        %403 = vmatprep.subr.bf16.mxu0 0
        %404 = vmatpush2.bf16.msra.mxu0 0
        %405 = vmatprep.mubr.bf16.mxu0 0
        %406 = vmatmul.mubr.bf16.gmra.mxu0 %v349
        %v407 = vpop.f32.mrf.mxu0
        %v408 = vadd.f32 0.0, %v407
        %v409 = vpop.f32.mrf.mxu0
        %v410 = vadd.f32 0.0, %v409
        %v411 = vpop.f32.mrf.mxu0
        %v412 = vadd.f32 0.0, %v411
        %v413 = vpop.f32.mrf.mxu0
        %v414 = vadd.f32 0.0, %v413
        %415 = vmatprep.mubr.bf16.mxu0 0
        %416 = vmatmul.mubr.bf16.gmra.mxu0 %v352
        %v417 = vpop.f32.mrf.mxu0
        %v418 = vadd.f32 0.0, %v417
        %v419 = vpop.f32.mrf.mxu0
        %v420 = vadd.f32 0.0, %v419
        %v421 = vpop.f32.mrf.mxu0
        %v422 = vadd.f32 0.0, %v421
        %v423 = vpop.f32.mrf.mxu0
        %v424 = vadd.f32 0.0, %v423
        %425 = vmatprep.mubr.bf16.mxu0 0
        %426 = vmatmul.mubr.bf16.gmra.mxu0 %v355
        %v427 = vpop.f32.mrf.mxu0
        %v428 = vadd.f32 0.0, %v427
        %v429 = vpop.f32.mrf.mxu0
        %v430 = vadd.f32 0.0, %v429
        %v431 = vpop.f32.mrf.mxu0
        %v432 = vadd.f32 0.0, %v431
        %v433 = vpop.f32.mrf.mxu0
        %v434 = vadd.f32 0.0, %v433
        %435 = vmatprep.mubr.bf16.mxu0 0
        %436 = vmatmul.mubr.bf16.gmra.mxu0 %v358
        %v437 = vpop.f32.mrf.mxu0
        %v438 = vadd.f32 0.0, %v437
        %v439 = vpop.f32.mrf.mxu0
        %v440 = vadd.f32 0.0, %v439
        %v441 = vpop.f32.mrf.mxu0
        %v442 = vadd.f32 0.0, %v441
        %v443 = vpop.f32.mrf.mxu0
        %v444 = vadd.f32 0.0, %v443
        %445 = vdwg.mxu0
        %446 = vmatprep.subr.bf16.mxu0 0
        %447 = vmatpush1.bf16.msra.mxu0 0
        %448 = vmatprep.subr.bf16.mxu0 0
        %449 = vmatpush1.bf16.msra.mxu0 0
        %450 = vmatprep.subr.bf16.mxu0 0
        %451 = vmatpush1.bf16.msra.mxu0 0
        %452 = vmatprep.subr.bf16.mxu0 0
        %453 = vmatpush1.bf16.msra.mxu0 0
        %454 = vmatprep.subr.bf16.mxu0 0
        %455 = vmatpush1.bf16.msra.mxu0 0
        %456 = vmatprep.subr.bf16.mxu0 0
        %457 = vmatpush1.bf16.msra.mxu0 0
        %458 = vmatprep.subr.bf16.mxu0 0
        %459 = vmatpush1.bf16.msra.mxu0 0
        %460 = vmatprep.subr.bf16.mxu0 %v371
        %461 = vmatpush1.bf16.msra.mxu0 %v368
        %462 = vmatprep.subr.bf16.mxu0 0
        %463 = vmatpush2.bf16.msra.mxu0 0
        %464 = vmatprep.subr.bf16.mxu0 0
        %465 = vmatpush2.bf16.msra.mxu0 0
        %466 = vmatprep.subr.bf16.mxu0 0
        %467 = vmatpush2.bf16.msra.mxu0 0
        %468 = vmatprep.subr.bf16.mxu0 0
        %469 = vmatpush2.bf16.msra.mxu0 0
        %470 = vmatprep.subr.bf16.mxu0 0
        %471 = vmatpush2.bf16.msra.mxu0 0
        %472 = vmatprep.subr.bf16.mxu0 0
        %473 = vmatpush2.bf16.msra.mxu0 0
        %474 = vmatprep.subr.bf16.mxu0 0
        %475 = vmatpush2.bf16.msra.mxu0 0
        %476 = vmatprep.subr.bf16.mxu0 0
        %477 = vmatpush2.bf16.msra.mxu0 0
        %478 = vmatprep.mubr.bf16.mxu0 0
        %479 = vmatmul.mubr.bf16.gmra.mxu0 %v349
        %v480 = vpop.f32.mrf.mxu0
        %v481 = vadd.f32 0.0, %v480
        %v482 = vpop.f32.mrf.mxu0
        %v483 = vadd.f32 0.0, %v482
        %v484 = vpop.f32.mrf.mxu0
        %v485 = vadd.f32 0.0, %v484
        %v486 = vpop.f32.mrf.mxu0
        %v487 = vadd.f32 0.0, %v486
        %488 = vmatprep.mubr.bf16.mxu0 0
        %489 = vmatmul.mubr.bf16.gmra.mxu0 %v352
        %v490 = vpop.f32.mrf.mxu0
        %v491 = vadd.f32 0.0, %v490
        %v492 = vpop.f32.mrf.mxu0
        %v493 = vadd.f32 0.0, %v492
        %v494 = vpop.f32.mrf.mxu0
        %v495 = vadd.f32 0.0, %v494
        %v496 = vpop.f32.mrf.mxu0
        %v497 = vadd.f32 0.0, %v496
        %498 = vmatprep.mubr.bf16.mxu0 0
        %499 = vmatmul.mubr.bf16.gmra.mxu0 %v355
        %v500 = vpop.f32.mrf.mxu0
        %v501 = vadd.f32 0.0, %v500
        %v502 = vpop.f32.mrf.mxu0
        %v503 = vadd.f32 0.0, %v502
        %v504 = vpop.f32.mrf.mxu0
        %v505 = vadd.f32 0.0, %v504
        %v506 = vpop.f32.mrf.mxu0
        %v507 = vadd.f32 0.0, %v506
        %508 = vmatprep.mubr.bf16.mxu0 0
        %509 = vmatmul.mubr.bf16.gmra.mxu0 %v358
        %v510 = vpop.f32.mrf.mxu0
        %v511 = vadd.f32 0.0, %v510
        %v512 = vpop.f32.mrf.mxu0
        %v513 = vadd.f32 0.0, %v512
        %v514 = vpop.f32.mrf.mxu0
        %v515 = vadd.f32 0.0, %v514
        %v516 = vpop.f32.mrf.mxu0
        %v517 = vadd.f32 0.0, %v516
        %518 = vdwg.mxu0
        %v519 = vld [vmem:[#allocation2] sm:$0xff]
        %v520 = vld [vmem:[#allocation3] sm:$0xff]
        %v521 = vpack.c.bf16 %v519, %v519
        %v554 = vunpack.c.l.b16 %v290
        %v555 = vunpack.c.h.b16 %v290
        %v556 = vunpack.c.l.b16 %v291
        %v557 = vunpack.c.h.b16 %v291
        %v558 = vunpack.c.l.b16 %v292
        %v559 = vunpack.c.h.b16 %v292
        %v560 = vunpack.c.l.b16 %v293
        %v561 = vunpack.c.h.b16 %v293
        %v562 = vunpack.c.l.b16 %v294
        %v563 = vunpack.c.h.b16 %v294
        %v564 = vunpack.c.l.b16 %v295
        %v565 = vunpack.c.h.b16 %v295
        %v566 = vunpack.c.l.b16 %v296
        %v567 = vunpack.c.h.b16 %v296
        %v568 = vunpack.c.l.b16 %v297
        %v569 = vunpack.c.h.b16 %v297
        %v570 = vunpack.c.l.b16 %v298
        %v571 = vunpack.c.h.b16 %v298
        %v572 = vunpack.c.l.b16 %v299
        %v573 = vunpack.c.h.b16 %v299
        %v574 = vunpack.c.l.b16 %v300
        %v575 = vunpack.c.h.b16 %v300
        %v576 = vunpack.c.l.b16 %v301
        %v577 = vunpack.c.h.b16 %v301
        %v578 = vunpack.c.l.b16 %v302
        %v579 = vunpack.c.h.b16 %v302
        %v580 = vunpack.c.l.b16 %v303
        %v581 = vunpack.c.h.b16 %v303
        %v582 = vunpack.c.l.b16 %v304
        %v583 = vunpack.c.h.b16 %v304
        %v584 = vunpack.c.l.b16 %v305
        %v585 = vunpack.c.h.b16 %v305
        %v586 = vunpack.c.l.b16 %v306
        %v587 = vunpack.c.h.b16 %v306
        %v588 = vunpack.c.l.b16 %v307
        %v589 = vunpack.c.h.b16 %v307
        %v590 = vunpack.c.l.b16 %v308
        %v591 = vunpack.c.h.b16 %v308
        %v592 = vunpack.c.l.b16 %v309
        %v593 = vunpack.c.h.b16 %v309
        %v594 = vunpack.c.l.b16 %v310
        %v595 = vunpack.c.h.b16 %v310
        %v596 = vunpack.c.l.b16 %v311
        %v597 = vunpack.c.h.b16 %v311
        %v598 = vunpack.c.l.b16 %v312
        %v599 = vunpack.c.h.b16 %v312
        %v600 = vunpack.c.l.b16 %v313
        %v601 = vunpack.c.h.b16 %v313
        %v602 = vunpack.c.l.b16 %v314
        %v603 = vunpack.c.h.b16 %v314
        %v604 = vunpack.c.l.b16 %v315
        %v605 = vunpack.c.h.b16 %v315
        %v606 = vunpack.c.l.b16 %v316
        %v607 = vunpack.c.h.b16 %v316
        %v608 = vunpack.c.l.b16 %v317
        %v609 = vunpack.c.h.b16 %v317
        %v610 = vunpack.c.l.b16 %v318
        %v611 = vunpack.c.h.b16 %v318
        %v612 = vunpack.c.l.b16 %v319
        %v613 = vunpack.c.h.b16 %v319
        %v614 = vunpack.c.l.b16 %v320
        %v615 = vunpack.c.h.b16 %v320
        %v616 = vunpack.c.l.b16 %v321
        %v617 = vunpack.c.h.b16 %v321
        %v618 = vpack.c.b16 %v558, %v554
        %v619 = vpack.c.b16 %v559, %v555
        %v620 = vpack.c.b16 %v560, %v556
        %v621 = vpack.c.b16 %v561, %v557
        %v622 = vpack.c.b16 %v566, %v562
        %v623 = vpack.c.b16 %v567, %v563
        %v624 = vpack.c.b16 %v568, %v564
        %v625 = vpack.c.b16 %v569, %v565
        %v626 = vpack.c.b16 %v574, %v570
        %v627 = vpack.c.b16 %v575, %v571
        %v628 = vpack.c.b16 %v576, %v572
        %v629 = vpack.c.b16 %v577, %v573
        %v630 = vpack.c.b16 %v582, %v578
        %v631 = vpack.c.b16 %v583, %v579
        %v632 = vpack.c.b16 %v584, %v580
        %v633 = vpack.c.b16 %v585, %v581
        %v634 = vpack.c.b16 %v590, %v586
        %v635 = vpack.c.b16 %v591, %v587
        %v636 = vpack.c.b16 %v592, %v588
        %v637 = vpack.c.b16 %v593, %v589
        %v638 = vpack.c.b16 %v598, %v594
        %v639 = vpack.c.b16 %v599, %v595
        %v640 = vpack.c.b16 %v600, %v596
        %v641 = vpack.c.b16 %v601, %v597
        %v642 = vpack.c.b16 %v606, %v602
        %v643 = vpack.c.b16 %v607, %v603
        %v644 = vpack.c.b16 %v608, %v604
        %v645 = vpack.c.b16 %v609, %v605
        %v646 = vpack.c.b16 %v614, %v610
        %v647 = vpack.c.b16 %v615, %v611
        %v648 = vpack.c.b16 %v616, %v612
        %v649 = vpack.c.b16 %v617, %v613
        %682 = vmatprep.subr.bf16.mxu0 %v647
        %683 = vmatpush1.bf16.msra.mxu0 %v646
        %684 = vmatprep.subr.bf16.mxu0 %v643
        %685 = vmatpush1.bf16.msra.mxu0 %v642
        %686 = vmatprep.subr.bf16.mxu0 %v639
        %687 = vmatpush1.bf16.msra.mxu0 %v638
        %688 = vmatprep.subr.bf16.mxu0 %v635
        %689 = vmatpush1.bf16.msra.mxu0 %v634
        %690 = vmatprep.subr.bf16.mxu0 %v631
        %691 = vmatpush1.bf16.msra.mxu0 %v630
        %692 = vmatprep.subr.bf16.mxu0 %v627
        %693 = vmatpush1.bf16.msra.mxu0 %v626
        %694 = vmatprep.subr.bf16.mxu0 %v623
        %695 = vmatpush1.bf16.msra.mxu0 %v622
        %696 = vmatprep.subr.bf16.mxu0 %v619
        %697 = vmatpush1.bf16.msra.mxu0 %v618
        %698 = vmatprep.subr.bf16.mxu0 0
        %699 = vmatpush2.bf16.msra.mxu0 0
        %700 = vmatprep.subr.bf16.mxu0 0
        %701 = vmatpush2.bf16.msra.mxu0 0
        %702 = vmatprep.subr.bf16.mxu0 0
        %703 = vmatpush2.bf16.msra.mxu0 0
        %704 = vmatprep.subr.bf16.mxu0 0
        %705 = vmatpush2.bf16.msra.mxu0 0
        %706 = vmatprep.subr.bf16.mxu0 0
        %707 = vmatpush2.bf16.msra.mxu0 0
        %708 = vmatprep.subr.bf16.mxu0 0
        %709 = vmatpush2.bf16.msra.mxu0 0
        %710 = vmatprep.subr.bf16.mxu0 0
        %711 = vmatpush2.bf16.msra.mxu0 0
        %712 = vmatprep.subr.bf16.mxu0 0
        %713 = vmatpush2.bf16.msra.mxu0 0
        %714 = vmatprep.mubr.bf16.mxu0 0
        %715 = vmatmul.mubr.bf16.gmra.mxu0 %v521
        %v716 = vpop.f32.mrf.mxu0
        %v717 = vadd.f32 0.0, %v716
        %v718 = vpop.f32.mrf.mxu0
        %v719 = vadd.f32 0.0, %v718
        %v720 = vpop.f32.mrf.mxu0
        %v721 = vpop.f32.mrf.mxu0
        %722 = vdwg.mxu0
        %723 = vmatprep.subr.bf16.mxu0 %v649
        %724 = vmatpush1.bf16.msra.mxu0 %v648
        %725 = vmatprep.subr.bf16.mxu0 %v645
        %726 = vmatpush1.bf16.msra.mxu0 %v644
        %727 = vmatprep.subr.bf16.mxu0 %v641
        %728 = vmatpush1.bf16.msra.mxu0 %v640
        %729 = vmatprep.subr.bf16.mxu0 %v637
        %730 = vmatpush1.bf16.msra.mxu0 %v636
        %731 = vmatprep.subr.bf16.mxu0 %v633
        %732 = vmatpush1.bf16.msra.mxu0 %v632
        %733 = vmatprep.subr.bf16.mxu0 %v629
        %734 = vmatpush1.bf16.msra.mxu0 %v628
        %735 = vmatprep.subr.bf16.mxu0 %v625
        %736 = vmatpush1.bf16.msra.mxu0 %v624
        %737 = vmatprep.subr.bf16.mxu0 %v621
        %738 = vmatpush1.bf16.msra.mxu0 %v620
        %739 = vmatprep.subr.bf16.mxu0 0
        %740 = vmatpush2.bf16.msra.mxu0 0
        %741 = vmatprep.subr.bf16.mxu0 0
        %742 = vmatpush2.bf16.msra.mxu0 0
        %743 = vmatprep.subr.bf16.mxu0 0
        %744 = vmatpush2.bf16.msra.mxu0 0
        %745 = vmatprep.subr.bf16.mxu0 0
        %746 = vmatpush2.bf16.msra.mxu0 0
        %747 = vmatprep.subr.bf16.mxu0 0
        %748 = vmatpush2.bf16.msra.mxu0 0
        %749 = vmatprep.subr.bf16.mxu0 0
        %750 = vmatpush2.bf16.msra.mxu0 0
        %751 = vmatprep.subr.bf16.mxu0 0
        %752 = vmatpush2.bf16.msra.mxu0 0
        %753 = vmatprep.subr.bf16.mxu0 0
        %754 = vmatpush2.bf16.msra.mxu0 0
        %755 = vmatprep.mubr.bf16.mxu0 0
        %756 = vmatmul.mubr.bf16.gmra.mxu0 %v521
        %v757 = vpop.f32.mrf.mxu0
        %v758 = vadd.f32 0.0, %v757
        %v759 = vpop.f32.mrf.mxu0
        %v760 = vadd.f32 0.0, %v759
        %v761 = vpop.f32.mrf.mxu0
        %v762 = vpop.f32.mrf.mxu0
        %763 = vdwg.mxu0
        %v764 = vadd.f32 %v408, %v717
        %v765 = vadd.f32 %v410, %v719
        %v766 = vadd.f32 %v481, %v758
        %v767 = vadd.f32 %v483, %v760
        %v769 = vlaneseq
        %v770 = vshrl.u32 %v769, 7
        %v771 = vsub.s32 0, %v770
        %v772 = vrot.slane %v322, %v771
        %v773 = vlaneseq
        %v774 = vshrl.u32 %v773, 7
        %v775 = vsub.s32 1, %v774
        %v776 = vrot.slane %v322, %v775
        %v777 = vlaneseq
        %v778 = vshrl.u32 %v777, 7
        %v779 = vsub.s32 2, %v778
        %v780 = vrot.slane %v322, %v779
        %v781 = vlaneseq
        %v782 = vshrl.u32 %v781, 7
        %v783 = vsub.s32 3, %v782
        %v784 = vrot.slane %v322, %v783
        %v789 = vadd.f32 %v764, %v772
        %v790 = vadd.f32 %v765, %v776
        %v791 = vadd.f32 %v766, %v780
        %v792 = vadd.f32 %v767, %v784
        %v793 = vmul.f32 %v789, 0.5
        %v794 = vtanh.pop %v793
        %v795 = vmul.f32 %v794, 0.5
        %v796 = vadd.f32 %v795, 0.5
        %v797 = vmul.f32 %v790, 0.5
        %v798 = vtanh.pop %v797
        %v799 = vmul.f32 %v798, 0.5
        %v800 = vadd.f32 %v799, 0.5
        %v801 = vtanh.pop %v791
        %v802 = vmul.f32 %v792, 0.5
        %v803 = vtanh.pop %v802
        %v804 = vmul.f32 %v803, 0.5
        %v805 = vadd.f32 %v804, 0.5
        %v806 = vmul.f32 %v800, %v520
        %v807 = vmul.f32 %v796, %v801
        %v808 = vadd.f32 %v806, %v807
        %v809 = vtanh.pop %v808
        %v810 = vmul.f32 %v805, %v809
        %v811 = vpack.c.bf16 %v810, %v810
        %812 = vmatprep.subr.bf16.mxu0 %v647
        %813 = vmatpush1.bf16.msra.mxu0 %v646
        %814 = vmatprep.subr.bf16.mxu0 %v643
        %815 = vmatpush1.bf16.msra.mxu0 %v642
        %816 = vmatprep.subr.bf16.mxu0 %v639
        %817 = vmatpush1.bf16.msra.mxu0 %v638
        %818 = vmatprep.subr.bf16.mxu0 %v635
        %819 = vmatpush1.bf16.msra.mxu0 %v634
        %820 = vmatprep.subr.bf16.mxu0 %v631
        %821 = vmatpush1.bf16.msra.mxu0 %v630
        %822 = vmatprep.subr.bf16.mxu0 %v627
        %823 = vmatpush1.bf16.msra.mxu0 %v626
        %824 = vmatprep.subr.bf16.mxu0 %v623
        %825 = vmatpush1.bf16.msra.mxu0 %v622
        %826 = vmatprep.subr.bf16.mxu0 %v619
        %827 = vmatpush1.bf16.msra.mxu0 %v618
        %828 = vmatprep.subr.bf16.mxu0 0
        %829 = vmatpush2.bf16.msra.mxu0 0
        %830 = vmatprep.subr.bf16.mxu0 0
        %831 = vmatpush2.bf16.msra.mxu0 0
        %832 = vmatprep.subr.bf16.mxu0 0
        %833 = vmatpush2.bf16.msra.mxu0 0
        %834 = vmatprep.subr.bf16.mxu0 0
        %835 = vmatpush2.bf16.msra.mxu0 0
        %836 = vmatprep.subr.bf16.mxu0 0
        %837 = vmatpush2.bf16.msra.mxu0 0
        %838 = vmatprep.subr.bf16.mxu0 0
        %839 = vmatpush2.bf16.msra.mxu0 0
        %840 = vmatprep.subr.bf16.mxu0 0
        %841 = vmatpush2.bf16.msra.mxu0 0
        %842 = vmatprep.subr.bf16.mxu0 0
        %843 = vmatpush2.bf16.msra.mxu0 0
        %844 = vmatprep.mubr.bf16.mxu0 0
        %845 = vmatmul.mubr.bf16.gmra.mxu0 %v811
        %v846 = vpop.f32.mrf.mxu0
        %v847 = vadd.f32 0.0, %v846
        %v848 = vpop.f32.mrf.mxu0
        %v849 = vadd.f32 0.0, %v848
        %v850 = vpop.f32.mrf.mxu0
        %v851 = vpop.f32.mrf.mxu0
        %852 = vdwg.mxu0
        %853 = vmatprep.subr.bf16.mxu0 %v649
        %854 = vmatpush1.bf16.msra.mxu0 %v648
        %855 = vmatprep.subr.bf16.mxu0 %v645
        %856 = vmatpush1.bf16.msra.mxu0 %v644
        %857 = vmatprep.subr.bf16.mxu0 %v641
        %858 = vmatpush1.bf16.msra.mxu0 %v640
        %859 = vmatprep.subr.bf16.mxu0 %v637
        %860 = vmatpush1.bf16.msra.mxu0 %v636
        %861 = vmatprep.subr.bf16.mxu0 %v633
        %862 = vmatpush1.bf16.msra.mxu0 %v632
        %863 = vmatprep.subr.bf16.mxu0 %v629
        %864 = vmatpush1.bf16.msra.mxu0 %v628
        %865 = vmatprep.subr.bf16.mxu0 %v625
        %866 = vmatpush1.bf16.msra.mxu0 %v624
        %867 = vmatprep.subr.bf16.mxu0 %v621
        %868 = vmatpush1.bf16.msra.mxu0 %v620
        %869 = vmatprep.subr.bf16.mxu0 0
        %870 = vmatpush2.bf16.msra.mxu0 0
        %871 = vmatprep.subr.bf16.mxu0 0
        %872 = vmatpush2.bf16.msra.mxu0 0
        %873 = vmatprep.subr.bf16.mxu0 0
        %874 = vmatpush2.bf16.msra.mxu0 0
        %875 = vmatprep.subr.bf16.mxu0 0
        %876 = vmatpush2.bf16.msra.mxu0 0
        %877 = vmatprep.subr.bf16.mxu0 0
        %878 = vmatpush2.bf16.msra.mxu0 0
        %879 = vmatprep.subr.bf16.mxu0 0
        %880 = vmatpush2.bf16.msra.mxu0 0
        %881 = vmatprep.subr.bf16.mxu0 0
        %882 = vmatpush2.bf16.msra.mxu0 0
        %883 = vmatprep.subr.bf16.mxu0 0
        %884 = vmatpush2.bf16.msra.mxu0 0
        %885 = vmatprep.mubr.bf16.mxu0 0
        %886 = vmatmul.mubr.bf16.gmra.mxu0 %v811
        %v887 = vpop.f32.mrf.mxu0
        %v888 = vadd.f32 0.0, %v887
        %v889 = vpop.f32.mrf.mxu0
        %v890 = vadd.f32 0.0, %v889
        %v891 = vpop.f32.mrf.mxu0
        %v892 = vpop.f32.mrf.mxu0
        %893 = vdwg.mxu0
        %v894 = vadd.f32 %v412, %v847
        %v895 = vadd.f32 %v414, %v849
        %v896 = vadd.f32 %v485, %v888
        %v897 = vadd.f32 %v487, %v890
        %v898 = vadd.f32 %v894, %v772
        %v899 = vadd.f32 %v895, %v776
        %v900 = vadd.f32 %v896, %v780
        %v901 = vadd.f32 %v897, %v784
        %v902 = vmul.f32 %v898, 0.5
        %v903 = vtanh.pop %v902
        %v904 = vmul.f32 %v903, 0.5
        %v905 = vadd.f32 %v904, 0.5
        %v906 = vmul.f32 %v899, 0.5
        %v907 = vtanh.pop %v906
        %v908 = vmul.f32 %v907, 0.5
        %v909 = vadd.f32 %v908, 0.5
        %v910 = vtanh.pop %v900
        %v911 = vmul.f32 %v901, 0.5
        %v912 = vtanh.pop %v911
        %v913 = vmul.f32 %v912, 0.5
        %v914 = vadd.f32 %v913, 0.5
        %v915 = vmul.f32 %v909, %v808
        %v916 = vmul.f32 %v905, %v910
        %v917 = vadd.f32 %v915, %v916
        %v918 = vtanh.pop %v917
        %v919 = vmul.f32 %v914, %v918
        %v920 = vpack.c.bf16 %v919, %v919
        %921 = vmatprep.subr.bf16.mxu0 %v647
        %922 = vmatpush1.bf16.msra.mxu0 %v646
        %923 = vmatprep.subr.bf16.mxu0 %v643
        %924 = vmatpush1.bf16.msra.mxu0 %v642
        %925 = vmatprep.subr.bf16.mxu0 %v639
        %926 = vmatpush1.bf16.msra.mxu0 %v638
        %927 = vmatprep.subr.bf16.mxu0 %v635
        %928 = vmatpush1.bf16.msra.mxu0 %v634
        %929 = vmatprep.subr.bf16.mxu0 %v631
        %930 = vmatpush1.bf16.msra.mxu0 %v630
        %931 = vmatprep.subr.bf16.mxu0 %v627
        %932 = vmatpush1.bf16.msra.mxu0 %v626
        %933 = vmatprep.subr.bf16.mxu0 %v623
        %934 = vmatpush1.bf16.msra.mxu0 %v622
        %935 = vmatprep.subr.bf16.mxu0 %v619
        %936 = vmatpush1.bf16.msra.mxu0 %v618
        %937 = vmatprep.subr.bf16.mxu0 0
        %938 = vmatpush2.bf16.msra.mxu0 0
        %939 = vmatprep.subr.bf16.mxu0 0
        %940 = vmatpush2.bf16.msra.mxu0 0
        %941 = vmatprep.subr.bf16.mxu0 0
        %942 = vmatpush2.bf16.msra.mxu0 0
        %943 = vmatprep.subr.bf16.mxu0 0
        %944 = vmatpush2.bf16.msra.mxu0 0
        %945 = vmatprep.subr.bf16.mxu0 0
        %946 = vmatpush2.bf16.msra.mxu0 0
        %947 = vmatprep.subr.bf16.mxu0 0
        %948 = vmatpush2.bf16.msra.mxu0 0
        %949 = vmatprep.subr.bf16.mxu0 0
        %950 = vmatpush2.bf16.msra.mxu0 0
        %951 = vmatprep.subr.bf16.mxu0 0
        %952 = vmatpush2.bf16.msra.mxu0 0
        %953 = vmatprep.mubr.bf16.mxu0 0
        %954 = vmatmul.mubr.bf16.gmra.mxu0 %v920
        %v955 = vpop.f32.mrf.mxu0
        %v956 = vadd.f32 0.0, %v955
        %v957 = vpop.f32.mrf.mxu0
        %v958 = vadd.f32 0.0, %v957
        %v959 = vpop.f32.mrf.mxu0
        %v960 = vpop.f32.mrf.mxu0
        %961 = vdwg.mxu0
        %962 = vmatprep.subr.bf16.mxu0 %v649
        %963 = vmatpush1.bf16.msra.mxu0 %v648
        %964 = vmatprep.subr.bf16.mxu0 %v645
        %965 = vmatpush1.bf16.msra.mxu0 %v644
        %966 = vmatprep.subr.bf16.mxu0 %v641
        %967 = vmatpush1.bf16.msra.mxu0 %v640
        %968 = vmatprep.subr.bf16.mxu0 %v637
        %969 = vmatpush1.bf16.msra.mxu0 %v636
        %970 = vmatprep.subr.bf16.mxu0 %v633
        %971 = vmatpush1.bf16.msra.mxu0 %v632
        %972 = vmatprep.subr.bf16.mxu0 %v629
        %973 = vmatpush1.bf16.msra.mxu0 %v628
        %974 = vmatprep.subr.bf16.mxu0 %v625
        %975 = vmatpush1.bf16.msra.mxu0 %v624
        %976 = vmatprep.subr.bf16.mxu0 %v621
        %977 = vmatpush1.bf16.msra.mxu0 %v620
        %978 = vmatprep.subr.bf16.mxu0 0
        %979 = vmatpush2.bf16.msra.mxu0 0
        %980 = vmatprep.subr.bf16.mxu0 0
        %981 = vmatpush2.bf16.msra.mxu0 0
        %982 = vmatprep.subr.bf16.mxu0 0
        %983 = vmatpush2.bf16.msra.mxu0 0
        %984 = vmatprep.subr.bf16.mxu0 0
        %985 = vmatpush2.bf16.msra.mxu0 0
        %986 = vmatprep.subr.bf16.mxu0 0
        %987 = vmatpush2.bf16.msra.mxu0 0
        %988 = vmatprep.subr.bf16.mxu0 0
        %989 = vmatpush2.bf16.msra.mxu0 0
        %990 = vmatprep.subr.bf16.mxu0 0
        %991 = vmatpush2.bf16.msra.mxu0 0
        %992 = vmatprep.subr.bf16.mxu0 0
        %993 = vmatpush2.bf16.msra.mxu0 0
        %994 = vmatprep.mubr.bf16.mxu0 0
        %995 = vmatmul.mubr.bf16.gmra.mxu0 %v920
        %v996 = vpop.f32.mrf.mxu0
        %v997 = vadd.f32 0.0, %v996
        %v998 = vpop.f32.mrf.mxu0
        %v999 = vadd.f32 0.0, %v998
        %v1000 = vpop.f32.mrf.mxu0
        %v1001 = vpop.f32.mrf.mxu0
        %1002 = vdwg.mxu0
        %v1003 = vadd.f32 %v418, %v956
        %v1004 = vadd.f32 %v420, %v958
        %v1005 = vadd.f32 %v491, %v997
        %v1006 = vadd.f32 %v493, %v999
        %v1007 = vadd.f32 %v1003, %v772
        %v1008 = vadd.f32 %v1004, %v776
        %v1009 = vadd.f32 %v1005, %v780
        %v1010 = vadd.f32 %v1006, %v784
        %v1011 = vmul.f32 %v1007, 0.5
        %v1012 = vtanh.pop %v1011
        %v1013 = vmul.f32 %v1012, 0.5
        %v1014 = vadd.f32 %v1013, 0.5
        %v1015 = vmul.f32 %v1008, 0.5
        %v1016 = vtanh.pop %v1015
        %v1017 = vmul.f32 %v1016, 0.5
        %v1018 = vadd.f32 %v1017, 0.5
        %v1019 = vtanh.pop %v1009
        %v1020 = vmul.f32 %v1010, 0.5
        %v1021 = vtanh.pop %v1020
        %v1022 = vmul.f32 %v1021, 0.5
        %v1023 = vadd.f32 %v1022, 0.5
        %v1024 = vmul.f32 %v1018, %v917
        %v1025 = vmul.f32 %v1014, %v1019
        %v1026 = vadd.f32 %v1024, %v1025
        %v1027 = vtanh.pop %v1026
        %v1028 = vmul.f32 %v1023, %v1027
        %v1029 = vpack.c.bf16 %v1028, %v1028
        %1030 = vmatprep.subr.bf16.mxu0 %v647
        %1031 = vmatpush1.bf16.msra.mxu0 %v646
        %1032 = vmatprep.subr.bf16.mxu0 %v643
        %1033 = vmatpush1.bf16.msra.mxu0 %v642
        %1034 = vmatprep.subr.bf16.mxu0 %v639
        %1035 = vmatpush1.bf16.msra.mxu0 %v638
        %1036 = vmatprep.subr.bf16.mxu0 %v635
        %1037 = vmatpush1.bf16.msra.mxu0 %v634
        %1038 = vmatprep.subr.bf16.mxu0 %v631
        %1039 = vmatpush1.bf16.msra.mxu0 %v630
        %1040 = vmatprep.subr.bf16.mxu0 %v627
        %1041 = vmatpush1.bf16.msra.mxu0 %v626
        %1042 = vmatprep.subr.bf16.mxu0 %v623
        %1043 = vmatpush1.bf16.msra.mxu0 %v622
        %1044 = vmatprep.subr.bf16.mxu0 %v619
        %1045 = vmatpush1.bf16.msra.mxu0 %v618
        %1046 = vmatprep.subr.bf16.mxu0 0
        %1047 = vmatpush2.bf16.msra.mxu0 0
        %1048 = vmatprep.subr.bf16.mxu0 0
        %1049 = vmatpush2.bf16.msra.mxu0 0
        %1050 = vmatprep.subr.bf16.mxu0 0
        %1051 = vmatpush2.bf16.msra.mxu0 0
        %1052 = vmatprep.subr.bf16.mxu0 0
        %1053 = vmatpush2.bf16.msra.mxu0 0
        %1054 = vmatprep.subr.bf16.mxu0 0
        %1055 = vmatpush2.bf16.msra.mxu0 0
        %1056 = vmatprep.subr.bf16.mxu0 0
        %1057 = vmatpush2.bf16.msra.mxu0 0
        %1058 = vmatprep.subr.bf16.mxu0 0
        %1059 = vmatpush2.bf16.msra.mxu0 0
        %1060 = vmatprep.subr.bf16.mxu0 0
        %1061 = vmatpush2.bf16.msra.mxu0 0
        %1062 = vmatprep.mubr.bf16.mxu0 0
        %1063 = vmatmul.mubr.bf16.gmra.mxu0 %v1029
        %v1064 = vpop.f32.mrf.mxu0
        %v1065 = vadd.f32 0.0, %v1064
        %v1066 = vpop.f32.mrf.mxu0
        %v1067 = vadd.f32 0.0, %v1066
        %v1068 = vpop.f32.mrf.mxu0
        %v1069 = vpop.f32.mrf.mxu0
        %1070 = vdwg.mxu0
        %1071 = vmatprep.subr.bf16.mxu0 %v649
        %1072 = vmatpush1.bf16.msra.mxu0 %v648
        %1073 = vmatprep.subr.bf16.mxu0 %v645
        %1074 = vmatpush1.bf16.msra.mxu0 %v644
        %1075 = vmatprep.subr.bf16.mxu0 %v641
        %1076 = vmatpush1.bf16.msra.mxu0 %v640
        %1077 = vmatprep.subr.bf16.mxu0 %v637
        %1078 = vmatpush1.bf16.msra.mxu0 %v636
        %1079 = vmatprep.subr.bf16.mxu0 %v633
        %1080 = vmatpush1.bf16.msra.mxu0 %v632
        %1081 = vmatprep.subr.bf16.mxu0 %v629
        %1082 = vmatpush1.bf16.msra.mxu0 %v628
        %1083 = vmatprep.subr.bf16.mxu0 %v625
        %1084 = vmatpush1.bf16.msra.mxu0 %v624
        %1085 = vmatprep.subr.bf16.mxu0 %v621
        %1086 = vmatpush1.bf16.msra.mxu0 %v620
        %1087 = vmatprep.subr.bf16.mxu0 0
        %1088 = vmatpush2.bf16.msra.mxu0 0
        %1089 = vmatprep.subr.bf16.mxu0 0
        %1090 = vmatpush2.bf16.msra.mxu0 0
        %1091 = vmatprep.subr.bf16.mxu0 0
        %1092 = vmatpush2.bf16.msra.mxu0 0
        %1093 = vmatprep.subr.bf16.mxu0 0
        %1094 = vmatpush2.bf16.msra.mxu0 0
        %1095 = vmatprep.subr.bf16.mxu0 0
        %1096 = vmatpush2.bf16.msra.mxu0 0
        %1097 = vmatprep.subr.bf16.mxu0 0
        %1098 = vmatpush2.bf16.msra.mxu0 0
        %1099 = vmatprep.subr.bf16.mxu0 0
        %1100 = vmatpush2.bf16.msra.mxu0 0
        %1101 = vmatprep.subr.bf16.mxu0 0
        %1102 = vmatpush2.bf16.msra.mxu0 0
        %1103 = vmatprep.mubr.bf16.mxu0 0
        %1104 = vmatmul.mubr.bf16.gmra.mxu0 %v1029
        %v1105 = vpop.f32.mrf.mxu0
        %v1106 = vadd.f32 0.0, %v1105
        %v1107 = vpop.f32.mrf.mxu0
        %v1108 = vadd.f32 0.0, %v1107
        %v1109 = vpop.f32.mrf.mxu0
        %v1110 = vpop.f32.mrf.mxu0
        %1111 = vdwg.mxu0
        %v1112 = vadd.f32 %v422, %v1065
        %v1113 = vadd.f32 %v424, %v1067
        %v1114 = vadd.f32 %v495, %v1106
        %v1115 = vadd.f32 %v497, %v1108
        %v1116 = vadd.f32 %v1112, %v772
        %v1117 = vadd.f32 %v1113, %v776
        %v1118 = vadd.f32 %v1114, %v780
        %v1119 = vadd.f32 %v1115, %v784
        %v1120 = vmul.f32 %v1116, 0.5
        %v1121 = vtanh.pop %v1120
        %v1122 = vmul.f32 %v1121, 0.5
        %v1123 = vadd.f32 %v1122, 0.5
        %v1124 = vmul.f32 %v1117, 0.5
        %v1125 = vtanh.pop %v1124
        %v1126 = vmul.f32 %v1125, 0.5
        %v1127 = vadd.f32 %v1126, 0.5
        %v1128 = vtanh.pop %v1118
        %v1129 = vmul.f32 %v1119, 0.5
        %v1130 = vtanh.pop %v1129
        %v1131 = vmul.f32 %v1130, 0.5
        %v1132 = vadd.f32 %v1131, 0.5
        %v1133 = vmul.f32 %v1127, %v1026
        %v1134 = vmul.f32 %v1123, %v1128
        %v1135 = vadd.f32 %v1133, %v1134
        %v1136 = vtanh.pop %v1135
        %v1137 = vmul.f32 %v1132, %v1136
        %v1138 = vpack.c.bf16 %v1137, %v1137
        %1139 = vmatprep.subr.bf16.mxu0 %v647
        %1140 = vmatpush1.bf16.msra.mxu0 %v646
        %1141 = vmatprep.subr.bf16.mxu0 %v643
        %1142 = vmatpush1.bf16.msra.mxu0 %v642
        %1143 = vmatprep.subr.bf16.mxu0 %v639
        %1144 = vmatpush1.bf16.msra.mxu0 %v638
        %1145 = vmatprep.subr.bf16.mxu0 %v635
        %1146 = vmatpush1.bf16.msra.mxu0 %v634
        %1147 = vmatprep.subr.bf16.mxu0 %v631
        %1148 = vmatpush1.bf16.msra.mxu0 %v630
        %1149 = vmatprep.subr.bf16.mxu0 %v627
        %1150 = vmatpush1.bf16.msra.mxu0 %v626
        %1151 = vmatprep.subr.bf16.mxu0 %v623
        %1152 = vmatpush1.bf16.msra.mxu0 %v622
        %1153 = vmatprep.subr.bf16.mxu0 %v619
        %1154 = vmatpush1.bf16.msra.mxu0 %v618
        %1155 = vmatprep.subr.bf16.mxu0 0
        %1156 = vmatpush2.bf16.msra.mxu0 0
        %1157 = vmatprep.subr.bf16.mxu0 0
        %1158 = vmatpush2.bf16.msra.mxu0 0
        %1159 = vmatprep.subr.bf16.mxu0 0
        %1160 = vmatpush2.bf16.msra.mxu0 0
        %1161 = vmatprep.subr.bf16.mxu0 0
        %1162 = vmatpush2.bf16.msra.mxu0 0
        %1163 = vmatprep.subr.bf16.mxu0 0
        %1164 = vmatpush2.bf16.msra.mxu0 0
        %1165 = vmatprep.subr.bf16.mxu0 0
        %1166 = vmatpush2.bf16.msra.mxu0 0
        %1167 = vmatprep.subr.bf16.mxu0 0
        %1168 = vmatpush2.bf16.msra.mxu0 0
        %1169 = vmatprep.subr.bf16.mxu0 0
        %1170 = vmatpush2.bf16.msra.mxu0 0
        %1171 = vmatprep.mubr.bf16.mxu0 0
        %1172 = vmatmul.mubr.bf16.gmra.mxu0 %v1138
        %v1173 = vpop.f32.mrf.mxu0
        %v1174 = vadd.f32 0.0, %v1173
        %v1175 = vpop.f32.mrf.mxu0
        %v1176 = vadd.f32 0.0, %v1175
        %v1177 = vpop.f32.mrf.mxu0
        %v1178 = vpop.f32.mrf.mxu0
        %1179 = vdwg.mxu0
        %1180 = vmatprep.subr.bf16.mxu0 %v649
        %1181 = vmatpush1.bf16.msra.mxu0 %v648
        %1182 = vmatprep.subr.bf16.mxu0 %v645
        %1183 = vmatpush1.bf16.msra.mxu0 %v644
        %1184 = vmatprep.subr.bf16.mxu0 %v641
        %1185 = vmatpush1.bf16.msra.mxu0 %v640
        %1186 = vmatprep.subr.bf16.mxu0 %v637
        %1187 = vmatpush1.bf16.msra.mxu0 %v636
        %1188 = vmatprep.subr.bf16.mxu0 %v633
        %1189 = vmatpush1.bf16.msra.mxu0 %v632
        %1190 = vmatprep.subr.bf16.mxu0 %v629
        %1191 = vmatpush1.bf16.msra.mxu0 %v628
        %1192 = vmatprep.subr.bf16.mxu0 %v625
        %1193 = vmatpush1.bf16.msra.mxu0 %v624
        %1194 = vmatprep.subr.bf16.mxu0 %v621
        %1195 = vmatpush1.bf16.msra.mxu0 %v620
        %1196 = vmatprep.subr.bf16.mxu0 0
        %1197 = vmatpush2.bf16.msra.mxu0 0
        %1198 = vmatprep.subr.bf16.mxu0 0
        %1199 = vmatpush2.bf16.msra.mxu0 0
        %1200 = vmatprep.subr.bf16.mxu0 0
        %1201 = vmatpush2.bf16.msra.mxu0 0
        %1202 = vmatprep.subr.bf16.mxu0 0
        %1203 = vmatpush2.bf16.msra.mxu0 0
        %1204 = vmatprep.subr.bf16.mxu0 0
        %1205 = vmatpush2.bf16.msra.mxu0 0
        %1206 = vmatprep.subr.bf16.mxu0 0
        %1207 = vmatpush2.bf16.msra.mxu0 0
        %1208 = vmatprep.subr.bf16.mxu0 0
        %1209 = vmatpush2.bf16.msra.mxu0 0
        %1210 = vmatprep.subr.bf16.mxu0 0
        %1211 = vmatpush2.bf16.msra.mxu0 0
        %1212 = vmatprep.mubr.bf16.mxu0 0
        %1213 = vmatmul.mubr.bf16.gmra.mxu0 %v1138
        %v1214 = vpop.f32.mrf.mxu0
        %v1215 = vadd.f32 0.0, %v1214
        %v1216 = vpop.f32.mrf.mxu0
        %v1217 = vadd.f32 0.0, %v1216
        %v1218 = vpop.f32.mrf.mxu0
        %v1219 = vpop.f32.mrf.mxu0
        %1220 = vdwg.mxu0
        %v1221 = vadd.f32 %v428, %v1174
        %v1222 = vadd.f32 %v430, %v1176
        %v1223 = vadd.f32 %v501, %v1215
        %v1224 = vadd.f32 %v503, %v1217
        %v1225 = vadd.f32 %v1221, %v772
        %v1226 = vadd.f32 %v1222, %v776
        %v1227 = vadd.f32 %v1223, %v780
        %v1228 = vadd.f32 %v1224, %v784
        %v1229 = vmul.f32 %v1225, 0.5
        %v1230 = vtanh.pop %v1229
        %v1231 = vmul.f32 %v1230, 0.5
        %v1232 = vadd.f32 %v1231, 0.5
        %v1233 = vmul.f32 %v1226, 0.5
        %v1234 = vtanh.pop %v1233
        %v1235 = vmul.f32 %v1234, 0.5
        %v1236 = vadd.f32 %v1235, 0.5
        %v1237 = vtanh.pop %v1227
        %v1238 = vmul.f32 %v1228, 0.5
        %v1239 = vtanh.pop %v1238
        %v1240 = vmul.f32 %v1239, 0.5
        %v1241 = vadd.f32 %v1240, 0.5
        %v1242 = vmul.f32 %v1236, %v1135
        %v1243 = vmul.f32 %v1232, %v1237
        %v1244 = vadd.f32 %v1242, %v1243
        %v1245 = vtanh.pop %v1244
        %v1246 = vmul.f32 %v1241, %v1245
        %v1247 = vpack.c.bf16 %v1246, %v1246
        %1248 = vmatprep.subr.bf16.mxu0 %v647
        %1249 = vmatpush1.bf16.msra.mxu0 %v646
        %1250 = vmatprep.subr.bf16.mxu0 %v643
        %1251 = vmatpush1.bf16.msra.mxu0 %v642
        %1252 = vmatprep.subr.bf16.mxu0 %v639
        %1253 = vmatpush1.bf16.msra.mxu0 %v638
        %1254 = vmatprep.subr.bf16.mxu0 %v635
        %1255 = vmatpush1.bf16.msra.mxu0 %v634
        %1256 = vmatprep.subr.bf16.mxu0 %v631
        %1257 = vmatpush1.bf16.msra.mxu0 %v630
        %1258 = vmatprep.subr.bf16.mxu0 %v627
        %1259 = vmatpush1.bf16.msra.mxu0 %v626
        %1260 = vmatprep.subr.bf16.mxu0 %v623
        %1261 = vmatpush1.bf16.msra.mxu0 %v622
        %1262 = vmatprep.subr.bf16.mxu0 %v619
        %1263 = vmatpush1.bf16.msra.mxu0 %v618
        %1264 = vmatprep.subr.bf16.mxu0 0
        %1265 = vmatpush2.bf16.msra.mxu0 0
        %1266 = vmatprep.subr.bf16.mxu0 0
        %1267 = vmatpush2.bf16.msra.mxu0 0
        %1268 = vmatprep.subr.bf16.mxu0 0
        %1269 = vmatpush2.bf16.msra.mxu0 0
        %1270 = vmatprep.subr.bf16.mxu0 0
        %1271 = vmatpush2.bf16.msra.mxu0 0
        %1272 = vmatprep.subr.bf16.mxu0 0
        %1273 = vmatpush2.bf16.msra.mxu0 0
        %1274 = vmatprep.subr.bf16.mxu0 0
        %1275 = vmatpush2.bf16.msra.mxu0 0
        %1276 = vmatprep.subr.bf16.mxu0 0
        %1277 = vmatpush2.bf16.msra.mxu0 0
        %1278 = vmatprep.subr.bf16.mxu0 0
        %1279 = vmatpush2.bf16.msra.mxu0 0
        %1280 = vmatprep.mubr.bf16.mxu0 0
        %1281 = vmatmul.mubr.bf16.gmra.mxu0 %v1247
        %v1282 = vpop.f32.mrf.mxu0
        %v1283 = vadd.f32 0.0, %v1282
        %v1284 = vpop.f32.mrf.mxu0
        %v1285 = vadd.f32 0.0, %v1284
        %v1286 = vpop.f32.mrf.mxu0
        %v1287 = vpop.f32.mrf.mxu0
        %1288 = vdwg.mxu0
        %1289 = vmatprep.subr.bf16.mxu0 %v649
        %1290 = vmatpush1.bf16.msra.mxu0 %v648
        %1291 = vmatprep.subr.bf16.mxu0 %v645
        %1292 = vmatpush1.bf16.msra.mxu0 %v644
        %1293 = vmatprep.subr.bf16.mxu0 %v641
        %1294 = vmatpush1.bf16.msra.mxu0 %v640
        %1295 = vmatprep.subr.bf16.mxu0 %v637
        %1296 = vmatpush1.bf16.msra.mxu0 %v636
        %1297 = vmatprep.subr.bf16.mxu0 %v633
        %1298 = vmatpush1.bf16.msra.mxu0 %v632
        %1299 = vmatprep.subr.bf16.mxu0 %v629
        %1300 = vmatpush1.bf16.msra.mxu0 %v628
        %1301 = vmatprep.subr.bf16.mxu0 %v625
        %1302 = vmatpush1.bf16.msra.mxu0 %v624
        %1303 = vmatprep.subr.bf16.mxu0 %v621
        %1304 = vmatpush1.bf16.msra.mxu0 %v620
        %1305 = vmatprep.subr.bf16.mxu0 0
        %1306 = vmatpush2.bf16.msra.mxu0 0
        %1307 = vmatprep.subr.bf16.mxu0 0
        %1308 = vmatpush2.bf16.msra.mxu0 0
        %1309 = vmatprep.subr.bf16.mxu0 0
        %1310 = vmatpush2.bf16.msra.mxu0 0
        %1311 = vmatprep.subr.bf16.mxu0 0
        %1312 = vmatpush2.bf16.msra.mxu0 0
        %1313 = vmatprep.subr.bf16.mxu0 0
        %1314 = vmatpush2.bf16.msra.mxu0 0
        %1315 = vmatprep.subr.bf16.mxu0 0
        %1316 = vmatpush2.bf16.msra.mxu0 0
        %1317 = vmatprep.subr.bf16.mxu0 0
        %1318 = vmatpush2.bf16.msra.mxu0 0
        %1319 = vmatprep.subr.bf16.mxu0 0
        %1320 = vmatpush2.bf16.msra.mxu0 0
        %1321 = vmatprep.mubr.bf16.mxu0 0
        %1322 = vmatmul.mubr.bf16.gmra.mxu0 %v1247
        %v1323 = vpop.f32.mrf.mxu0
        %v1324 = vadd.f32 0.0, %v1323
        %v1325 = vpop.f32.mrf.mxu0
        %v1326 = vadd.f32 0.0, %v1325
        %v1327 = vpop.f32.mrf.mxu0
        %v1328 = vpop.f32.mrf.mxu0
        %1329 = vdwg.mxu0
        %v1330 = vadd.f32 %v432, %v1283
        %v1331 = vadd.f32 %v434, %v1285
        %v1332 = vadd.f32 %v505, %v1324
        %v1333 = vadd.f32 %v507, %v1326
        %v1334 = vadd.f32 %v1330, %v772
        %v1335 = vadd.f32 %v1331, %v776
        %v1336 = vadd.f32 %v1332, %v780
        %v1337 = vadd.f32 %v1333, %v784
        %v1338 = vmul.f32 %v1334, 0.5
        %v1339 = vtanh.pop %v1338
        %v1340 = vmul.f32 %v1339, 0.5
        %v1341 = vadd.f32 %v1340, 0.5
        %v1342 = vmul.f32 %v1335, 0.5
        %v1343 = vtanh.pop %v1342
        %v1344 = vmul.f32 %v1343, 0.5
        %v1345 = vadd.f32 %v1344, 0.5
        %v1346 = vtanh.pop %v1336
        %v1347 = vmul.f32 %v1337, 0.5
        %v1348 = vtanh.pop %v1347
        %v1349 = vmul.f32 %v1348, 0.5
        %v1350 = vadd.f32 %v1349, 0.5
        %v1351 = vmul.f32 %v1345, %v1244
        %v1352 = vmul.f32 %v1341, %v1346
        %v1353 = vadd.f32 %v1351, %v1352
        %v1354 = vtanh.pop %v1353
        %v1355 = vmul.f32 %v1350, %v1354
        %v1356 = vpack.c.bf16 %v1355, %v1355
        %1357 = vmatprep.subr.bf16.mxu0 %v647
        %1358 = vmatpush1.bf16.msra.mxu0 %v646
        %1359 = vmatprep.subr.bf16.mxu0 %v643
        %1360 = vmatpush1.bf16.msra.mxu0 %v642
        %1361 = vmatprep.subr.bf16.mxu0 %v639
        %1362 = vmatpush1.bf16.msra.mxu0 %v638
        %1363 = vmatprep.subr.bf16.mxu0 %v635
        %1364 = vmatpush1.bf16.msra.mxu0 %v634
        %1365 = vmatprep.subr.bf16.mxu0 %v631
        %1366 = vmatpush1.bf16.msra.mxu0 %v630
        %1367 = vmatprep.subr.bf16.mxu0 %v627
        %1368 = vmatpush1.bf16.msra.mxu0 %v626
        %1369 = vmatprep.subr.bf16.mxu0 %v623
        %1370 = vmatpush1.bf16.msra.mxu0 %v622
        %1371 = vmatprep.subr.bf16.mxu0 %v619
        %1372 = vmatpush1.bf16.msra.mxu0 %v618
        %1373 = vmatprep.subr.bf16.mxu0 0
        %1374 = vmatpush2.bf16.msra.mxu0 0
        %1375 = vmatprep.subr.bf16.mxu0 0
        %1376 = vmatpush2.bf16.msra.mxu0 0
        %1377 = vmatprep.subr.bf16.mxu0 0
        %1378 = vmatpush2.bf16.msra.mxu0 0
        %1379 = vmatprep.subr.bf16.mxu0 0
        %1380 = vmatpush2.bf16.msra.mxu0 0
        %1381 = vmatprep.subr.bf16.mxu0 0
        %1382 = vmatpush2.bf16.msra.mxu0 0
        %1383 = vmatprep.subr.bf16.mxu0 0
        %1384 = vmatpush2.bf16.msra.mxu0 0
        %1385 = vmatprep.subr.bf16.mxu0 0
        %1386 = vmatpush2.bf16.msra.mxu0 0
        %1387 = vmatprep.subr.bf16.mxu0 0
        %1388 = vmatpush2.bf16.msra.mxu0 0
        %1389 = vmatprep.mubr.bf16.mxu0 0
        %1390 = vmatmul.mubr.bf16.gmra.mxu0 %v1356
        %v1391 = vpop.f32.mrf.mxu0
        %v1392 = vadd.f32 0.0, %v1391
        %v1393 = vpop.f32.mrf.mxu0
        %v1394 = vadd.f32 0.0, %v1393
        %v1395 = vpop.f32.mrf.mxu0
        %v1396 = vpop.f32.mrf.mxu0
        %1397 = vdwg.mxu0
        %1398 = vmatprep.subr.bf16.mxu0 %v649
        %1399 = vmatpush1.bf16.msra.mxu0 %v648
        %1400 = vmatprep.subr.bf16.mxu0 %v645
        %1401 = vmatpush1.bf16.msra.mxu0 %v644
        %1402 = vmatprep.subr.bf16.mxu0 %v641
        %1403 = vmatpush1.bf16.msra.mxu0 %v640
        %1404 = vmatprep.subr.bf16.mxu0 %v637
        %1405 = vmatpush1.bf16.msra.mxu0 %v636
        %1406 = vmatprep.subr.bf16.mxu0 %v633
        %1407 = vmatpush1.bf16.msra.mxu0 %v632
        %1408 = vmatprep.subr.bf16.mxu0 %v629
        %1409 = vmatpush1.bf16.msra.mxu0 %v628
        %1410 = vmatprep.subr.bf16.mxu0 %v625
        %1411 = vmatpush1.bf16.msra.mxu0 %v624
        %1412 = vmatprep.subr.bf16.mxu0 %v621
        %1413 = vmatpush1.bf16.msra.mxu0 %v620
        %1414 = vmatprep.subr.bf16.mxu0 0
        %1415 = vmatpush2.bf16.msra.mxu0 0
        %1416 = vmatprep.subr.bf16.mxu0 0
        %1417 = vmatpush2.bf16.msra.mxu0 0
        %1418 = vmatprep.subr.bf16.mxu0 0
        %1419 = vmatpush2.bf16.msra.mxu0 0
        %1420 = vmatprep.subr.bf16.mxu0 0
        %1421 = vmatpush2.bf16.msra.mxu0 0
        %1422 = vmatprep.subr.bf16.mxu0 0
        %1423 = vmatpush2.bf16.msra.mxu0 0
        %1424 = vmatprep.subr.bf16.mxu0 0
        %1425 = vmatpush2.bf16.msra.mxu0 0
        %1426 = vmatprep.subr.bf16.mxu0 0
        %1427 = vmatpush2.bf16.msra.mxu0 0
        %1428 = vmatprep.subr.bf16.mxu0 0
        %1429 = vmatpush2.bf16.msra.mxu0 0
        %1430 = vmatprep.mubr.bf16.mxu0 0
        %1431 = vmatmul.mubr.bf16.gmra.mxu0 %v1356
        %v1432 = vpop.f32.mrf.mxu0
        %v1433 = vadd.f32 0.0, %v1432
        %v1434 = vpop.f32.mrf.mxu0
        %v1435 = vadd.f32 0.0, %v1434
        %v1436 = vpop.f32.mrf.mxu0
        %v1437 = vpop.f32.mrf.mxu0
        %1438 = vdwg.mxu0
        %v1439 = vadd.f32 %v438, %v1392
        %v1440 = vadd.f32 %v440, %v1394
        %v1441 = vadd.f32 %v511, %v1433
        %v1442 = vadd.f32 %v513, %v1435
        %v1443 = vadd.f32 %v1439, %v772
        %v1444 = vadd.f32 %v1440, %v776
        %v1445 = vadd.f32 %v1441, %v780
        %v1446 = vadd.f32 %v1442, %v784
        %v1447 = vmul.f32 %v1443, 0.5
        %v1448 = vtanh.pop %v1447
        %v1449 = vmul.f32 %v1448, 0.5
        %v1450 = vadd.f32 %v1449, 0.5
        %v1451 = vmul.f32 %v1444, 0.5
        %v1452 = vtanh.pop %v1451
        %v1453 = vmul.f32 %v1452, 0.5
        %v1454 = vadd.f32 %v1453, 0.5
        %v1455 = vtanh.pop %v1445
        %v1456 = vmul.f32 %v1446, 0.5
        %v1457 = vtanh.pop %v1456
        %v1458 = vmul.f32 %v1457, 0.5
        %v1459 = vadd.f32 %v1458, 0.5
        %v1460 = vmul.f32 %v1454, %v1353
        %v1461 = vmul.f32 %v1450, %v1455
        %v1462 = vadd.f32 %v1460, %v1461
        %v1463 = vtanh.pop %v1462
        %v1464 = vmul.f32 %v1459, %v1463
        %v1465 = vpack.c.bf16 %v1464, %v1464
        %1466 = vmatprep.subr.bf16.mxu0 %v647
        %1467 = vmatpush1.bf16.msra.mxu0 %v646
        %1468 = vmatprep.subr.bf16.mxu0 %v643
        %1469 = vmatpush1.bf16.msra.mxu0 %v642
        %1470 = vmatprep.subr.bf16.mxu0 %v639
        %1471 = vmatpush1.bf16.msra.mxu0 %v638
        %1472 = vmatprep.subr.bf16.mxu0 %v635
        %1473 = vmatpush1.bf16.msra.mxu0 %v634
        %1474 = vmatprep.subr.bf16.mxu0 %v631
        %1475 = vmatpush1.bf16.msra.mxu0 %v630
        %1476 = vmatprep.subr.bf16.mxu0 %v627
        %1477 = vmatpush1.bf16.msra.mxu0 %v626
        %1478 = vmatprep.subr.bf16.mxu0 %v623
        %1479 = vmatpush1.bf16.msra.mxu0 %v622
        %1480 = vmatprep.subr.bf16.mxu0 %v619
        %1481 = vmatpush1.bf16.msra.mxu0 %v618
        %1482 = vmatprep.subr.bf16.mxu0 0
        %1483 = vmatpush2.bf16.msra.mxu0 0
        %1484 = vmatprep.subr.bf16.mxu0 0
        %1485 = vmatpush2.bf16.msra.mxu0 0
        %1486 = vmatprep.subr.bf16.mxu0 0
        %1487 = vmatpush2.bf16.msra.mxu0 0
        %1488 = vmatprep.subr.bf16.mxu0 0
        %1489 = vmatpush2.bf16.msra.mxu0 0
        %1490 = vmatprep.subr.bf16.mxu0 0
        %1491 = vmatpush2.bf16.msra.mxu0 0
        %1492 = vmatprep.subr.bf16.mxu0 0
        %1493 = vmatpush2.bf16.msra.mxu0 0
        %1494 = vmatprep.subr.bf16.mxu0 0
        %1495 = vmatpush2.bf16.msra.mxu0 0
        %1496 = vmatprep.subr.bf16.mxu0 0
        %1497 = vmatpush2.bf16.msra.mxu0 0
        %1498 = vmatprep.mubr.bf16.mxu0 0
        %1499 = vmatmul.mubr.bf16.gmra.mxu0 %v1465
        %v1500 = vpop.f32.mrf.mxu0
        %v1501 = vadd.f32 0.0, %v1500
        %v1502 = vpop.f32.mrf.mxu0
        %v1503 = vadd.f32 0.0, %v1502
        %v1504 = vpop.f32.mrf.mxu0
        %v1505 = vpop.f32.mrf.mxu0
        %1506 = vdwg.mxu0
        %1507 = vmatprep.subr.bf16.mxu0 %v649
        %1508 = vmatpush1.bf16.msra.mxu0 %v648
        %1509 = vmatprep.subr.bf16.mxu0 %v645
        %1510 = vmatpush1.bf16.msra.mxu0 %v644
        %1511 = vmatprep.subr.bf16.mxu0 %v641
        %1512 = vmatpush1.bf16.msra.mxu0 %v640
        %1513 = vmatprep.subr.bf16.mxu0 %v637
        %1514 = vmatpush1.bf16.msra.mxu0 %v636
        %1515 = vmatprep.subr.bf16.mxu0 %v633
        %1516 = vmatpush1.bf16.msra.mxu0 %v632
        %1517 = vmatprep.subr.bf16.mxu0 %v629
        %1518 = vmatpush1.bf16.msra.mxu0 %v628
        %1519 = vmatprep.subr.bf16.mxu0 %v625
        %1520 = vmatpush1.bf16.msra.mxu0 %v624
        %1521 = vmatprep.subr.bf16.mxu0 %v621
        %1522 = vmatpush1.bf16.msra.mxu0 %v620
        %1523 = vmatprep.subr.bf16.mxu0 0
        %1524 = vmatpush2.bf16.msra.mxu0 0
        %1525 = vmatprep.subr.bf16.mxu0 0
        %1526 = vmatpush2.bf16.msra.mxu0 0
        %1527 = vmatprep.subr.bf16.mxu0 0
        %1528 = vmatpush2.bf16.msra.mxu0 0
        %1529 = vmatprep.subr.bf16.mxu0 0
        %1530 = vmatpush2.bf16.msra.mxu0 0
        %1531 = vmatprep.subr.bf16.mxu0 0
        %1532 = vmatpush2.bf16.msra.mxu0 0
        %1533 = vmatprep.subr.bf16.mxu0 0
        %1534 = vmatpush2.bf16.msra.mxu0 0
        %1535 = vmatprep.subr.bf16.mxu0 0
        %1536 = vmatpush2.bf16.msra.mxu0 0
        %1537 = vmatprep.subr.bf16.mxu0 0
        %1538 = vmatpush2.bf16.msra.mxu0 0
        %1539 = vmatprep.mubr.bf16.mxu0 0
        %1540 = vmatmul.mubr.bf16.gmra.mxu0 %v1465
        %v1541 = vpop.f32.mrf.mxu0
        %v1542 = vadd.f32 0.0, %v1541
        %v1543 = vpop.f32.mrf.mxu0
        %v1544 = vadd.f32 0.0, %v1543
        %v1545 = vpop.f32.mrf.mxu0
        %v1546 = vpop.f32.mrf.mxu0
        %1547 = vdwg.mxu0
        %v1548 = vadd.f32 %v442, %v1501
        %v1549 = vadd.f32 %v444, %v1503
        %v1550 = vadd.f32 %v515, %v1542
        %v1551 = vadd.f32 %v517, %v1544
        %v1552 = vadd.f32 %v1548, %v772
        %v1553 = vadd.f32 %v1549, %v776
        %v1554 = vadd.f32 %v1550, %v780
        %v1555 = vadd.f32 %v1551, %v784
        %v1556 = vmul.f32 %v1552, 0.5
        %v1557 = vtanh.pop %v1556
        %v1558 = vmul.f32 %v1557, 0.5
        %v1559 = vadd.f32 %v1558, 0.5
        %v1560 = vmul.f32 %v1553, 0.5
        %v1561 = vtanh.pop %v1560
        %v1562 = vmul.f32 %v1561, 0.5
        %v1563 = vadd.f32 %v1562, 0.5
        %v1564 = vtanh.pop %v1554
        %v1565 = vmul.f32 %v1555, 0.5
        %v1566 = vtanh.pop %v1565
        %v1567 = vmul.f32 %v1566, 0.5
        %v1568 = vadd.f32 %v1567, 0.5
        %v1569 = vmul.f32 %v1563, %v1462
        %v1570 = vmul.f32 %v1559, %v1564
        %v1571 = vadd.f32 %v1569, %v1570
        %v1572 = vtanh.pop %v1571
        %v1573 = vmul.f32 %v1568, %v1572
        %1574 = vst [vmem:[#allocation2] sm:$0xff] %v1573
        %1575 = vst [vmem:[#allocation3] sm:$0xff] %v1571
        %p1576 = scmp.eq.s32.totalorder %s24, 1
        // Predicated region
        $region53: #{tpu_custom_call.1} parent=43 // pred_check
          %p1577 = pneg %p1576
        $region54: #{tpu_custom_call.1} parent=43 // pred_check_branch
          %1579 = sbr.rel (%p1577) target = $region56
        $region55: #{tpu_custom_call.1} parent=43 // pred_region
          %v1580 = vpack.c.bf16 %v1573, %v1573
          %v1581 = vld [vmem:[%s4] sm:$0xf]
          %v1582 = vld [vmem:[%s4 + $0x4] sm:$0xf]
          %v1583 = vld [vmem:[%s4 + $0x8] sm:$0xf]
          %v1584 = vld [vmem:[%s4 + $0xc] sm:$0xf]
          %v1585 = vld [vmem:[%s4 + $0x10] sm:$0xf]
          %v1586 = vld [vmem:[%s4 + $0x14] sm:$0xf]
          %v1587 = vld [vmem:[%s4 + $0x18] sm:$0xf]
          %v1588 = vld [vmem:[%s4 + $0x1c] sm:$0xf]
          %v1589 = vld [vmem:[%s4 + $0x20] sm:$0xf]
          %v1590 = vld [vmem:[%s4 + $0x24] sm:$0xf]
          %v1591 = vld [vmem:[%s4 + $0x28] sm:$0xf]
          %v1592 = vld [vmem:[%s4 + $0x2c] sm:$0xf]
          %v1593 = vld [vmem:[%s4 + $0x30] sm:$0xf]
          %v1594 = vld [vmem:[%s4 + $0x34] sm:$0xf]
          %v1595 = vld [vmem:[%s4 + $0x38] sm:$0xf]
          %v1596 = vld [vmem:[%s4 + $0x3c] sm:$0xf]
          %v1597 = vld [vmem:[%s5] sm:$0x1]
          %v1599 = vlaneseq
          %v1600 = vshrl.u32 %v1599, 7
          %v1601 = vsub.s32 0, %v1600
          %v1602 = vrot.slane %v1597, %v1601
          %v1620 = vunpack.c.l.b16 %v1581
          %v1621 = vunpack.c.l.b16 %v1582
          %v1622 = vunpack.c.l.b16 %v1583
          %v1623 = vunpack.c.l.b16 %v1584
          %v1624 = vunpack.c.l.b16 %v1585
          %v1625 = vunpack.c.l.b16 %v1586
          %v1626 = vunpack.c.l.b16 %v1587
          %v1627 = vunpack.c.l.b16 %v1588
          %v1628 = vunpack.c.l.b16 %v1589
          %v1629 = vunpack.c.l.b16 %v1590
          %v1630 = vunpack.c.l.b16 %v1591
          %v1631 = vunpack.c.l.b16 %v1592
          %v1632 = vunpack.c.l.b16 %v1593
          %v1633 = vunpack.c.l.b16 %v1594
          %v1634 = vunpack.c.l.b16 %v1595
          %v1635 = vunpack.c.l.b16 %v1596
          %v1636 = vpack.c.b16 %v1621, %v1620
          %v1637 = vpack.c.b16 %v1623, %v1622
          %v1638 = vpack.c.b16 %v1625, %v1624
          %v1639 = vpack.c.b16 %v1627, %v1626
          %v1640 = vpack.c.b16 %v1629, %v1628
          %v1641 = vpack.c.b16 %v1631, %v1630
          %v1642 = vpack.c.b16 %v1633, %v1632
          %v1643 = vpack.c.b16 %v1635, %v1634
          %1652 = vmatprep.subr.bf16.mxu0 0
          %1653 = vmatpush1.bf16.msra.mxu0 %v1643
          %1654 = vmatprep.subr.bf16.mxu0 0
          %1655 = vmatpush1.bf16.msra.mxu0 %v1642
          %1656 = vmatprep.subr.bf16.mxu0 0
          %1657 = vmatpush1.bf16.msra.mxu0 %v1641
          %1658 = vmatprep.subr.bf16.mxu0 0
          %1659 = vmatpush1.bf16.msra.mxu0 %v1640
          %1660 = vmatprep.subr.bf16.mxu0 0
          %1661 = vmatpush1.bf16.msra.mxu0 %v1639
          %1662 = vmatprep.subr.bf16.mxu0 0
          %1663 = vmatpush1.bf16.msra.mxu0 %v1638
          %1664 = vmatprep.subr.bf16.mxu0 0
          %1665 = vmatpush1.bf16.msra.mxu0 %v1637
          %1666 = vmatprep.subr.bf16.mxu0 0
          %1667 = vmatpush1.bf16.msra.mxu0 %v1636
          %1668 = vmatprep.subr.bf16.mxu0 0
          %1669 = vmatpush2.bf16.msra.mxu0 0
          %1670 = vmatprep.subr.bf16.mxu0 0
          %1671 = vmatpush2.bf16.msra.mxu0 0
          %1672 = vmatprep.subr.bf16.mxu0 0
          %1673 = vmatpush2.bf16.msra.mxu0 0
          %1674 = vmatprep.subr.bf16.mxu0 0
          %1675 = vmatpush2.bf16.msra.mxu0 0
          %1676 = vmatprep.subr.bf16.mxu0 0
          %1677 = vmatpush2.bf16.msra.mxu0 0
          %1678 = vmatprep.subr.bf16.mxu0 0
          %1679 = vmatpush2.bf16.msra.mxu0 0
          %1680 = vmatprep.subr.bf16.mxu0 0
          %1681 = vmatpush2.bf16.msra.mxu0 0
          %1682 = vmatprep.subr.bf16.mxu0 0
          %1683 = vmatpush2.bf16.msra.mxu0 0
          %1684 = vmatprep.mubr.bf16.mxu0 0
          %1685 = vmatmul.mubr.bf16.gmra.mxu0 %v1580
          %v1686 = vpop.f32.mrf.mxu0
          %v1687 = vadd.f32 %v1602, %v1686
          %v1688 = vpop.f32.mrf.mxu0
          %v1689 = vpop.f32.mrf.mxu0
          %v1690 = vpop.f32.mrf.mxu0
          %1691 = vdwg.mxu0
          %1692 = vst [vmem:[#allocation7] sm:$0xff] %v1687
        $region56: #{tpu_custom_call.1} parent=43 // pred_fallthru
          _
        // Predicated region
        $region57: #{tpu_custom_call.1} parent=43 // pred_check
          %p1693 = pneg %p182
        $region58: #{tpu_custom_call.1} parent=43 // pred_check_branch
          %1695 = sbr.rel (%p1693) target = $region60
        $region59: #{tpu_custom_call.1} parent=43 // pred_region
          %s1697 = ssub.s32 128, 128
          %1698 = vsyncadd [#allocation6], %s1697
          %s1699 = smul.addr %s23, 128
          %s1700 = scalar_lea.hbm %s6, %s1699
          %s1702 = sshll.u32 [#allocation7], 4
          %s1703 = int_to_ptr.vmem [resolvable:$true] %s1702
          %1705 = dma.vmem_to_hbm [thread:$0]  %s1703, 128, %s1700, [#allocation6]
        $region60: #{tpu_custom_call.1} parent=43 // pred_fallthru
          _
        // Predicated region
        $region61: #{tpu_custom_call.1} parent=43 // pred_check
          %p1706 = pneg %p182
        $region62: #{tpu_custom_call.1} parent=43 // pred_check_branch
          %1708 = sbr.rel (%p1706) target = $region64
        $region63: #{tpu_custom_call.1} parent=43 // pred_region
          %1709 = dma.done [#allocation6], 128
        $region64: #{tpu_custom_call.1} parent=43 // pred_fallthru
          _
      $region44: #{tpu_custom_call.1} parent=5 // pred_fallthru
        _
      %p1710 = scmp.le.s32.totalorder 2, %s14
      // Predicated region
      $region65: #{tpu_custom_call.1} parent=5 // pred_check
        %p1711 = pneg %p1710
      $region66: #{tpu_custom_call.1} parent=5 // pred_check_branch
        %1713 = sbr.rel (%p1711) target = $region68
      $region67: #{tpu_custom_call.1} parent=5 // pred_region
        %s1714 = ssub.s32 %s14, 2
      $region68: #{tpu_custom_call.1} parent=5 // pred_fallthru
        _
    $region6: #{tpu_custom_call.1} parent=1 // loop_footer
      %s18 = sadd.s32 1, %s14
    $region7: #{tpu_custom_call.1} parent=1 // loop_footer_branch
      %13 = sbr.rel target = $region3
    $region8: #{tpu_custom_call.1} parent=1 // loop_exit
      _
    %1715 = vsyncpa [#allocation5], 1
    %s1716 = scalar_lea.sflag [#allocation5], 1
    %1717 = vsyncpa %s1716, 1
    %1718 = vsyncpa [#allocation6], 1
    %s1719 = scalar_lea.sflag [#allocation6], 1
    %1720 = vsyncpa %s1719, 1

// kernel: tpu_custom_call.1
$region0: #{tpu_custom_call.1}
  #allocation0 [shape = 'u32[]', space=smem, size = 0x4, offset = 0x4, fixed_abs, tag = 'smem constant byte address 0x4 - core index']
  #allocation1 [shape = 'u32[144,128]{1,0:T(1,128)}', space=vmem, size = 0x12000, scoped, tag = 'internal scratch']
  #allocation2 [shape = 'f32[8,128]{1,0:T(8,128)}', space=vmem, size = 0x1000, scoped, tag = 'scratch operand']
  #allocation3 [shape = 'f32[8,128]{1,0:T(8,128)}', space=vmem, size = 0x1000, scoped, tag = 'scratch operand']
  %s0 = inlined_call_operand.vmem [shape: f32[16,8,8], index: 0, kind: input, shape index: {}]
  %s1 = inlined_call_operand.vmem [shape: bf16[8,512], index: 1, kind: input, shape index: {}]
  %s2 = inlined_call_operand.hbm [shape: bf16[128,512], index: 2, kind: input, shape index: {}]
  %s3 = inlined_call_operand.vmem [shape: f32[1,512], index: 3, kind: input, shape index: {}]
  %s4 = inlined_call_operand.vmem [shape: bf16[128,128], index: 4, kind: input, shape index: {}]
  %s5 = inlined_call_operand.vmem [shape: f32[1,128], index: 5, kind: input, shape index: {}]
  %s6 = inlined_call_operand.hbm [shape: f32[8,128], index: 6, kind: output, shape index: {}]
  %s7 = sld [smem:[#allocation0]]
  $region69: #{tpu_custom_call.1} parent=0
    _
  %s9 = ssub.s32 1, %s7
  %s10 = scalar_select 0, %s9, %s7
  $region1: #{tpu_custom_call.1} parent=0
    #allocation4 [shape = 'u8[131072]{0}', space=vmem, size = 0x20000, scoped, tag = 'input window, operand 2, single buffered']
    #allocation5 [shape = 's32[2]{0}', space=sflag, size = 0x8, scoped, tag = 'scoped memory for tpu_custom_call.1']
    #allocation6 [shape = 's32[2]{0}', space=sflag, size = 0x8, scoped, tag = 'scoped memory for tpu_custom_call.1']
    #allocation7 [shape = 'u8[4096]{0}', space=vmem, size = 0x1000, scoped, tag = 'output window, operand 0, single buffered']
    %11 = vsyncpa [#allocation5], 0
    %12 = vsyncpa [#allocation6], 0
    loop: start=0, step=1, limit=4
    $region2: #{tpu_custom_call.1} parent=1 // loop_pre_header
      _
    $region3: #{tpu_custom_call.1} parent=1 // loop_header
      %s14 = sphi 0, %s18
      %p15 = scmp.ge.s32.totalorder %s14, 4
      %s21 = sphi 0, %s33
      %s22 = sphi 0, %s29
      %s23 = sphi 0, %s21
      %s24 = sphi 0, %s22
      %s25 = sphi 0, %s23
      %s26 = sphi 0, %s24
      %s38 = sphi 0, %s40
      %s41 = sphi 0, %s38
      %s42 = sphi 0, %s41
      %s58 = sphi 0, %s42
      %s62 = sphi 0, %s62
      %s64 = sphi 0, %s62
      %s65 = sphi 0, %s64
      %s79 = sphi 0, %s65
      %s83 = sphi 0, %s83
      %s85 = sphi 0, %s83
      %s86 = sphi 0, %s85
      %s100 = sphi 0, %s86
      %s104 = sphi 0, %s104
      %s106 = sphi 0, %s104
      %s107 = sphi 0, %s106
      %s121 = sphi 0, %s107
      %s125 = sphi 0, %s125
      %s127 = sphi 0, %s125
      %s128 = sphi 0, %s127
      %s142 = sphi 0, %s128
      %s146 = sphi 0, %s146
      %s148 = sphi 0, %s146
      %s149 = sphi 0, %s148
      %s163 = sphi 0, %s149
      %s169 = sphi 0, %s171
      %s172 = sphi 0, %s169
      %s173 = sphi 0, %s172
      %s189 = sphi 0, %s173
    $region4: #{tpu_custom_call.1} parent=1 // loop_header_branch
      %17 = sbr.rel (%p15) target = $region8
    $region5: #{tpu_custom_call.1} parent=1 // loop_body
      %s19 = ssub.s32 %s14, 1
      %s20 = ssub.s32 %s14, 2
      %s27 = sadd.s32 1, %s22
      %p28 = scmp.ge.s32.totalorder %s27, 2
      %s29 = scalar_select %p28, 0, %s27
      %s30 = sadd.s32 1, %s21
      %s31 = scalar_select %p28, %s30, %s21
      %p32 = scmp.ge.s32.totalorder %s31, 1
      %s33 = scalar_select %p32, 0, %s31
      %s34 = ssub.s32 %s22, %s29
      %s35 = ssub.s32 %s21, %s33
      %s36 = sor.u32 %s34, %s35
      %p37 = scmp.eq.s32.totalorder %s36, 0
      %s39 = sadd.s32 %s38, 1
      %s40 = scalar_select %p37, %s38, %s39
      %p43 = pneg %p37
      %p44 = scmp.eq.s32.totalorder %s14, 1
      %p45 = por %p43, %p44
      %p46 = scmp.ne.s32.totalorder %s38, %s41
      %p47 = scmp.eq.s32.totalorder %s14, 0
      %p48 = por %p46, %p47
      %p49 = scmp.ne.s32.totalorder %s38, %s41
      %p50 = scmp.eq.s32.totalorder %s19, 1
      %p51 = por %p49, %p50
      %p52 = scmp.ne.s32.totalorder %s41, %s42
      %p53 = scmp.eq.s32.totalorder %s19, 0
      %p54 = por %p52, %p53
      %p55 = scmp.ne.s32.totalorder %s41, %s42
      %p56 = scmp.eq.s32.totalorder %s20, 1
      %p57 = por %p55, %p56
      %p59 = scmp.ne.s32.totalorder %s42, %s58
      %p60 = scmp.eq.s32.totalorder %s20, 0
      %p61 = por %p59, %p60
      %s63 = sadd.s32 %s62, 1
      %p66 = scmp.eq.s32.totalorder %s14, 1
      %p67 = scmp.ne.s32.totalorder %s62, %s64
      %p68 = scmp.eq.s32.totalorder %s14, 0
      %p69 = por %p67, %p68
      %p70 = scmp.ne.s32.totalorder %s62, %s64
      %p71 = scmp.eq.s32.totalorder %s19, 1
      %p72 = por %p70, %p71
      %p73 = scmp.ne.s32.totalorder %s64, %s65
      %p74 = scmp.eq.s32.totalorder %s19, 0
      %p75 = por %p73, %p74
      %p76 = scmp.ne.s32.totalorder %s64, %s65
      %p77 = scmp.eq.s32.totalorder %s20, 1
      %p78 = por %p76, %p77
      %p80 = scmp.ne.s32.totalorder %s65, %s79
      %p81 = scmp.eq.s32.totalorder %s20, 0
      %p82 = por %p80, %p81
      %s84 = sadd.s32 %s83, 1
      %p87 = scmp.eq.s32.totalorder %s14, 1
      %p88 = scmp.ne.s32.totalorder %s83, %s85
      %p89 = scmp.eq.s32.totalorder %s14, 0
      %p90 = por %p88, %p89
      %p91 = scmp.ne.s32.totalorder %s83, %s85
      %p92 = scmp.eq.s32.totalorder %s19, 1
      %p93 = por %p91, %p92
      %p94 = scmp.ne.s32.totalorder %s85, %s86
      %p95 = scmp.eq.s32.totalorder %s19, 0
      %p96 = por %p94, %p95
      %p97 = scmp.ne.s32.totalorder %s85, %s86
      %p98 = scmp.eq.s32.totalorder %s20, 1
      %p99 = por %p97, %p98
      %p101 = scmp.ne.s32.totalorder %s86, %s100
      %p102 = scmp.eq.s32.totalorder %s20, 0
      %p103 = por %p101, %p102
      %s105 = sadd.s32 %s104, 1
      %p108 = scmp.eq.s32.totalorder %s14, 1
      %p109 = scmp.ne.s32.totalorder %s104, %s106
      %p110 = scmp.eq.s32.totalorder %s14, 0
      %p111 = por %p109, %p110
      %p112 = scmp.ne.s32.totalorder %s104, %s106
      %p113 = scmp.eq.s32.totalorder %s19, 1
      %p114 = por %p112, %p113
      %p115 = scmp.ne.s32.totalorder %s106, %s107
      %p116 = scmp.eq.s32.totalorder %s19, 0
      %p117 = por %p115, %p116
      %p118 = scmp.ne.s32.totalorder %s106, %s107
      %p119 = scmp.eq.s32.totalorder %s20, 1
      %p120 = por %p118, %p119
      %p122 = scmp.ne.s32.totalorder %s107, %s121
      %p123 = scmp.eq.s32.totalorder %s20, 0
      %p124 = por %p122, %p123
      %s126 = sadd.s32 %s125, 1
      %p129 = scmp.eq.s32.totalorder %s14, 1
      %p130 = scmp.ne.s32.totalorder %s125, %s127
      %p131 = scmp.eq.s32.totalorder %s14, 0
      %p132 = por %p130, %p131
      %p133 = scmp.ne.s32.totalorder %s125, %s127
      %p134 = scmp.eq.s32.totalorder %s19, 1
      %p135 = por %p133, %p134
      %p136 = scmp.ne.s32.totalorder %s127, %s128
      %p137 = scmp.eq.s32.totalorder %s19, 0
      %p138 = por %p136, %p137
      %p139 = scmp.ne.s32.totalorder %s127, %s128
      %p140 = scmp.eq.s32.totalorder %s20, 1
      %p141 = por %p139, %p140
      %p143 = scmp.ne.s32.totalorder %s128, %s142
      %p144 = scmp.eq.s32.totalorder %s20, 0
      %p145 = por %p143, %p144
      %s147 = sadd.s32 %s146, 1
      %p150 = scmp.eq.s32.totalorder %s14, 1
      %p151 = scmp.ne.s32.totalorder %s146, %s148
      %p152 = scmp.eq.s32.totalorder %s14, 0
      %p153 = por %p151, %p152
      %p154 = scmp.ne.s32.totalorder %s146, %s148
      %p155 = scmp.eq.s32.totalorder %s19, 1
      %p156 = por %p154, %p155
      %p157 = scmp.ne.s32.totalorder %s148, %s149
      %p158 = scmp.eq.s32.totalorder %s19, 0
      %p159 = por %p157, %p158
      %p160 = scmp.ne.s32.totalorder %s148, %s149
      %p161 = scmp.eq.s32.totalorder %s20, 1
      %p162 = por %p160, %p161
      %p164 = scmp.ne.s32.totalorder %s149, %s163
      %p165 = scmp.eq.s32.totalorder %s20, 0
      %p166 = por %p164, %p165
      %s167 = ssub.s32 %s21, %s33
      %p168 = scmp.eq.s32.totalorder %s167, 0
      %s170 = sadd.s32 %s169, 1
      %s171 = scalar_select %p168, %s169, %s170
      %p174 = pneg %p168
      %p175 = scmp.eq.s32.totalorder %s14, 1
      %p176 = por %p174, %p175
      %p177 = scmp.ne.s32.totalorder %s169, %s172
      %p178 = scmp.eq.s32.totalorder %s14, 0
      %p179 = por %p177, %p178
      %p180 = scmp.ne.s32.totalorder %s169, %s172
      %p181 = scmp.eq.s32.totalorder %s19, 1
      %p182 = por %p180, %p181
      %p183 = scmp.ne.s32.totalorder %s172, %s173
      %p184 = scmp.eq.s32.totalorder %s19, 0
      %p185 = por %p183, %p184
      %p186 = scmp.ne.s32.totalorder %s172, %s173
      %p187 = scmp.eq.s32.totalorder %s20, 1
      %p188 = por %p186, %p187
      %p190 = scmp.ne.s32.totalorder %s173, %s189
      %p191 = scmp.eq.s32.totalorder %s20, 0
      %p192 = por %p190, %p191
      %p193 = scmp.le.s32.totalorder 1, %s14
      %p194 = scmp.lt.s32.totalorder %s14, 3
      %p195 = pnand %p193, %p194
      %p196 = pneg %p195
      // Predicated region
      $region9: #{tpu_custom_call.1} parent=5 // pred_check
        _
      $region10: #{tpu_custom_call.1} parent=5 // pred_check_branch
        %198 = sbr.rel (%p195) target = $region12
      $region11: #{tpu_custom_call.1} parent=5 // pred_region
        %s199 = ssub.s32 %s14, 1
        // Predicated region
        $region13: #{tpu_custom_call.1} parent=11 // pred_check
          %p200 = pneg %p75
        $region14: #{tpu_custom_call.1} parent=11 // pred_check_branch
          %202 = sbr.rel (%p200) target = $region16
        $region15: #{tpu_custom_call.1} parent=11 // pred_region
          _
        $region16: #{tpu_custom_call.1} parent=11 // pred_fallthru
          _
        // Predicated region
        $region17: #{tpu_custom_call.1} parent=11 // pred_check
          %p203 = pneg %p96
        $region18: #{tpu_custom_call.1} parent=11 // pred_check_branch
          %205 = sbr.rel (%p203) target = $region20
        $region19: #{tpu_custom_call.1} parent=11 // pred_region
          %s207 = ssub.s32 4096, 4096
          %208 = vsyncadd [#allocation5], %s207
          %s209 = sshll.u32 [#allocation4], 4
          %s210 = int_to_ptr.vmem [resolvable:$true] %s209
          %215 = dma.hbm_to_vmem [thread:$0]  %s2, 4096, %s210, [#allocation5], 256, 256, 16
        $region20: #{tpu_custom_call.1} parent=11 // pred_fallthru
          _
        // Predicated region
        $region21: #{tpu_custom_call.1} parent=11 // pred_check
          %p216 = pneg %p117
        $region22: #{tpu_custom_call.1} parent=11 // pred_check_branch
          %218 = sbr.rel (%p216) target = $region24
        $region23: #{tpu_custom_call.1} parent=11 // pred_region
          _
        $region24: #{tpu_custom_call.1} parent=11 // pred_fallthru
          _
        // Predicated region
        $region25: #{tpu_custom_call.1} parent=11 // pred_check
          %p219 = pneg %p138
        $region26: #{tpu_custom_call.1} parent=11 // pred_check_branch
          %221 = sbr.rel (%p219) target = $region28
        $region27: #{tpu_custom_call.1} parent=11 // pred_region
          _
        $region28: #{tpu_custom_call.1} parent=11 // pred_fallthru
          _
        // Predicated region
        $region29: #{tpu_custom_call.1} parent=11 // pred_check
          %p222 = pneg %p159
        $region30: #{tpu_custom_call.1} parent=11 // pred_check_branch
          %224 = sbr.rel (%p222) target = $region32
        $region31: #{tpu_custom_call.1} parent=11 // pred_region
          _
        $region32: #{tpu_custom_call.1} parent=11 // pred_fallthru
          _
      $region12: #{tpu_custom_call.1} parent=5 // pred_fallthru
        _
      %p225 = scmp.lt.s32.totalorder %s14, 2
      // Predicated region
      $region33: #{tpu_custom_call.1} parent=5 // pred_check
        %p226 = pneg %p225
      $region34: #{tpu_custom_call.1} parent=5 // pred_check_branch
        %228 = sbr.rel (%p226) target = $region36
      $region35: #{tpu_custom_call.1} parent=5 // pred_region
        // Predicated region
        $region37: #{tpu_custom_call.1} parent=35 // pred_check
          %p229 = pneg %p48
        $region38: #{tpu_custom_call.1} parent=35 // pred_check_branch
          %231 = sbr.rel (%p229) target = $region40
        $region39: #{tpu_custom_call.1} parent=35 // pred_region
          %s232 = smul.u32 8, %s22
          %p233 = scmp.lt.s32.totalorder %s232, 15
          %s234 = scalar_select %p233, %s232, 15
          %p235 = scmp.lt.s32.totalorder %s21, 0
          %s236 = scalar_select %p235, %s21, 0
          %s237 = sadd.s32 %s236, %s234
          %s238 = smul.addr %s237, 8
          %s239 = scalar_lea.vmem %s0, %s238
          %s240 = smul.u32 8, %s22
        $region40: #{tpu_custom_call.1} parent=35 // pred_fallthru
          _
      $region36: #{tpu_custom_call.1} parent=5 // pred_fallthru
        _
      %p241 = scmp.le.s32.totalorder 1, %s14
      %p242 = scmp.lt.s32.totalorder %s14, 3
      %p243 = pnand %p241, %p242
      %p244 = pneg %p243
      // Predicated region
      $region41: #{tpu_custom_call.1} parent=5 // pred_check
        _
      $region42: #{tpu_custom_call.1} parent=5 // pred_check_branch
        %246 = sbr.rel (%p243) target = $region44
      $region43: #{tpu_custom_call.1} parent=5 // pred_region
        %s247 = ssub.s32 %s14, 1
        // Predicated region
        $region45: #{tpu_custom_call.1} parent=43 // pred_check
          %p248 = pneg %p96
        $region46: #{tpu_custom_call.1} parent=43 // pred_check_branch
          %250 = sbr.rel (%p248) target = $region48
        $region47: #{tpu_custom_call.1} parent=43 // pred_region
          %251 = dma.done [#allocation5], 4096
        $region48: #{tpu_custom_call.1} parent=43 // pred_fallthru
          _
        %s252 = smul.u32 8, %s24
        %p253 = scmp.lt.s32.totalorder %s252, 15
        %s254 = scalar_select %p253, %s252, 15
        %p255 = scmp.lt.s32.totalorder %s23, 0
        %s256 = scalar_select %p255, %s23, 0
        %s257 = sadd.s32 %s256, %s254
        %s258 = smul.addr %s257, 8
        %s259 = scalar_lea.vmem %s0, %s258
        %p260 = pneg %p54
        %p261 = pneg %p51
        %p262 = pneg %p75
        %p263 = pneg %p72
        %p264 = pneg %p96
        %p265 = pneg %p93
        %p266 = pneg %p117
        %p267 = pneg %p114
        %p268 = pneg %p138
        %p269 = pneg %p135
        %p270 = pneg %p159
        %p271 = pneg %p156
        %p272 = pneg %p185
        %p273 = pneg %p182
        %s274 = smul.u32 8, %s24
        %p275 = scmp.lt.s32.totalorder %s274, 15
        %s276 = scalar_select %p275, %s274, 15
        %p277 = scmp.lt.s32.totalorder %s23, 0
        %s278 = scalar_select %p277, %s23, 0
        %s279 = sadd.s32 %s278, %s276
        %s280 = smul.addr %s279, 8
        %s281 = scalar_lea.vmem %s0, %s280
        %s282 = smul.u32 8, %s24
        %p284 = scmp.eq.s32.totalorder %s24, 0
        // Predicated region
        $region49: #{tpu_custom_call.1} parent=43 // pred_check
          %p285 = pneg %p284
        $region50: #{tpu_custom_call.1} parent=43 // pred_check_branch
          %287 = sbr.rel (%p285) target = $region52
        $region51: #{tpu_custom_call.1} parent=43 // pred_region
          %288 = vst [vmem:[#allocation2] sm:$0xff] 0.0
          %289 = vst [vmem:[#allocation3] sm:$0xff] 0.0
        $region52: #{tpu_custom_call.1} parent=43 // pred_fallthru
          _
        %v290 = vld [vmem:[#allocation4] sm:$0xff]
        %v291 = vld [vmem:[#allocation4 + $0x8] sm:$0xff]
        %v292 = vld [vmem:[#allocation4 + $0x10] sm:$0xff]
        %v293 = vld [vmem:[#allocation4 + $0x18] sm:$0xff]
        %v294 = vld [vmem:[#allocation4 + $0x20] sm:$0xff]
        %v295 = vld [vmem:[#allocation4 + $0x28] sm:$0xff]
        %v296 = vld [vmem:[#allocation4 + $0x30] sm:$0xff]
        %v297 = vld [vmem:[#allocation4 + $0x38] sm:$0xff]
        %v298 = vld [vmem:[#allocation4 + $0x40] sm:$0xff]
        %v299 = vld [vmem:[#allocation4 + $0x48] sm:$0xff]
        %v300 = vld [vmem:[#allocation4 + $0x50] sm:$0xff]
        %v301 = vld [vmem:[#allocation4 + $0x58] sm:$0xff]
        %v302 = vld [vmem:[#allocation4 + $0x60] sm:$0xff]
        %v303 = vld [vmem:[#allocation4 + $0x68] sm:$0xff]
        %v304 = vld [vmem:[#allocation4 + $0x70] sm:$0xff]
        %v305 = vld [vmem:[#allocation4 + $0x78] sm:$0xff]
        %v306 = vld [vmem:[#allocation4 + $0x80] sm:$0xff]
        %v307 = vld [vmem:[#allocation4 + $0x88] sm:$0xff]
        %v308 = vld [vmem:[#allocation4 + $0x90] sm:$0xff]
        %v309 = vld [vmem:[#allocation4 + $0x98] sm:$0xff]
        %v310 = vld [vmem:[#allocation4 + $0xa0] sm:$0xff]
        %v311 = vld [vmem:[#allocation4 + $0xa8] sm:$0xff]
        %v312 = vld [vmem:[#allocation4 + $0xb0] sm:$0xff]
        %v313 = vld [vmem:[#allocation4 + $0xb8] sm:$0xff]
        %v314 = vld [vmem:[#allocation4 + $0xc0] sm:$0xff]
        %v315 = vld [vmem:[#allocation4 + $0xc8] sm:$0xff]
        %v316 = vld [vmem:[#allocation4 + $0xd0] sm:$0xff]
        %v317 = vld [vmem:[#allocation4 + $0xd8] sm:$0xff]
        %v318 = vld [vmem:[#allocation4 + $0xe0] sm:$0xff]
        %v319 = vld [vmem:[#allocation4 + $0xe8] sm:$0xff]
        %v320 = vld [vmem:[#allocation4 + $0xf0] sm:$0xff]
        %v321 = vld [vmem:[#allocation4 + $0xf8] sm:$0xff]
        %v322 = vld [vmem:[%s3] sm:$0xf]
        %v323 = vld [vmem:[%s281] sm:$0xff]
        %v324 = vld [vmem:[%s281 + $0x8] sm:$0xff]
        %v325 = vld [vmem:[%s281 + $0x10] sm:$0xff]
        %v326 = vld [vmem:[%s281 + $0x18] sm:$0xff]
        %v327 = vld [vmem:[%s281 + $0x20] sm:$0xff]
        %v328 = vld [vmem:[%s281 + $0x28] sm:$0xff]
        %v329 = vld [vmem:[%s281 + $0x30] sm:$0xff]
        %v330 = vld [vmem:[%s281 + $0x38] sm:$0xff]
        %v331 = vpack.c.bf16 %v324, %v323
        %v332 = vpack.c.bf16 %v326, %v325
        %v333 = vpack.c.bf16 %v328, %v327
        %v334 = vpack.c.bf16 %v330, %v329
        %v335 = vld [vmem:[%s1] sm:$0xff]
        %v336 = vld [vmem:[%s1 + $0x8] sm:$0xff]
        %v339 = vunpack.c.l.b16 %v335
        %v340 = vunpack.c.h.b16 %v335
        %v341 = vunpack.c.l.b16 %v336
        %v342 = vunpack.c.h.b16 %v336
        %v343 = vpack.c.b16 %v339, %v339
        %v344 = vpack.c.b16 %v340, %v340
        %v345 = vpack.c.b16 %v341, %v341
        %v346 = vpack.c.b16 %v342, %v342
        %vm347 = vcmask 64512
        %v349 = vsel %vm347, %v331, 0
        %v352 = vsel %vm347, %v332, 0
        %v355 = vsel %vm347, %v333, 0
        %v358 = vsel %vm347, %v334, 0
        %vm360 = vcmask 1043456
        %v362 = vsel %vm360, %v343, 0
        %v365 = vsel %vm360, %v344, 0
        %v368 = vsel %vm360, %v345, 0
        %v371 = vsel %vm360, %v346, 0
        %373 = vmatprep.subr.bf16.mxu0 0
        %374 = vmatpush1.bf16.msra.mxu0 0
        %375 = vmatprep.subr.bf16.mxu0 0
        %376 = vmatpush1.bf16.msra.mxu0 0
        %377 = vmatprep.subr.bf16.mxu0 0
        %378 = vmatpush1.bf16.msra.mxu0 0
        %379 = vmatprep.subr.bf16.mxu0 0
        %380 = vmatpush1.bf16.msra.mxu0 0
        %381 = vmatprep.subr.bf16.mxu0 0
        %382 = vmatpush1.bf16.msra.mxu0 0
        %383 = vmatprep.subr.bf16.mxu0 0
        %384 = vmatpush1.bf16.msra.mxu0 0
        %385 = vmatprep.subr.bf16.mxu0 0
        %386 = vmatpush1.bf16.msra.mxu0 0
        %387 = vmatprep.subr.bf16.mxu0 %v365
        %388 = vmatpush1.bf16.msra.mxu0 %v362
        %389 = vmatprep.subr.bf16.mxu0 0
        %390 = vmatpush2.bf16.msra.mxu0 0
        %391 = vmatprep.subr.bf16.mxu0 0
        %392 = vmatpush2.bf16.msra.mxu0 0
        %393 = vmatprep.subr.bf16.mxu0 0
        %394 = vmatpush2.bf16.msra.mxu0 0
        %395 = vmatprep.subr.bf16.mxu0 0
        %396 = vmatpush2.bf16.msra.mxu0 0
        %397 = vmatprep.subr.bf16.mxu0 0
        %398 = vmatpush2.bf16.msra.mxu0 0
        %399 = vmatprep.subr.bf16.mxu0 0
        %400 = vmatpush2.bf16.msra.mxu0 0
        %401 = vmatprep.subr.bf16.mxu0 0
        %402 = vmatpush2.bf16.msra.mxu0 0
        %403 = vmatprep.subr.bf16.mxu0 0
        %404 = vmatpush2.bf16.msra.mxu0 0
        %405 = vmatprep.mubr.bf16.mxu0 0
        %406 = vmatmul.mubr.bf16.gmra.mxu0 %v349
        %v407 = vpop.f32.mrf.mxu0
        %v408 = vadd.f32 0.0, %v407
        %v409 = vpop.f32.mrf.mxu0
        %v410 = vadd.f32 0.0, %v409
        %v411 = vpop.f32.mrf.mxu0
        %v412 = vadd.f32 0.0, %v411
        %v413 = vpop.f32.mrf.mxu0
        %v414 = vadd.f32 0.0, %v413
        %415 = vmatprep.mubr.bf16.mxu0 0
        %416 = vmatmul.mubr.bf16.gmra.mxu0 %v352
        %v417 = vpop.f32.mrf.mxu0
        %v418 = vadd.f32 0.0, %v417
        %v419 = vpop.f32.mrf.mxu0
        %v420 = vadd.f32 0.0, %v419
        %v421 = vpop.f32.mrf.mxu0
        %v422 = vadd.f32 0.0, %v421
        %v423 = vpop.f32.mrf.mxu0
        %v424 = vadd.f32 0.0, %v423
        %425 = vmatprep.mubr.bf16.mxu0 0
        %426 = vmatmul.mubr.bf16.gmra.mxu0 %v355
        %v427 = vpop.f32.mrf.mxu0
        %v428 = vadd.f32 0.0, %v427
        %v429 = vpop.f32.mrf.mxu0
        %v430 = vadd.f32 0.0, %v429
        %v431 = vpop.f32.mrf.mxu0
        %v432 = vadd.f32 0.0, %v431
        %v433 = vpop.f32.mrf.mxu0
        %v434 = vadd.f32 0.0, %v433
        %435 = vmatprep.mubr.bf16.mxu0 0
        %436 = vmatmul.mubr.bf16.gmra.mxu0 %v358
        %v437 = vpop.f32.mrf.mxu0
        %v438 = vadd.f32 0.0, %v437
        %v439 = vpop.f32.mrf.mxu0
        %v440 = vadd.f32 0.0, %v439
        %v441 = vpop.f32.mrf.mxu0
        %v442 = vadd.f32 0.0, %v441
        %v443 = vpop.f32.mrf.mxu0
        %v444 = vadd.f32 0.0, %v443
        %445 = vdwg.mxu0
        %446 = vmatprep.subr.bf16.mxu0 0
        %447 = vmatpush1.bf16.msra.mxu0 0
        %448 = vmatprep.subr.bf16.mxu0 0
        %449 = vmatpush1.bf16.msra.mxu0 0
        %450 = vmatprep.subr.bf16.mxu0 0
        %451 = vmatpush1.bf16.msra.mxu0 0
        %452 = vmatprep.subr.bf16.mxu0 0
        %453 = vmatpush1.bf16.msra.mxu0 0
        %454 = vmatprep.subr.bf16.mxu0 0
        %455 = vmatpush1.bf16.msra.mxu0 0
        %456 = vmatprep.subr.bf16.mxu0 0
        %457 = vmatpush1.bf16.msra.mxu0 0
        %458 = vmatprep.subr.bf16.mxu0 0
        %459 = vmatpush1.bf16.msra.mxu0 0
        %460 = vmatprep.subr.bf16.mxu0 %v371
        %461 = vmatpush1.bf16.msra.mxu0 %v368
        %462 = vmatprep.subr.bf16.mxu0 0
        %463 = vmatpush2.bf16.msra.mxu0 0
        %464 = vmatprep.subr.bf16.mxu0 0
        %465 = vmatpush2.bf16.msra.mxu0 0
        %466 = vmatprep.subr.bf16.mxu0 0
        %467 = vmatpush2.bf16.msra.mxu0 0
        %468 = vmatprep.subr.bf16.mxu0 0
        %469 = vmatpush2.bf16.msra.mxu0 0
        %470 = vmatprep.subr.bf16.mxu0 0
        %471 = vmatpush2.bf16.msra.mxu0 0
        %472 = vmatprep.subr.bf16.mxu0 0
        %473 = vmatpush2.bf16.msra.mxu0 0
        %474 = vmatprep.subr.bf16.mxu0 0
        %475 = vmatpush2.bf16.msra.mxu0 0
        %476 = vmatprep.subr.bf16.mxu0 0
        %477 = vmatpush2.bf16.msra.mxu0 0
        %478 = vmatprep.mubr.bf16.mxu0 0
        %479 = vmatmul.mubr.bf16.gmra.mxu0 %v349
        %v480 = vpop.f32.mrf.mxu0
        %v481 = vadd.f32 0.0, %v480
        %v482 = vpop.f32.mrf.mxu0
        %v483 = vadd.f32 0.0, %v482
        %v484 = vpop.f32.mrf.mxu0
        %v485 = vadd.f32 0.0, %v484
        %v486 = vpop.f32.mrf.mxu0
        %v487 = vadd.f32 0.0, %v486
        %488 = vmatprep.mubr.bf16.mxu0 0
        %489 = vmatmul.mubr.bf16.gmra.mxu0 %v352
        %v490 = vpop.f32.mrf.mxu0
        %v491 = vadd.f32 0.0, %v490
        %v492 = vpop.f32.mrf.mxu0
        %v493 = vadd.f32 0.0, %v492
        %v494 = vpop.f32.mrf.mxu0
        %v495 = vadd.f32 0.0, %v494
        %v496 = vpop.f32.mrf.mxu0
        %v497 = vadd.f32 0.0, %v496
        %498 = vmatprep.mubr.bf16.mxu0 0
        %499 = vmatmul.mubr.bf16.gmra.mxu0 %v355
        %v500 = vpop.f32.mrf.mxu0
        %v501 = vadd.f32 0.0, %v500
        %v502 = vpop.f32.mrf.mxu0
        %v503 = vadd.f32 0.0, %v502
        %v504 = vpop.f32.mrf.mxu0
        %v505 = vadd.f32 0.0, %v504
        %v506 = vpop.f32.mrf.mxu0
        %v507 = vadd.f32 0.0, %v506
        %508 = vmatprep.mubr.bf16.mxu0 0
        %509 = vmatmul.mubr.bf16.gmra.mxu0 %v358
        %v510 = vpop.f32.mrf.mxu0
        %v511 = vadd.f32 0.0, %v510
        %v512 = vpop.f32.mrf.mxu0
        %v513 = vadd.f32 0.0, %v512
        %v514 = vpop.f32.mrf.mxu0
        %v515 = vadd.f32 0.0, %v514
        %v516 = vpop.f32.mrf.mxu0
        %v517 = vadd.f32 0.0, %v516
        %518 = vdwg.mxu0
        %v519 = vld [vmem:[#allocation2] sm:$0xff]
        %v520 = vld [vmem:[#allocation3] sm:$0xff]
        %v521 = vpack.c.bf16 %v519, %v519
        %v554 = vunpack.c.l.b16 %v290
        %v555 = vunpack.c.h.b16 %v290
        %v556 = vunpack.c.l.b16 %v291
        %v557 = vunpack.c.h.b16 %v291
        %v558 = vunpack.c.l.b16 %v292
        %v559 = vunpack.c.h.b16 %v292
        %v560 = vunpack.c.l.b16 %v293
        %v561 = vunpack.c.h.b16 %v293
        %v562 = vunpack.c.l.b16 %v294
        %v563 = vunpack.c.h.b16 %v294
        %v564 = vunpack.c.l.b16 %v295
        %v565 = vunpack.c.h.b16 %v295
        %v566 = vunpack.c.l.b16 %v296
        %v567 = vunpack.c.h.b16 %v296
        %v568 = vunpack.c.l.b16 %v297
        %v569 = vunpack.c.h.b16 %v297
        %v570 = vunpack.c.l.b16 %v298
        %v571 = vunpack.c.h.b16 %v298
        %v572 = vunpack.c.l.b16 %v299
        %v573 = vunpack.c.h.b16 %v299
        %v574 = vunpack.c.l.b16 %v300
        %v575 = vunpack.c.h.b16 %v300
        %v576 = vunpack.c.l.b16 %v301
        %v577 = vunpack.c.h.b16 %v301
        %v578 = vunpack.c.l.b16 %v302
        %v579 = vunpack.c.h.b16 %v302
        %v580 = vunpack.c.l.b16 %v303
        %v581 = vunpack.c.h.b16 %v303
        %v582 = vunpack.c.l.b16 %v304
        %v583 = vunpack.c.h.b16 %v304
        %v584 = vunpack.c.l.b16 %v305
        %v585 = vunpack.c.h.b16 %v305
        %v586 = vunpack.c.l.b16 %v306
        %v587 = vunpack.c.h.b16 %v306
        %v588 = vunpack.c.l.b16 %v307
        %v589 = vunpack.c.h.b16 %v307
        %v590 = vunpack.c.l.b16 %v308
        %v591 = vunpack.c.h.b16 %v308
        %v592 = vunpack.c.l.b16 %v309
        %v593 = vunpack.c.h.b16 %v309
        %v594 = vunpack.c.l.b16 %v310
        %v595 = vunpack.c.h.b16 %v310
        %v596 = vunpack.c.l.b16 %v311
        %v597 = vunpack.c.h.b16 %v311
        %v598 = vunpack.c.l.b16 %v312
        %v599 = vunpack.c.h.b16 %v312
        %v600 = vunpack.c.l.b16 %v313
        %v601 = vunpack.c.h.b16 %v313
        %v602 = vunpack.c.l.b16 %v314
        %v603 = vunpack.c.h.b16 %v314
        %v604 = vunpack.c.l.b16 %v315
        %v605 = vunpack.c.h.b16 %v315
        %v606 = vunpack.c.l.b16 %v316
        %v607 = vunpack.c.h.b16 %v316
        %v608 = vunpack.c.l.b16 %v317
        %v609 = vunpack.c.h.b16 %v317
        %v610 = vunpack.c.l.b16 %v318
        %v611 = vunpack.c.h.b16 %v318
        %v612 = vunpack.c.l.b16 %v319
        %v613 = vunpack.c.h.b16 %v319
        %v614 = vunpack.c.l.b16 %v320
        %v615 = vunpack.c.h.b16 %v320
        %v616 = vunpack.c.l.b16 %v321
        %v617 = vunpack.c.h.b16 %v321
        %v618 = vpack.c.b16 %v558, %v554
        %v619 = vpack.c.b16 %v559, %v555
        %v620 = vpack.c.b16 %v560, %v556
        %v621 = vpack.c.b16 %v561, %v557
        %v622 = vpack.c.b16 %v566, %v562
        %v623 = vpack.c.b16 %v567, %v563
        %v624 = vpack.c.b16 %v568, %v564
        %v625 = vpack.c.b16 %v569, %v565
        %v626 = vpack.c.b16 %v574, %v570
        %v627 = vpack.c.b16 %v575, %v571
        %v628 = vpack.c.b16 %v576, %v572
        %v629 = vpack.c.b16 %v577, %v573
        %v630 = vpack.c.b16 %v582, %v578
        %v631 = vpack.c.b16 %v583, %v579
        %v632 = vpack.c.b16 %v584, %v580
        %v633 = vpack.c.b16 %v585, %v581
        %v634 = vpack.c.b16 %v590, %v586
        %v635 = vpack.c.b16 %v591, %v587
        %v636 = vpack.c.b16 %v592, %v588
        %v637 = vpack.c.b16 %v593, %v589
        %v638 = vpack.c.b16 %v598, %v594
        %v639 = vpack.c.b16 %v599, %v595
        %v640 = vpack.c.b16 %v600, %v596
        %v641 = vpack.c.b16 %v601, %v597
        %v642 = vpack.c.b16 %v606, %v602
        %v643 = vpack.c.b16 %v607, %v603
        %v644 = vpack.c.b16 %v608, %v604
        %v645 = vpack.c.b16 %v609, %v605
        %v646 = vpack.c.b16 %v614, %v610
        %v647 = vpack.c.b16 %v615, %v611
        %v648 = vpack.c.b16 %v616, %v612
        %v649 = vpack.c.b16 %v617, %v613
        %682 = vmatprep.subr.bf16.mxu0 %v647
        %683 = vmatpush1.bf16.msra.mxu0 %v646
        %684 = vmatprep.subr.bf16.mxu0 %v643
        %685 = vmatpush1.bf16.msra.mxu0 %v642
        %686 = vmatprep.subr.bf16.mxu0 %v639
        %687 = vmatpush1.bf16.msra.mxu0 %v638
        %688 = vmatprep.subr.bf16.mxu0 %v635
        %689 = vmatpush1.bf16.msra.mxu0 %v634
        %690 = vmatprep.subr.bf16.mxu0 %v631
        %691 = vmatpush1.bf16.msra.mxu0 %v630
        %692 = vmatprep.subr.bf16.mxu0 %v627
        %693 = vmatpush1.bf16.msra.mxu0 %v626
        %694 = vmatprep.subr.bf16.mxu0 %v623
        %695 = vmatpush1.bf16.msra.mxu0 %v622
        %696 = vmatprep.subr.bf16.mxu0 %v619
        %697 = vmatpush1.bf16.msra.mxu0 %v618
        %698 = vmatprep.subr.bf16.mxu0 0
        %699 = vmatpush2.bf16.msra.mxu0 0
        %700 = vmatprep.subr.bf16.mxu0 0
        %701 = vmatpush2.bf16.msra.mxu0 0
        %702 = vmatprep.subr.bf16.mxu0 0
        %703 = vmatpush2.bf16.msra.mxu0 0
        %704 = vmatprep.subr.bf16.mxu0 0
        %705 = vmatpush2.bf16.msra.mxu0 0
        %706 = vmatprep.subr.bf16.mxu0 0
        %707 = vmatpush2.bf16.msra.mxu0 0
        %708 = vmatprep.subr.bf16.mxu0 0
        %709 = vmatpush2.bf16.msra.mxu0 0
        %710 = vmatprep.subr.bf16.mxu0 0
        %711 = vmatpush2.bf16.msra.mxu0 0
        %712 = vmatprep.subr.bf16.mxu0 0
        %713 = vmatpush2.bf16.msra.mxu0 0
        %714 = vmatprep.mubr.bf16.mxu0 0
        %715 = vmatmul.mubr.bf16.gmra.mxu0 %v521
        %v716 = vpop.f32.mrf.mxu0
        %v717 = vadd.f32 0.0, %v716
        %v718 = vpop.f32.mrf.mxu0
        %v719 = vadd.f32 0.0, %v718
        %v720 = vpop.f32.mrf.mxu0
        %v721 = vpop.f32.mrf.mxu0
        %722 = vdwg.mxu0
        %723 = vmatprep.subr.bf16.mxu0 %v649
        %724 = vmatpush1.bf16.msra.mxu0 %v648
        %725 = vmatprep.subr.bf16.mxu0 %v645
        %726 = vmatpush1.bf16.msra.mxu0 %v644
        %727 = vmatprep.subr.bf16.mxu0 %v641
        %728 = vmatpush1.bf16.msra.mxu0 %v640
        %729 = vmatprep.subr.bf16.mxu0 %v637
        %730 = vmatpush1.bf16.msra.mxu0 %v636
        %731 = vmatprep.subr.bf16.mxu0 %v633
        %732 = vmatpush1.bf16.msra.mxu0 %v632
        %733 = vmatprep.subr.bf16.mxu0 %v629
        %734 = vmatpush1.bf16.msra.mxu0 %v628
        %735 = vmatprep.subr.bf16.mxu0 %v625
        %736 = vmatpush1.bf16.msra.mxu0 %v624
        %737 = vmatprep.subr.bf16.mxu0 %v621
        %738 = vmatpush1.bf16.msra.mxu0 %v620
        %739 = vmatprep.subr.bf16.mxu0 0
        %740 = vmatpush2.bf16.msra.mxu0 0
        %741 = vmatprep.subr.bf16.mxu0 0
        %742 = vmatpush2.bf16.msra.mxu0 0
        %743 = vmatprep.subr.bf16.mxu0 0
        %744 = vmatpush2.bf16.msra.mxu0 0
        %745 = vmatprep.subr.bf16.mxu0 0
        %746 = vmatpush2.bf16.msra.mxu0 0
        %747 = vmatprep.subr.bf16.mxu0 0
        %748 = vmatpush2.bf16.msra.mxu0 0
        %749 = vmatprep.subr.bf16.mxu0 0
        %750 = vmatpush2.bf16.msra.mxu0 0
        %751 = vmatprep.subr.bf16.mxu0 0
        %752 = vmatpush2.bf16.msra.mxu0 0
        %753 = vmatprep.subr.bf16.mxu0 0
        %754 = vmatpush2.bf16.msra.mxu0 0
        %755 = vmatprep.mubr.bf16.mxu0 0
        %756 = vmatmul.mubr.bf16.gmra.mxu0 %v521
        %v757 = vpop.f32.mrf.mxu0
        %v758 = vadd.f32 0.0, %v757
        %v759 = vpop.f32.mrf.mxu0
        %v760 = vadd.f32 0.0, %v759
        %v761 = vpop.f32.mrf.mxu0
        %v762 = vpop.f32.mrf.mxu0
        %763 = vdwg.mxu0
        %v764 = vadd.f32 %v408, %v717
        %v765 = vadd.f32 %v410, %v719
        %v766 = vadd.f32 %v481, %v758
        %v767 = vadd.f32 %v483, %v760
        %v769 = vlaneseq
        %v770 = vshrl.u32 %v769, 7
        %v771 = vsub.s32 0, %v770
        %v772 = vrot.slane %v322, %v771
        %v773 = vlaneseq
        %v774 = vshrl.u32 %v773, 7
        %v775 = vsub.s32 1, %v774
        %v776 = vrot.slane %v322, %v775
        %v777 = vlaneseq
        %v778 = vshrl.u32 %v777, 7
        %v779 = vsub.s32 2, %v778
        %v780 = vrot.slane %v322, %v779
        %v781 = vlaneseq
        %v782 = vshrl.u32 %v781, 7
        %v783 = vsub.s32 3, %v782
        %v784 = vrot.slane %v322, %v783
        %v789 = vadd.f32 %v764, %v772
        %v790 = vadd.f32 %v765, %v776
        %v791 = vadd.f32 %v766, %v780
        %v792 = vadd.f32 %v767, %v784
        %v793 = vmul.f32 %v789, 0.5
        %v794 = vtanh.pop %v793
        %v795 = vmul.f32 %v794, 0.5
        %v796 = vadd.f32 %v795, 0.5
        %v797 = vmul.f32 %v790, 0.5
        %v798 = vtanh.pop %v797
        %v799 = vmul.f32 %v798, 0.5
        %v800 = vadd.f32 %v799, 0.5
        %v801 = vtanh.pop %v791
        %v802 = vmul.f32 %v792, 0.5
        %v803 = vtanh.pop %v802
        %v804 = vmul.f32 %v803, 0.5
        %v805 = vadd.f32 %v804, 0.5
        %v806 = vmul.f32 %v800, %v520
        %v807 = vmul.f32 %v796, %v801
        %v808 = vadd.f32 %v806, %v807
        %v809 = vtanh.pop %v808
        %v810 = vmul.f32 %v805, %v809
        %v811 = vpack.c.bf16 %v810, %v810
        %812 = vmatprep.subr.bf16.mxu0 %v647
        %813 = vmatpush1.bf16.msra.mxu0 %v646
        %814 = vmatprep.subr.bf16.mxu0 %v643
        %815 = vmatpush1.bf16.msra.mxu0 %v642
        %816 = vmatprep.subr.bf16.mxu0 %v639
        %817 = vmatpush1.bf16.msra.mxu0 %v638
        %818 = vmatprep.subr.bf16.mxu0 %v635
        %819 = vmatpush1.bf16.msra.mxu0 %v634
        %820 = vmatprep.subr.bf16.mxu0 %v631
        %821 = vmatpush1.bf16.msra.mxu0 %v630
        %822 = vmatprep.subr.bf16.mxu0 %v627
        %823 = vmatpush1.bf16.msra.mxu0 %v626
        %824 = vmatprep.subr.bf16.mxu0 %v623
        %825 = vmatpush1.bf16.msra.mxu0 %v622
        %826 = vmatprep.subr.bf16.mxu0 %v619
        %827 = vmatpush1.bf16.msra.mxu0 %v618
        %828 = vmatprep.subr.bf16.mxu0 0
        %829 = vmatpush2.bf16.msra.mxu0 0
        %830 = vmatprep.subr.bf16.mxu0 0
        %831 = vmatpush2.bf16.msra.mxu0 0
        %832 = vmatprep.subr.bf16.mxu0 0
        %833 = vmatpush2.bf16.msra.mxu0 0
        %834 = vmatprep.subr.bf16.mxu0 0
        %835 = vmatpush2.bf16.msra.mxu0 0
        %836 = vmatprep.subr.bf16.mxu0 0
        %837 = vmatpush2.bf16.msra.mxu0 0
        %838 = vmatprep.subr.bf16.mxu0 0
        %839 = vmatpush2.bf16.msra.mxu0 0
        %840 = vmatprep.subr.bf16.mxu0 0
        %841 = vmatpush2.bf16.msra.mxu0 0
        %842 = vmatprep.subr.bf16.mxu0 0
        %843 = vmatpush2.bf16.msra.mxu0 0
        %844 = vmatprep.mubr.bf16.mxu0 0
        %845 = vmatmul.mubr.bf16.gmra.mxu0 %v811
        %v846 = vpop.f32.mrf.mxu0
        %v847 = vadd.f32 0.0, %v846
        %v848 = vpop.f32.mrf.mxu0
        %v849 = vadd.f32 0.0, %v848
        %v850 = vpop.f32.mrf.mxu0
        %v851 = vpop.f32.mrf.mxu0
        %852 = vdwg.mxu0
        %853 = vmatprep.subr.bf16.mxu0 %v649
        %854 = vmatpush1.bf16.msra.mxu0 %v648
        %855 = vmatprep.subr.bf16.mxu0 %v645
        %856 = vmatpush1.bf16.msra.mxu0 %v644
        %857 = vmatprep.subr.bf16.mxu0 %v641
        %858 = vmatpush1.bf16.msra.mxu0 %v640
        %859 = vmatprep.subr.bf16.mxu0 %v637
        %860 = vmatpush1.bf16.msra.mxu0 %v636
        %861 = vmatprep.subr.bf16.mxu0 %v633
        %862 = vmatpush1.bf16.msra.mxu0 %v632
        %863 = vmatprep.subr.bf16.mxu0 %v629
        %864 = vmatpush1.bf16.msra.mxu0 %v628
        %865 = vmatprep.subr.bf16.mxu0 %v625
        %866 = vmatpush1.bf16.msra.mxu0 %v624
        %867 = vmatprep.subr.bf16.mxu0 %v621
        %868 = vmatpush1.bf16.msra.mxu0 %v620
        %869 = vmatprep.subr.bf16.mxu0 0
        %870 = vmatpush2.bf16.msra.mxu0 0
        %871 = vmatprep.subr.bf16.mxu0 0
        %872 = vmatpush2.bf16.msra.mxu0 0
        %873 = vmatprep.subr.bf16.mxu0 0
        %874 = vmatpush2.bf16.msra.mxu0 0
        %875 = vmatprep.subr.bf16.mxu0 0
        %876 = vmatpush2.bf16.msra.mxu0 0
        %877 = vmatprep.subr.bf16.mxu0 0
        %878 = vmatpush2.bf16.msra.mxu0 0
        %879 = vmatprep.subr.bf16.mxu0 0
        %880 = vmatpush2.bf16.msra.mxu0 0
        %881 = vmatprep.subr.bf16.mxu0 0
        %882 = vmatpush2.bf16.msra.mxu0 0
        %883 = vmatprep.subr.bf16.mxu0 0
        %884 = vmatpush2.bf16.msra.mxu0 0
        %885 = vmatprep.mubr.bf16.mxu0 0
        %886 = vmatmul.mubr.bf16.gmra.mxu0 %v811
        %v887 = vpop.f32.mrf.mxu0
        %v888 = vadd.f32 0.0, %v887
        %v889 = vpop.f32.mrf.mxu0
        %v890 = vadd.f32 0.0, %v889
        %v891 = vpop.f32.mrf.mxu0
        %v892 = vpop.f32.mrf.mxu0
        %893 = vdwg.mxu0
        %v894 = vadd.f32 %v412, %v847
        %v895 = vadd.f32 %v414, %v849
        %v896 = vadd.f32 %v485, %v888
        %v897 = vadd.f32 %v487, %v890
        %v898 = vadd.f32 %v894, %v772
        %v899 = vadd.f32 %v895, %v776
        %v900 = vadd.f32 %v896, %v780
        %v901 = vadd.f32 %v897, %v784
        %v902 = vmul.f32 %v898, 0.5
        %v903 = vtanh.pop %v902
        %v904 = vmul.f32 %v903, 0.5
        %v905 = vadd.f32 %v904, 0.5
        %v906 = vmul.f32 %v899, 0.5
        %v907 = vtanh.pop %v906
        %v908 = vmul.f32 %v907, 0.5
        %v909 = vadd.f32 %v908, 0.5
        %v910 = vtanh.pop %v900
        %v911 = vmul.f32 %v901, 0.5
        %v912 = vtanh.pop %v911
        %v913 = vmul.f32 %v912, 0.5
        %v914 = vadd.f32 %v913, 0.5
        %v915 = vmul.f32 %v909, %v808
        %v916 = vmul.f32 %v905, %v910
        %v917 = vadd.f32 %v915, %v916
        %v918 = vtanh.pop %v917
        %v919 = vmul.f32 %v914, %v918
        %v920 = vpack.c.bf16 %v919, %v919
        %921 = vmatprep.subr.bf16.mxu0 %v647
        %922 = vmatpush1.bf16.msra.mxu0 %v646
        %923 = vmatprep.subr.bf16.mxu0 %v643
        %924 = vmatpush1.bf16.msra.mxu0 %v642
        %925 = vmatprep.subr.bf16.mxu0 %v639
        %926 = vmatpush1.bf16.msra.mxu0 %v638
        %927 = vmatprep.subr.bf16.mxu0 %v635
        %928 = vmatpush1.bf16.msra.mxu0 %v634
        %929 = vmatprep.subr.bf16.mxu0 %v631
        %930 = vmatpush1.bf16.msra.mxu0 %v630
        %931 = vmatprep.subr.bf16.mxu0 %v627
        %932 = vmatpush1.bf16.msra.mxu0 %v626
        %933 = vmatprep.subr.bf16.mxu0 %v623
        %934 = vmatpush1.bf16.msra.mxu0 %v622
        %935 = vmatprep.subr.bf16.mxu0 %v619
        %936 = vmatpush1.bf16.msra.mxu0 %v618
        %937 = vmatprep.subr.bf16.mxu0 0
        %938 = vmatpush2.bf16.msra.mxu0 0
        %939 = vmatprep.subr.bf16.mxu0 0
        %940 = vmatpush2.bf16.msra.mxu0 0
        %941 = vmatprep.subr.bf16.mxu0 0
        %942 = vmatpush2.bf16.msra.mxu0 0
        %943 = vmatprep.subr.bf16.mxu0 0
        %944 = vmatpush2.bf16.msra.mxu0 0
        %945 = vmatprep.subr.bf16.mxu0 0
        %946 = vmatpush2.bf16.msra.mxu0 0
        %947 = vmatprep.subr.bf16.mxu0 0
        %948 = vmatpush2.bf16.msra.mxu0 0
        %949 = vmatprep.subr.bf16.mxu0 0
        %950 = vmatpush2.bf16.msra.mxu0 0
        %951 = vmatprep.subr.bf16.mxu0 0
        %952 = vmatpush2.bf16.msra.mxu0 0
        %953 = vmatprep.mubr.bf16.mxu0 0
        %954 = vmatmul.mubr.bf16.gmra.mxu0 %v920
        %v955 = vpop.f32.mrf.mxu0
        %v956 = vadd.f32 0.0, %v955
        %v957 = vpop.f32.mrf.mxu0
        %v958 = vadd.f32 0.0, %v957
        %v959 = vpop.f32.mrf.mxu0
        %v960 = vpop.f32.mrf.mxu0
        %961 = vdwg.mxu0
        %962 = vmatprep.subr.bf16.mxu0 %v649
        %963 = vmatpush1.bf16.msra.mxu0 %v648
        %964 = vmatprep.subr.bf16.mxu0 %v645
        %965 = vmatpush1.bf16.msra.mxu0 %v644
        %966 = vmatprep.subr.bf16.mxu0 %v641
        %967 = vmatpush1.bf16.msra.mxu0 %v640
        %968 = vmatprep.subr.bf16.mxu0 %v637
        %969 = vmatpush1.bf16.msra.mxu0 %v636
        %970 = vmatprep.subr.bf16.mxu0 %v633
        %971 = vmatpush1.bf16.msra.mxu0 %v632
        %972 = vmatprep.subr.bf16.mxu0 %v629
        %973 = vmatpush1.bf16.msra.mxu0 %v628
        %974 = vmatprep.subr.bf16.mxu0 %v625
        %975 = vmatpush1.bf16.msra.mxu0 %v624
        %976 = vmatprep.subr.bf16.mxu0 %v621
        %977 = vmatpush1.bf16.msra.mxu0 %v620
        %978 = vmatprep.subr.bf16.mxu0 0
        %979 = vmatpush2.bf16.msra.mxu0 0
        %980 = vmatprep.subr.bf16.mxu0 0
        %981 = vmatpush2.bf16.msra.mxu0 0
        %982 = vmatprep.subr.bf16.mxu0 0
        %983 = vmatpush2.bf16.msra.mxu0 0
        %984 = vmatprep.subr.bf16.mxu0 0
        %985 = vmatpush2.bf16.msra.mxu0 0
        %986 = vmatprep.subr.bf16.mxu0 0
        %987 = vmatpush2.bf16.msra.mxu0 0
        %988 = vmatprep.subr.bf16.mxu0 0
        %989 = vmatpush2.bf16.msra.mxu0 0
        %990 = vmatprep.subr.bf16.mxu0 0
        %991 = vmatpush2.bf16.msra.mxu0 0
        %992 = vmatprep.subr.bf16.mxu0 0
        %993 = vmatpush2.bf16.msra.mxu0 0
        %994 = vmatprep.mubr.bf16.mxu0 0
        %995 = vmatmul.mubr.bf16.gmra.mxu0 %v920
        %v996 = vpop.f32.mrf.mxu0
        %v997 = vadd.f32 0.0, %v996
        %v998 = vpop.f32.mrf.mxu0
        %v999 = vadd.f32 0.0, %v998
        %v1000 = vpop.f32.mrf.mxu0
        %v1001 = vpop.f32.mrf.mxu0
        %1002 = vdwg.mxu0
        %v1003 = vadd.f32 %v418, %v956
        %v1004 = vadd.f32 %v420, %v958
        %v1005 = vadd.f32 %v491, %v997
        %v1006 = vadd.f32 %v493, %v999
        %v1007 = vadd.f32 %v1003, %v772
        %v1008 = vadd.f32 %v1004, %v776
        %v1009 = vadd.f32 %v1005, %v780
        %v1010 = vadd.f32 %v1006, %v784
        %v1011 = vmul.f32 %v1007, 0.5
        %v1012 = vtanh.pop %v1011
        %v1013 = vmul.f32 %v1012, 0.5
        %v1014 = vadd.f32 %v1013, 0.5
        %v1015 = vmul.f32 %v1008, 0.5
        %v1016 = vtanh.pop %v1015
        %v1017 = vmul.f32 %v1016, 0.5
        %v1018 = vadd.f32 %v1017, 0.5
        %v1019 = vtanh.pop %v1009
        %v1020 = vmul.f32 %v1010, 0.5
        %v1021 = vtanh.pop %v1020
        %v1022 = vmul.f32 %v1021, 0.5
        %v1023 = vadd.f32 %v1022, 0.5
        %v1024 = vmul.f32 %v1018, %v917
        %v1025 = vmul.f32 %v1014, %v1019
        %v1026 = vadd.f32 %v1024, %v1025
        %v1027 = vtanh.pop %v1026
        %v1028 = vmul.f32 %v1023, %v1027
        %v1029 = vpack.c.bf16 %v1028, %v1028
        %1030 = vmatprep.subr.bf16.mxu0 %v647
        %1031 = vmatpush1.bf16.msra.mxu0 %v646
        %1032 = vmatprep.subr.bf16.mxu0 %v643
        %1033 = vmatpush1.bf16.msra.mxu0 %v642
        %1034 = vmatprep.subr.bf16.mxu0 %v639
        %1035 = vmatpush1.bf16.msra.mxu0 %v638
        %1036 = vmatprep.subr.bf16.mxu0 %v635
        %1037 = vmatpush1.bf16.msra.mxu0 %v634
        %1038 = vmatprep.subr.bf16.mxu0 %v631
        %1039 = vmatpush1.bf16.msra.mxu0 %v630
        %1040 = vmatprep.subr.bf16.mxu0 %v627
        %1041 = vmatpush1.bf16.msra.mxu0 %v626
        %1042 = vmatprep.subr.bf16.mxu0 %v623
        %1043 = vmatpush1.bf16.msra.mxu0 %v622
        %1044 = vmatprep.subr.bf16.mxu0 %v619
        %1045 = vmatpush1.bf16.msra.mxu0 %v618
        %1046 = vmatprep.subr.bf16.mxu0 0
        %1047 = vmatpush2.bf16.msra.mxu0 0
        %1048 = vmatprep.subr.bf16.mxu0 0
        %1049 = vmatpush2.bf16.msra.mxu0 0
        %1050 = vmatprep.subr.bf16.mxu0 0
        %1051 = vmatpush2.bf16.msra.mxu0 0
        %1052 = vmatprep.subr.bf16.mxu0 0
        %1053 = vmatpush2.bf16.msra.mxu0 0
        %1054 = vmatprep.subr.bf16.mxu0 0
        %1055 = vmatpush2.bf16.msra.mxu0 0
        %1056 = vmatprep.subr.bf16.mxu0 0
        %1057 = vmatpush2.bf16.msra.mxu0 0
        %1058 = vmatprep.subr.bf16.mxu0 0
        %1059 = vmatpush2.bf16.msra.mxu0 0
        %1060 = vmatprep.subr.bf16.mxu0 0
        %1061 = vmatpush2.bf16.msra.mxu0 0
        %1062 = vmatprep.mubr.bf16.mxu0 0
        %1063 = vmatmul.mubr.bf16.gmra.mxu0 %v1029
        %v1064 = vpop.f32.mrf.mxu0
        %v1065 = vadd.f32 0.0, %v1064
        %v1066 = vpop.f32.mrf.mxu0
        %v1067 = vadd.f32 0.0, %v1066
        %v1068 = vpop.f32.mrf.mxu0
        %v1069 = vpop.f32.mrf.mxu0
        %1070 = vdwg.mxu0
        %1071 = vmatprep.subr.bf16.mxu0 %v649
        %1072 = vmatpush1.bf16.msra.mxu0 %v648
        %1073 = vmatprep.subr.bf16.mxu0 %v645
        %1074 = vmatpush1.bf16.msra.mxu0 %v644
        %1075 = vmatprep.subr.bf16.mxu0 %v641
        %1076 = vmatpush1.bf16.msra.mxu0 %v640
        %1077 = vmatprep.subr.bf16.mxu0 %v637
        %1078 = vmatpush1.bf16.msra.mxu0 %v636
        %1079 = vmatprep.subr.bf16.mxu0 %v633
        %1080 = vmatpush1.bf16.msra.mxu0 %v632
        %1081 = vmatprep.subr.bf16.mxu0 %v629
        %1082 = vmatpush1.bf16.msra.mxu0 %v628
        %1083 = vmatprep.subr.bf16.mxu0 %v625
        %1084 = vmatpush1.bf16.msra.mxu0 %v624
        %1085 = vmatprep.subr.bf16.mxu0 %v621
        %1086 = vmatpush1.bf16.msra.mxu0 %v620
        %1087 = vmatprep.subr.bf16.mxu0 0
        %1088 = vmatpush2.bf16.msra.mxu0 0
        %1089 = vmatprep.subr.bf16.mxu0 0
        %1090 = vmatpush2.bf16.msra.mxu0 0
        %1091 = vmatprep.subr.bf16.mxu0 0
        %1092 = vmatpush2.bf16.msra.mxu0 0
        %1093 = vmatprep.subr.bf16.mxu0 0
        %1094 = vmatpush2.bf16.msra.mxu0 0
        %1095 = vmatprep.subr.bf16.mxu0 0
        %1096 = vmatpush2.bf16.msra.mxu0 0
        %1097 = vmatprep.subr.bf16.mxu0 0
        %1098 = vmatpush2.bf16.msra.mxu0 0
        %1099 = vmatprep.subr.bf16.mxu0 0
        %1100 = vmatpush2.bf16.msra.mxu0 0
        %1101 = vmatprep.subr.bf16.mxu0 0
        %1102 = vmatpush2.bf16.msra.mxu0 0
        %1103 = vmatprep.mubr.bf16.mxu0 0
        %1104 = vmatmul.mubr.bf16.gmra.mxu0 %v1029
        %v1105 = vpop.f32.mrf.mxu0
        %v1106 = vadd.f32 0.0, %v1105
        %v1107 = vpop.f32.mrf.mxu0
        %v1108 = vadd.f32 0.0, %v1107
        %v1109 = vpop.f32.mrf.mxu0
        %v1110 = vpop.f32.mrf.mxu0
        %1111 = vdwg.mxu0
        %v1112 = vadd.f32 %v422, %v1065
        %v1113 = vadd.f32 %v424, %v1067
        %v1114 = vadd.f32 %v495, %v1106
        %v1115 = vadd.f32 %v497, %v1108
        %v1116 = vadd.f32 %v1112, %v772
        %v1117 = vadd.f32 %v1113, %v776
        %v1118 = vadd.f32 %v1114, %v780
        %v1119 = vadd.f32 %v1115, %v784
        %v1120 = vmul.f32 %v1116, 0.5
        %v1121 = vtanh.pop %v1120
        %v1122 = vmul.f32 %v1121, 0.5
        %v1123 = vadd.f32 %v1122, 0.5
        %v1124 = vmul.f32 %v1117, 0.5
        %v1125 = vtanh.pop %v1124
        %v1126 = vmul.f32 %v1125, 0.5
        %v1127 = vadd.f32 %v1126, 0.5
        %v1128 = vtanh.pop %v1118
        %v1129 = vmul.f32 %v1119, 0.5
        %v1130 = vtanh.pop %v1129
        %v1131 = vmul.f32 %v1130, 0.5
        %v1132 = vadd.f32 %v1131, 0.5
        %v1133 = vmul.f32 %v1127, %v1026
        %v1134 = vmul.f32 %v1123, %v1128
        %v1135 = vadd.f32 %v1133, %v1134
        %v1136 = vtanh.pop %v1135
        %v1137 = vmul.f32 %v1132, %v1136
        %v1138 = vpack.c.bf16 %v1137, %v1137
        %1139 = vmatprep.subr.bf16.mxu0 %v647
        %1140 = vmatpush1.bf16.msra.mxu0 %v646
        %1141 = vmatprep.subr.bf16.mxu0 %v643
        %1142 = vmatpush1.bf16.msra.mxu0 %v642
        %1143 = vmatprep.subr.bf16.mxu0 %v639
        %1144 = vmatpush1.bf16.msra.mxu0 %v638
        %1145 = vmatprep.subr.bf16.mxu0 %v635
        %1146 = vmatpush1.bf16.msra.mxu0 %v634
        %1147 = vmatprep.subr.bf16.mxu0 %v631
        %1148 = vmatpush1.bf16.msra.mxu0 %v630
        %1149 = vmatprep.subr.bf16.mxu0 %v627
        %1150 = vmatpush1.bf16.msra.mxu0 %v626
        %1151 = vmatprep.subr.bf16.mxu0 %v623
        %1152 = vmatpush1.bf16.msra.mxu0 %v622
        %1153 = vmatprep.subr.bf16.mxu0 %v619
        %1154 = vmatpush1.bf16.msra.mxu0 %v618
        %1155 = vmatprep.subr.bf16.mxu0 0
        %1156 = vmatpush2.bf16.msra.mxu0 0
        %1157 = vmatprep.subr.bf16.mxu0 0
        %1158 = vmatpush2.bf16.msra.mxu0 0
        %1159 = vmatprep.subr.bf16.mxu0 0
        %1160 = vmatpush2.bf16.msra.mxu0 0
        %1161 = vmatprep.subr.bf16.mxu0 0
        %1162 = vmatpush2.bf16.msra.mxu0 0
        %1163 = vmatprep.subr.bf16.mxu0 0
        %1164 = vmatpush2.bf16.msra.mxu0 0
        %1165 = vmatprep.subr.bf16.mxu0 0
        %1166 = vmatpush2.bf16.msra.mxu0 0
        %1167 = vmatprep.subr.bf16.mxu0 0
        %1168 = vmatpush2.bf16.msra.mxu0 0
        %1169 = vmatprep.subr.bf16.mxu0 0
        %1170 = vmatpush2.bf16.msra.mxu0 0
        %1171 = vmatprep.mubr.bf16.mxu0 0
        %1172 = vmatmul.mubr.bf16.gmra.mxu0 %v1138
        %v1173 = vpop.f32.mrf.mxu0
        %v1174 = vadd.f32 0.0, %v1173
        %v1175 = vpop.f32.mrf.mxu0
        %v1176 = vadd.f32 0.0, %v1175
        %v1177 = vpop.f32.mrf.mxu0
        %v1178 = vpop.f32.mrf.mxu0
        %1179 = vdwg.mxu0
        %1180 = vmatprep.subr.bf16.mxu0 %v649
        %1181 = vmatpush1.bf16.msra.mxu0 %v648
        %1182 = vmatprep.subr.bf16.mxu0 %v645
        %1183 = vmatpush1.bf16.msra.mxu0 %v644
        %1184 = vmatprep.subr.bf16.mxu0 %v641
        %1185 = vmatpush1.bf16.msra.mxu0 %v640
        %1186 = vmatprep.subr.bf16.mxu0 %v637
        %1187 = vmatpush1.bf16.msra.mxu0 %v636
        %1188 = vmatprep.subr.bf16.mxu0 %v633
        %1189 = vmatpush1.bf16.msra.mxu0 %v632
        %1190 = vmatprep.subr.bf16.mxu0 %v629
        %1191 = vmatpush1.bf16.msra.mxu0 %v628
        %1192 = vmatprep.subr.bf16.mxu0 %v625
        %1193 = vmatpush1.bf16.msra.mxu0 %v624
        %1194 = vmatprep.subr.bf16.mxu0 %v621
        %1195 = vmatpush1.bf16.msra.mxu0 %v620
        %1196 = vmatprep.subr.bf16.mxu0 0
        %1197 = vmatpush2.bf16.msra.mxu0 0
        %1198 = vmatprep.subr.bf16.mxu0 0
        %1199 = vmatpush2.bf16.msra.mxu0 0
        %1200 = vmatprep.subr.bf16.mxu0 0
        %1201 = vmatpush2.bf16.msra.mxu0 0
        %1202 = vmatprep.subr.bf16.mxu0 0
        %1203 = vmatpush2.bf16.msra.mxu0 0
        %1204 = vmatprep.subr.bf16.mxu0 0
        %1205 = vmatpush2.bf16.msra.mxu0 0
        %1206 = vmatprep.subr.bf16.mxu0 0
        %1207 = vmatpush2.bf16.msra.mxu0 0
        %1208 = vmatprep.subr.bf16.mxu0 0
        %1209 = vmatpush2.bf16.msra.mxu0 0
        %1210 = vmatprep.subr.bf16.mxu0 0
        %1211 = vmatpush2.bf16.msra.mxu0 0
        %1212 = vmatprep.mubr.bf16.mxu0 0
        %1213 = vmatmul.mubr.bf16.gmra.mxu0 %v1138
        %v1214 = vpop.f32.mrf.mxu0
        %v1215 = vadd.f32 0.0, %v1214
        %v1216 = vpop.f32.mrf.mxu0
        %v1217 = vadd.f32 0.0, %v1216
        %v1218 = vpop.f32.mrf.mxu0
        %v1219 = vpop.f32.mrf.mxu0
        %1220 = vdwg.mxu0
        %v1221 = vadd.f32 %v428, %v1174
        %v1222 = vadd.f32 %v430, %v1176
        %v1223 = vadd.f32 %v501, %v1215
        %v1224 = vadd.f32 %v503, %v1217
        %v1225 = vadd.f32 %v1221, %v772
        %v1226 = vadd.f32 %v1222, %v776
        %v1227 = vadd.f32 %v1223, %v780
        %v1228 = vadd.f32 %v1224, %v784
        %v1229 = vmul.f32 %v1225, 0.5
        %v1230 = vtanh.pop %v1229
        %v1231 = vmul.f32 %v1230, 0.5
        %v1232 = vadd.f32 %v1231, 0.5
        %v1233 = vmul.f32 %v1226, 0.5
        %v1234 = vtanh.pop %v1233
        %v1235 = vmul.f32 %v1234, 0.5
        %v1236 = vadd.f32 %v1235, 0.5
        %v1237 = vtanh.pop %v1227
        %v1238 = vmul.f32 %v1228, 0.5
        %v1239 = vtanh.pop %v1238
        %v1240 = vmul.f32 %v1239, 0.5
        %v1241 = vadd.f32 %v1240, 0.5
        %v1242 = vmul.f32 %v1236, %v1135
        %v1243 = vmul.f32 %v1232, %v1237
        %v1244 = vadd.f32 %v1242, %v1243
        %v1245 = vtanh.pop %v1244
        %v1246 = vmul.f32 %v1241, %v1245
        %v1247 = vpack.c.bf16 %v1246, %v1246
        %1248 = vmatprep.subr.bf16.mxu0 %v647
        %1249 = vmatpush1.bf16.msra.mxu0 %v646
        %1250 = vmatprep.subr.bf16.mxu0 %v643
        %1251 = vmatpush1.bf16.msra.mxu0 %v642
        %1252 = vmatprep.subr.bf16.mxu0 %v639
        %1253 = vmatpush1.bf16.msra.mxu0 %v638
        %1254 = vmatprep.subr.bf16.mxu0 %v635
        %1255 = vmatpush1.bf16.msra.mxu0 %v634
        %1256 = vmatprep.subr.bf16.mxu0 %v631
        %1257 = vmatpush1.bf16.msra.mxu0 %v630
        %1258 = vmatprep.subr.bf16.mxu0 %v627
        %1259 = vmatpush1.bf16.msra.mxu0 %v626
        %1260 = vmatprep.subr.bf16.mxu0 %v623
        %1261 = vmatpush1.bf16.msra.mxu0 %v622
        %1262 = vmatprep.subr.bf16.mxu0 %v619
        %1263 = vmatpush1.bf16.msra.mxu0 %v618
        %1264 = vmatprep.subr.bf16.mxu0 0
        %1265 = vmatpush2.bf16.msra.mxu0 0
        %1266 = vmatprep.subr.bf16.mxu0 0
        %1267 = vmatpush2.bf16.msra.mxu0 0
        %1268 = vmatprep.subr.bf16.mxu0 0
        %1269 = vmatpush2.bf16.msra.mxu0 0
        %1270 = vmatprep.subr.bf16.mxu0 0
        %1271 = vmatpush2.bf16.msra.mxu0 0
        %1272 = vmatprep.subr.bf16.mxu0 0
        %1273 = vmatpush2.bf16.msra.mxu0 0
        %1274 = vmatprep.subr.bf16.mxu0 0
        %1275 = vmatpush2.bf16.msra.mxu0 0
        %1276 = vmatprep.subr.bf16.mxu0 0
        %1277 = vmatpush2.bf16.msra.mxu0 0
        %1278 = vmatprep.subr.bf16.mxu0 0
        %1279 = vmatpush2.bf16.msra.mxu0 0
        %1280 = vmatprep.mubr.bf16.mxu0 0
        %1281 = vmatmul.mubr.bf16.gmra.mxu0 %v1247
        %v1282 = vpop.f32.mrf.mxu0
        %v1283 = vadd.f32 0.0, %v1282
        %v1284 = vpop.f32.mrf.mxu0
        %v1285 = vadd.f32 0.0, %v1284
        %v1286 = vpop.f32.mrf.mxu0
        %v1287 = vpop.f32.mrf.mxu0
        %1288 = vdwg.mxu0
        %1289 = vmatprep.subr.bf16.mxu0 %v649
        %1290 = vmatpush1.bf16.msra.mxu0 %v648
        %1291 = vmatprep.subr.bf16.mxu0 %v645
        %1292 = vmatpush1.bf16.msra.mxu0 %v644
        %1293 = vmatprep.subr.bf16.mxu0 %v641
        %1294 = vmatpush1.bf16.msra.mxu0 %v640
        %1295 = vmatprep.subr.bf16.mxu0 %v637
        %1296 = vmatpush1.bf16.msra.mxu0 %v636
        %1297 = vmatprep.subr.bf16.mxu0 %v633
        %1298 = vmatpush1.bf16.msra.mxu0 %v632
        %1299 = vmatprep.subr.bf16.mxu0 %v629
        %1300 = vmatpush1.bf16.msra.mxu0 %v628
        %1301 = vmatprep.subr.bf16.mxu0 %v625
        %1302 = vmatpush1.bf16.msra.mxu0 %v624
        %1303 = vmatprep.subr.bf16.mxu0 %v621
        %1304 = vmatpush1.bf16.msra.mxu0 %v620
        %1305 = vmatprep.subr.bf16.mxu0 0
        %1306 = vmatpush2.bf16.msra.mxu0 0
        %1307 = vmatprep.subr.bf16.mxu0 0
        %1308 = vmatpush2.bf16.msra.mxu0 0
        %1309 = vmatprep.subr.bf16.mxu0 0
        %1310 = vmatpush2.bf16.msra.mxu0 0
        %1311 = vmatprep.subr.bf16.mxu0 0
        %1312 = vmatpush2.bf16.msra.mxu0 0
        %1313 = vmatprep.subr.bf16.mxu0 0
        %1314 = vmatpush2.bf16.msra.mxu0 0
        %1315 = vmatprep.subr.bf16.mxu0 0
        %1316 = vmatpush2.bf16.msra.mxu0 0
        %1317 = vmatprep.subr.bf16.mxu0 0
        %1318 = vmatpush2.bf16.msra.mxu0 0
        %1319 = vmatprep.subr.bf16.mxu0 0
        %1320 = vmatpush2.bf16.msra.mxu0 0
        %1321 = vmatprep.mubr.bf16.mxu0 0
        %1322 = vmatmul.mubr.bf16.gmra.mxu0 %v1247
        %v1323 = vpop.f32.mrf.mxu0
        %v1324 = vadd.f32 0.0, %v1323
        %v1325 = vpop.f32.mrf.mxu0
        %v1326 = vadd.f32 0.0, %v1325
        %v1327 = vpop.f32.mrf.mxu0
        %v1328 = vpop.f32.mrf.mxu0
        %1329 = vdwg.mxu0
        %v1330 = vadd.f32 %v432, %v1283
        %v1331 = vadd.f32 %v434, %v1285
        %v1332 = vadd.f32 %v505, %v1324
        %v1333 = vadd.f32 %v507, %v1326
        %v1334 = vadd.f32 %v1330, %v772
        %v1335 = vadd.f32 %v1331, %v776
        %v1336 = vadd.f32 %v1332, %v780
        %v1337 = vadd.f32 %v1333, %v784
        %v1338 = vmul.f32 %v1334, 0.5
        %v1339 = vtanh.pop %v1338
        %v1340 = vmul.f32 %v1339, 0.5
        %v1341 = vadd.f32 %v1340, 0.5
        %v1342 = vmul.f32 %v1335, 0.5
        %v1343 = vtanh.pop %v1342
        %v1344 = vmul.f32 %v1343, 0.5
        %v1345 = vadd.f32 %v1344, 0.5
        %v1346 = vtanh.pop %v1336
        %v1347 = vmul.f32 %v1337, 0.5
        %v1348 = vtanh.pop %v1347
        %v1349 = vmul.f32 %v1348, 0.5
        %v1350 = vadd.f32 %v1349, 0.5
        %v1351 = vmul.f32 %v1345, %v1244
        %v1352 = vmul.f32 %v1341, %v1346
        %v1353 = vadd.f32 %v1351, %v1352
        %v1354 = vtanh.pop %v1353
        %v1355 = vmul.f32 %v1350, %v1354
        %v1356 = vpack.c.bf16 %v1355, %v1355
        %1357 = vmatprep.subr.bf16.mxu0 %v647
        %1358 = vmatpush1.bf16.msra.mxu0 %v646
        %1359 = vmatprep.subr.bf16.mxu0 %v643
        %1360 = vmatpush1.bf16.msra.mxu0 %v642
        %1361 = vmatprep.subr.bf16.mxu0 %v639
        %1362 = vmatpush1.bf16.msra.mxu0 %v638
        %1363 = vmatprep.subr.bf16.mxu0 %v635
        %1364 = vmatpush1.bf16.msra.mxu0 %v634
        %1365 = vmatprep.subr.bf16.mxu0 %v631
        %1366 = vmatpush1.bf16.msra.mxu0 %v630
        %1367 = vmatprep.subr.bf16.mxu0 %v627
        %1368 = vmatpush1.bf16.msra.mxu0 %v626
        %1369 = vmatprep.subr.bf16.mxu0 %v623
        %1370 = vmatpush1.bf16.msra.mxu0 %v622
        %1371 = vmatprep.subr.bf16.mxu0 %v619
        %1372 = vmatpush1.bf16.msra.mxu0 %v618
        %1373 = vmatprep.subr.bf16.mxu0 0
        %1374 = vmatpush2.bf16.msra.mxu0 0
        %1375 = vmatprep.subr.bf16.mxu0 0
        %1376 = vmatpush2.bf16.msra.mxu0 0
        %1377 = vmatprep.subr.bf16.mxu0 0
        %1378 = vmatpush2.bf16.msra.mxu0 0
        %1379 = vmatprep.subr.bf16.mxu0 0
        %1380 = vmatpush2.bf16.msra.mxu0 0
        %1381 = vmatprep.subr.bf16.mxu0 0
        %1382 = vmatpush2.bf16.msra.mxu0 0
        %1383 = vmatprep.subr.bf16.mxu0 0
        %1384 = vmatpush2.bf16.msra.mxu0 0
        %1385 = vmatprep.subr.bf16.mxu0 0
        %1386 = vmatpush2.bf16.msra.mxu0 0
        %1387 = vmatprep.subr.bf16.mxu0 0
        %1388 = vmatpush2.bf16.msra.mxu0 0
        %1389 = vmatprep.mubr.bf16.mxu0 0
        %1390 = vmatmul.mubr.bf16.gmra.mxu0 %v1356
        %v1391 = vpop.f32.mrf.mxu0
        %v1392 = vadd.f32 0.0, %v1391
        %v1393 = vpop.f32.mrf.mxu0
        %v1394 = vadd.f32 0.0, %v1393
        %v1395 = vpop.f32.mrf.mxu0
        %v1396 = vpop.f32.mrf.mxu0
        %1397 = vdwg.mxu0
        %1398 = vmatprep.subr.bf16.mxu0 %v649
        %1399 = vmatpush1.bf16.msra.mxu0 %v648
        %1400 = vmatprep.subr.bf16.mxu0 %v645
        %1401 = vmatpush1.bf16.msra.mxu0 %v644
        %1402 = vmatprep.subr.bf16.mxu0 %v641
        %1403 = vmatpush1.bf16.msra.mxu0 %v640
        %1404 = vmatprep.subr.bf16.mxu0 %v637
        %1405 = vmatpush1.bf16.msra.mxu0 %v636
        %1406 = vmatprep.subr.bf16.mxu0 %v633
        %1407 = vmatpush1.bf16.msra.mxu0 %v632
        %1408 = vmatprep.subr.bf16.mxu0 %v629
        %1409 = vmatpush1.bf16.msra.mxu0 %v628
        %1410 = vmatprep.subr.bf16.mxu0 %v625
        %1411 = vmatpush1.bf16.msra.mxu0 %v624
        %1412 = vmatprep.subr.bf16.mxu0 %v621
        %1413 = vmatpush1.bf16.msra.mxu0 %v620
        %1414 = vmatprep.subr.bf16.mxu0 0
        %1415 = vmatpush2.bf16.msra.mxu0 0
        %1416 = vmatprep.subr.bf16.mxu0 0
        %1417 = vmatpush2.bf16.msra.mxu0 0
        %1418 = vmatprep.subr.bf16.mxu0 0
        %1419 = vmatpush2.bf16.msra.mxu0 0
        %1420 = vmatprep.subr.bf16.mxu0 0
        %1421 = vmatpush2.bf16.msra.mxu0 0
        %1422 = vmatprep.subr.bf16.mxu0 0
        %1423 = vmatpush2.bf16.msra.mxu0 0
        %1424 = vmatprep.subr.bf16.mxu0 0
        %1425 = vmatpush2.bf16.msra.mxu0 0
        %1426 = vmatprep.subr.bf16.mxu0 0
        %1427 = vmatpush2.bf16.msra.mxu0 0
        %1428 = vmatprep.subr.bf16.mxu0 0
        %1429 = vmatpush2.bf16.msra.mxu0 0
        %1430 = vmatprep.mubr.bf16.mxu0 0
        %1431 = vmatmul.mubr.bf16.gmra.mxu0 %v1356
        %v1432 = vpop.f32.mrf.mxu0
        %v1433 = vadd.f32 0.0, %v1432
        %v1434 = vpop.f32.mrf.mxu0
        %v1435 = vadd.f32 0.0, %v1434
        %v1436 = vpop.f32.mrf.mxu0
        %v1437 = vpop.f32.mrf.mxu0
        %1438 = vdwg.mxu0
        %v1439 = vadd.f32 %v438, %v1392
        %v1440 = vadd.f32 %v440, %v1394
        %v1441 = vadd.f32 %v511, %v1433
        %v1442 = vadd.f32 %v513, %v1435
        %v1443 = vadd.f32 %v1439, %v772
        %v1444 = vadd.f32 %v1440, %v776
        %v1445 = vadd.f32 %v1441, %v780
        %v1446 = vadd.f32 %v1442, %v784
        %v1447 = vmul.f32 %v1443, 0.5
        %v1448 = vtanh.pop %v1447
        %v1449 = vmul.f32 %v1448, 0.5
        %v1450 = vadd.f32 %v1449, 0.5
        %v1451 = vmul.f32 %v1444, 0.5
        %v1452 = vtanh.pop %v1451
        %v1453 = vmul.f32 %v1452, 0.5
        %v1454 = vadd.f32 %v1453, 0.5
        %v1455 = vtanh.pop %v1445
        %v1456 = vmul.f32 %v1446, 0.5
        %v1457 = vtanh.pop %v1456
        %v1458 = vmul.f32 %v1457, 0.5
        %v1459 = vadd.f32 %v1458, 0.5
        %v1460 = vmul.f32 %v1454, %v1353
        %v1461 = vmul.f32 %v1450, %v1455
        %v1462 = vadd.f32 %v1460, %v1461
        %v1463 = vtanh.pop %v1462
        %v1464 = vmul.f32 %v1459, %v1463
        %v1465 = vpack.c.bf16 %v1464, %v1464
        %1466 = vmatprep.subr.bf16.mxu0 %v647
        %1467 = vmatpush1.bf16.msra.mxu0 %v646
        %1468 = vmatprep.subr.bf16.mxu0 %v643
        %1469 = vmatpush1.bf16.msra.mxu0 %v642
        %1470 = vmatprep.subr.bf16.mxu0 %v639
        %1471 = vmatpush1.bf16.msra.mxu0 %v638
        %1472 = vmatprep.subr.bf16.mxu0 %v635
        %1473 = vmatpush1.bf16.msra.mxu0 %v634
        %1474 = vmatprep.subr.bf16.mxu0 %v631
        %1475 = vmatpush1.bf16.msra.mxu0 %v630
        %1476 = vmatprep.subr.bf16.mxu0 %v627
        %1477 = vmatpush1.bf16.msra.mxu0 %v626
        %1478 = vmatprep.subr.bf16.mxu0 %v623
        %1479 = vmatpush1.bf16.msra.mxu0 %v622
        %1480 = vmatprep.subr.bf16.mxu0 %v619
        %1481 = vmatpush1.bf16.msra.mxu0 %v618
        %1482 = vmatprep.subr.bf16.mxu0 0
        %1483 = vmatpush2.bf16.msra.mxu0 0
        %1484 = vmatprep.subr.bf16.mxu0 0
        %1485 = vmatpush2.bf16.msra.mxu0 0
        %1486 = vmatprep.subr.bf16.mxu0 0
        %1487 = vmatpush2.bf16.msra.mxu0 0
        %1488 = vmatprep.subr.bf16.mxu0 0
        %1489 = vmatpush2.bf16.msra.mxu0 0
        %1490 = vmatprep.subr.bf16.mxu0 0
        %1491 = vmatpush2.bf16.msra.mxu0 0
        %1492 = vmatprep.subr.bf16.mxu0 0
        %1493 = vmatpush2.bf16.msra.mxu0 0
        %1494 = vmatprep.subr.bf16.mxu0 0
        %1495 = vmatpush2.bf16.msra.mxu0 0
        %1496 = vmatprep.subr.bf16.mxu0 0
        %1497 = vmatpush2.bf16.msra.mxu0 0
        %1498 = vmatprep.mubr.bf16.mxu0 0
        %1499 = vmatmul.mubr.bf16.gmra.mxu0 %v1465
        %v1500 = vpop.f32.mrf.mxu0
        %v1501 = vadd.f32 0.0, %v1500
        %v1502 = vpop.f32.mrf.mxu0
        %v1503 = vadd.f32 0.0, %v1502
        %v1504 = vpop.f32.mrf.mxu0
        %v1505 = vpop.f32.mrf.mxu0
        %1506 = vdwg.mxu0
        %1507 = vmatprep.subr.bf16.mxu0 %v649
        %1508 = vmatpush1.bf16.msra.mxu0 %v648
        %1509 = vmatprep.subr.bf16.mxu0 %v645
        %1510 = vmatpush1.bf16.msra.mxu0 %v644
        %1511 = vmatprep.subr.bf16.mxu0 %v641
        %1512 = vmatpush1.bf16.msra.mxu0 %v640
        %1513 = vmatprep.subr.bf16.mxu0 %v637
        %1514 = vmatpush1.bf16.msra.mxu0 %v636
        %1515 = vmatprep.subr.bf16.mxu0 %v633
        %1516 = vmatpush1.bf16.msra.mxu0 %v632
        %1517 = vmatprep.subr.bf16.mxu0 %v629
        %1518 = vmatpush1.bf16.msra.mxu0 %v628
        %1519 = vmatprep.subr.bf16.mxu0 %v625
        %1520 = vmatpush1.bf16.msra.mxu0 %v624
        %1521 = vmatprep.subr.bf16.mxu0 %v621
        %1522 = vmatpush1.bf16.msra.mxu0 %v620
        %1523 = vmatprep.subr.bf16.mxu0 0
        %1524 = vmatpush2.bf16.msra.mxu0 0
        %1525 = vmatprep.subr.bf16.mxu0 0
        %1526 = vmatpush2.bf16.msra.mxu0 0
        %1527 = vmatprep.subr.bf16.mxu0 0
        %1528 = vmatpush2.bf16.msra.mxu0 0
        %1529 = vmatprep.subr.bf16.mxu0 0
        %1530 = vmatpush2.bf16.msra.mxu0 0
        %1531 = vmatprep.subr.bf16.mxu0 0
        %1532 = vmatpush2.bf16.msra.mxu0 0
        %1533 = vmatprep.subr.bf16.mxu0 0
        %1534 = vmatpush2.bf16.msra.mxu0 0
        %1535 = vmatprep.subr.bf16.mxu0 0
        %1536 = vmatpush2.bf16.msra.mxu0 0
        %1537 = vmatprep.subr.bf16.mxu0 0
        %1538 = vmatpush2.bf16.msra.mxu0 0
        %1539 = vmatprep.mubr.bf16.mxu0 0
        %1540 = vmatmul.mubr.bf16.gmra.mxu0 %v1465
        %v1541 = vpop.f32.mrf.mxu0
        %v1542 = vadd.f32 0.0, %v1541
        %v1543 = vpop.f32.mrf.mxu0
        %v1544 = vadd.f32 0.0, %v1543
        %v1545 = vpop.f32.mrf.mxu0
        %v1546 = vpop.f32.mrf.mxu0
        %1547 = vdwg.mxu0
        %v1548 = vadd.f32 %v442, %v1501
        %v1549 = vadd.f32 %v444, %v1503
        %v1550 = vadd.f32 %v515, %v1542
        %v1551 = vadd.f32 %v517, %v1544
        %v1552 = vadd.f32 %v1548, %v772
        %v1553 = vadd.f32 %v1549, %v776
        %v1554 = vadd.f32 %v1550, %v780
        %v1555 = vadd.f32 %v1551, %v784
        %v1556 = vmul.f32 %v1552, 0.5
        %v1557 = vtanh.pop %v1556
        %v1558 = vmul.f32 %v1557, 0.5
        %v1559 = vadd.f32 %v1558, 0.5
        %v1560 = vmul.f32 %v1553, 0.5
        %v1561 = vtanh.pop %v1560
        %v1562 = vmul.f32 %v1561, 0.5
        %v1563 = vadd.f32 %v1562, 0.5
        %v1564 = vtanh.pop %v1554
        %v1565 = vmul.f32 %v1555, 0.5
        %v1566 = vtanh.pop %v1565
        %v1567 = vmul.f32 %v1566, 0.5
        %v1568 = vadd.f32 %v1567, 0.5
        %v1569 = vmul.f32 %v1563, %v1462
        %v1570 = vmul.f32 %v1559, %v1564
        %v1571 = vadd.f32 %v1569, %v1570
        %v1572 = vtanh.pop %v1571
        %v1573 = vmul.f32 %v1568, %v1572
        %1574 = vst [vmem:[#allocation2] sm:$0xff] %v1573
        %1575 = vst [vmem:[#allocation3] sm:$0xff] %v1571
        %p1576 = scmp.eq.s32.totalorder %s24, 1
        // Predicated region
        $region53: #{tpu_custom_call.1} parent=43 // pred_check
          %p1577 = pneg %p1576
        $region54: #{tpu_custom_call.1} parent=43 // pred_check_branch
          %1579 = sbr.rel (%p1577) target = $region56
        $region55: #{tpu_custom_call.1} parent=43 // pred_region
          %v1580 = vpack.c.bf16 %v1573, %v1573
          %v1581 = vld [vmem:[%s4] sm:$0xf]
          %v1582 = vld [vmem:[%s4 + $0x4] sm:$0xf]
          %v1583 = vld [vmem:[%s4 + $0x8] sm:$0xf]
          %v1584 = vld [vmem:[%s4 + $0xc] sm:$0xf]
          %v1585 = vld [vmem:[%s4 + $0x10] sm:$0xf]
          %v1586 = vld [vmem:[%s4 + $0x14] sm:$0xf]
          %v1587 = vld [vmem:[%s4 + $0x18] sm:$0xf]
          %v1588 = vld [vmem:[%s4 + $0x1c] sm:$0xf]
          %v1589 = vld [vmem:[%s4 + $0x20] sm:$0xf]
          %v1590 = vld [vmem:[%s4 + $0x24] sm:$0xf]
          %v1591 = vld [vmem:[%s4 + $0x28] sm:$0xf]
          %v1592 = vld [vmem:[%s4 + $0x2c] sm:$0xf]
          %v1593 = vld [vmem:[%s4 + $0x30] sm:$0xf]
          %v1594 = vld [vmem:[%s4 + $0x34] sm:$0xf]
          %v1595 = vld [vmem:[%s4 + $0x38] sm:$0xf]
          %v1596 = vld [vmem:[%s4 + $0x3c] sm:$0xf]
          %v1597 = vld [vmem:[%s5] sm:$0x1]
          %v1599 = vlaneseq
          %v1600 = vshrl.u32 %v1599, 7
          %v1601 = vsub.s32 0, %v1600
          %v1602 = vrot.slane %v1597, %v1601
          %v1620 = vunpack.c.l.b16 %v1581
          %v1621 = vunpack.c.l.b16 %v1582
          %v1622 = vunpack.c.l.b16 %v1583
          %v1623 = vunpack.c.l.b16 %v1584
          %v1624 = vunpack.c.l.b16 %v1585
          %v1625 = vunpack.c.l.b16 %v1586
          %v1626 = vunpack.c.l.b16 %v1587
          %v1627 = vunpack.c.l.b16 %v1588
          %v1628 = vunpack.c.l.b16 %v1589
          %v1629 = vunpack.c.l.b16 %v1590
          %v1630 = vunpack.c.l.b16 %v1591
          %v1631 = vunpack.c.l.b16 %v1592
          %v1632 = vunpack.c.l.b16 %v1593
          %v1633 = vunpack.c.l.b16 %v1594
          %v1634 = vunpack.c.l.b16 %v1595
          %v1635 = vunpack.c.l.b16 %v1596
          %v1636 = vpack.c.b16 %v1621, %v1620
          %v1637 = vpack.c.b16 %v1623, %v1622
          %v1638 = vpack.c.b16 %v1625, %v1624
          %v1639 = vpack.c.b16 %v1627, %v1626
          %v1640 = vpack.c.b16 %v1629, %v1628
          %v1641 = vpack.c.b16 %v1631, %v1630
          %v1642 = vpack.c.b16 %v1633, %v1632
          %v1643 = vpack.c.b16 %v1635, %v1634
          %1652 = vmatprep.subr.bf16.mxu0 0
          %1653 = vmatpush1.bf16.msra.mxu0 %v1643
          %1654 = vmatprep.subr.bf16.mxu0 0
          %1655 = vmatpush1.bf16.msra.mxu0 %v1642
          %1656 = vmatprep.subr.bf16.mxu0 0
          %1657 = vmatpush1.bf16.msra.mxu0 %v1641
          %1658 = vmatprep.subr.bf16.mxu0 0
          %1659 = vmatpush1.bf16.msra.mxu0 %v1640
          %1660 = vmatprep.subr.bf16.mxu0 0
          %1661 = vmatpush1.bf16.msra.mxu0 %v1639
          %1662 = vmatprep.subr.bf16.mxu0 0
          %1663 = vmatpush1.bf16.msra.mxu0 %v1638
          %1664 = vmatprep.subr.bf16.mxu0 0
          %1665 = vmatpush1.bf16.msra.mxu0 %v1637
          %1666 = vmatprep.subr.bf16.mxu0 0
          %1667 = vmatpush1.bf16.msra.mxu0 %v1636
          %1668 = vmatprep.subr.bf16.mxu0 0
          %1669 = vmatpush2.bf16.msra.mxu0 0
          %1670 = vmatprep.subr.bf16.mxu0 0
          %1671 = vmatpush2.bf16.msra.mxu0 0
          %1672 = vmatprep.subr.bf16.mxu0 0
          %1673 = vmatpush2.bf16.msra.mxu0 0
          %1674 = vmatprep.subr.bf16.mxu0 0
          %1675 = vmatpush2.bf16.msra.mxu0 0
          %1676 = vmatprep.subr.bf16.mxu0 0
          %1677 = vmatpush2.bf16.msra.mxu0 0
          %1678 = vmatprep.subr.bf16.mxu0 0
          %1679 = vmatpush2.bf16.msra.mxu0 0
          %1680 = vmatprep.subr.bf16.mxu0 0
          %1681 = vmatpush2.bf16.msra.mxu0 0
          %1682 = vmatprep.subr.bf16.mxu0 0
          %1683 = vmatpush2.bf16.msra.mxu0 0
          %1684 = vmatprep.mubr.bf16.mxu0 0
          %1685 = vmatmul.mubr.bf16.gmra.mxu0 %v1580
          %v1686 = vpop.f32.mrf.mxu0
          %v1687 = vadd.f32 %v1602, %v1686
          %v1688 = vpop.f32.mrf.mxu0
          %v1689 = vpop.f32.mrf.mxu0
          %v1690 = vpop.f32.mrf.mxu0
          %1691 = vdwg.mxu0
          %1692 = vst [vmem:[#allocation7] sm:$0xff] %v1687
        $region56: #{tpu_custom_call.1} parent=43 // pred_fallthru
          _
        // Predicated region
        $region57: #{tpu_custom_call.1} parent=43 // pred_check
          %p1693 = pneg %p182
        $region58: #{tpu_custom_call.1} parent=43 // pred_check_branch
          %1695 = sbr.rel (%p1693) target = $region60
        $region59: #{tpu_custom_call.1} parent=43 // pred_region
          %s1697 = ssub.s32 128, 128
          %1698 = vsyncadd [#allocation6], %s1697
          %s1699 = smul.addr %s23, 128
          %s1700 = scalar_lea.hbm %s6, %s1699
          %s1702 = sshll.u32 [#allocation7], 4
          %s1703 = int_to_ptr.vmem [resolvable:$true] %s1702
          %1705 = dma.vmem_to_hbm [thread:$0]  %s1703, 128, %s1700, [#allocation6]
        $region60: #{tpu_custom_call.1} parent=43 // pred_fallthru
          _
        // Predicated region
        $region61: #{tpu_custom_call.1} parent=43 // pred_check
          %p1706 = pneg %p182
        $region62: #{tpu_custom_call.1} parent=43 // pred_check_branch
          %1708 = sbr.rel (%p1706) target = $region64
        $region63: #{tpu_custom_call.1} parent=43 // pred_region
          %1709 = dma.done [#allocation6], 128
        $region64: #{tpu_custom_call.1} parent=43 // pred_fallthru
          _
      $region44: #{tpu_custom_call.1} parent=5 // pred_fallthru
        _
      %p1710 = scmp.le.s32.totalorder 2, %s14
      // Predicated region
      $region65: #{tpu_custom_call.1} parent=5 // pred_check
        %p1711 = pneg %p1710
      $region66: #{tpu_custom_call.1} parent=5 // pred_check_branch
        %1713 = sbr.rel (%p1711) target = $region68
      $region67: #{tpu_custom_call.1} parent=5 // pred_region
        %s1714 = ssub.s32 %s14, 2
      $region68: #{tpu_custom_call.1} parent=5 // pred_fallthru
        _
    $region6: #{tpu_custom_call.1} parent=1 // loop_footer
      %s18 = sadd.s32 1, %s14
    $region7: #{tpu_custom_call.1} parent=1 // loop_footer_branch
      %13 = sbr.rel target = $region3
    $region8: #{tpu_custom_call.1} parent=1 // loop_exit
      _
    %1715 = vsyncpa [#allocation5], 1
    %s1716 = scalar_lea.sflag [#allocation5], 1
    %1717 = vsyncpa %s1716, 1
    %1718 = vsyncpa [#allocation6], 1
    %s1719 = scalar_lea.sflag [#allocation6], 1
    %1720 = vsyncpa %s1719, 1

</llo_original>
